<compile_context>
chip_gen: v6e
topology: v6e:2x2x1
jax: 0.10.0
libtpu: 0.0.40
codegen_flags: <defaults>
</compile_context>

<pallas_src>
import functools

import jax
import jax.numpy as jnp
from jax.experimental import pallas as pl
from jax.experimental.pallas import tpu as pltpu


def _dense_block_kernel(x_ref, s1_ref, b1_ref, w1_ref, s2_ref, b2_ref, w2_ref,
                        out_ref, *, H, W, Cin, Cmid, G, num_layers):
    # Shapes (channel-major, spatial flattened onto lanes):
    #   x_ref   (Cin, HW)            out_ref (Cin + L*G, HW)
    #   s1/b1   (L, max_cin, 1)      w1      (L, Cmid, max_cin)   bf16
    #   s2/b2   (L, Cmid, 1)         w2      (L, 9, G, Cmid)      bf16
    HW = H * W

    # Seed the concatenated-feature buffer (resident in VMEM for this step).
    out_ref[0:Cin, :] = x_ref[...]

    # Hoisted (1, HW) boundary-validity masks; flat position p = h*W + w.
    pos = jax.lax.broadcasted_iota(jnp.int32, (1, HW), 1)
    w_idx = pos % W
    row_ok = (pos >= W, None, pos < (H - 1) * W)      # kh = 0, 1, 2
    col_ok = (w_idx >= 1, None, w_idx <= W - 2)       # kw = 0, 1, 2

    tap_masks, tap_shifts = [], []
    for kh in range(3):
        for kw in range(3):
            ms = [m for m in (row_ok[kh], col_ok[kw]) if m is not None]
            if not ms:
                tap_masks.append(None)
            elif len(ms) == 1:
                tap_masks.append(ms[0])
            else:
                tap_masks.append(jnp.logical_and(ms[0], ms[1]))
            off = (kh - 1) * W + (kw - 1)
            tap_shifts.append((-off) % HW)            # jnp.roll convention

    for i in range(num_layers):
        cin_i = Cin + i * G

        # BN1 (folded, eval mode) + ReLU in f32 over all concatenated channels.
        cur = out_ref[0:cin_i, :]
        h = jnp.maximum(cur * s1_ref[i, 0:cin_i, :] + b1_ref[i, 0:cin_i, :], 0.0)

        # 1x1 conv on the MXU: (Cmid, cin_i) @ (cin_i, HW), bf16 in / f32 acc.
        h1 = jnp.dot(w1_ref[i, :, 0:cin_i], h.astype(jnp.bfloat16),
                     preferred_element_type=jnp.float32)

        # BN2 (folded) + ReLU in f32.
        h2 = jnp.maximum(h1 * s2_ref[i] + b2_ref[i], 0.0)

        # 3x3 conv (pad=1): 9 accumulating per-tap dots on rolled (XLU) copies.
        acc = None
        for t in range(9):
            s = tap_shifts[t]
            tap = h2 if s == 0 else pltpu.roll(h2, shift=s, axis=1)
            if tap_masks[t] is not None:
                tap = jnp.where(tap_masks[t], tap, 0.0)
            contrib = jnp.dot(w2_ref[i, t], tap.astype(jnp.bfloat16),
                              preferred_element_type=jnp.float32)
            acc = contrib if acc is None else acc + contrib

        # Lane-dense append of this layer's growth channels.
        out_ref[cin_i:cin_i + G, :] = acc.astype(out_ref.dtype)


def dense_block_fused(x_nchw, packed):
    """Whole dense block as one pallas_call. Input/output NCHW (PyTorch layout)."""
    N, Cin, H, W = x_nchw.shape
    L, Cmid, max_cin = packed["w1"].shape
    G = packed["w2"].shape[2]
    C_total = Cin + L * G
    HW = H * W

    x_flat = x_nchw.reshape(N, Cin, HW)   # contiguous collapse: no data movement

    kernel = functools.partial(_dense_block_kernel, H=H, W=W, Cin=Cin,
                               Cmid=Cmid, G=G, num_layers=L)
    const3 = lambda n: (0, 0, 0)

    y = pl.pallas_call(
        kernel,
        out_shape=jax.ShapeDtypeStruct((N, C_total, HW), jnp.float32),
        grid=(N,),
        in_specs=[
            pl.BlockSpec((None, Cin, HW), lambda n: (n, 0, 0)),
            pl.BlockSpec((L, max_cin, 1), const3),
            pl.BlockSpec((L, max_cin, 1), const3),
            pl.BlockSpec((L, Cmid, max_cin), const3),
            pl.BlockSpec((L, Cmid, 1), const3),
            pl.BlockSpec((L, Cmid, 1), const3),
            pl.BlockSpec((L, 9, G, Cmid), lambda n: (0, 0, 0, 0)),
        ],
        out_specs=pl.BlockSpec((None, C_total, HW), lambda n: (n, 0, 0)),
        compiler_params=pltpu.CompilerParams(
            dimension_semantics=("parallel",),
            # Above the 16/32 MiB scoped defaults; tune per chip/shape at real
            # DenseNet sizes (see v7x strip-tiling TODO).
            vmem_limit_bytes=48 * 1024 * 1024),
    )(x_flat, packed["s1"], packed["b1"], packed["w1"],
      packed["s2"], packed["b2"], packed["w2"])

    return y.reshape(N, C_total, H, W)


@jax.jit
def dense_block_forward(x_nchw, packed):
    return dense_block_fused(x_nchw, packed)


def fold_bn(gamma, beta, mean, var, eps=1e-5):
    scale = gamma / jnp.sqrt(var + eps)
    shift = beta - mean * scale
    return scale.astype(jnp.float32), shift.astype(jnp.float32)


def init_dense_block_params(key, num_layers, in_channels, bn_size, growth_rate):
    """Deterministic synthetic per-layer params in PyTorch layouts."""
    cmid = bn_size * growth_rate
    layers = []
    for i in range(num_layers):
        cin = in_channels + i * growth_rate
        keys = jax.random.split(jax.random.fold_in(key, i), 10)
        g1 = jax.random.normal(keys[0], (cin,), jnp.float32) * 0.1 + 1.0
        b1 = jax.random.normal(keys[1], (cin,), jnp.float32) * 0.1
        m1 = jax.random.normal(keys[2], (cin,), jnp.float32) * 0.1
        v1 = jax.random.uniform(keys[3], (cin,), jnp.float32, 0.5, 1.5)
        w1 = jax.random.normal(keys[4], (cmid, cin), jnp.float32) * 0.2      # (O, I)
        g2 = jax.random.normal(keys[5], (cmid,), jnp.float32) * 0.1 + 1.0
        b2 = jax.random.normal(keys[6], (cmid,), jnp.float32) * 0.1
        m2 = jax.random.normal(keys[7], (cmid,), jnp.float32) * 0.1
        v2 = jax.random.uniform(keys[8], (cmid,), jnp.float32, 0.5, 1.5)
        w2 = jax.random.normal(keys[9], (growth_rate, cmid, 3, 3),
                               jnp.float32) * 0.2                            # OIHW
        s1, sh1 = fold_bn(g1, b1, m1, v1)
        s2, sh2 = fold_bn(g2, b2, m2, v2)
        layers.append(dict(
            s1=s1, b1=sh1, s2=s2, b2=sh2,
            w1_bf16=w1.astype(jnp.bfloat16),   # exact bf16 values the kernel sees
            w2_bf16=w2.astype(jnp.bfloat16)))
    return layers


def pack_dense_block_params(layers, in_channels, growth_rate):
    """Stack / zero-pad per-layer params into a few kernel inputs."""
    L = len(layers)
    G = growth_rate
    Cmid = layers[0]["s2"].shape[0]
    max_cin = in_channels + (L - 1) * G

    def pad1(v):
        return jnp.pad(v, (0, max_cin - v.shape[0]))

    s1 = jnp.stack([pad1(p["s1"]) for p in layers])[:, :, None]
    b1 = jnp.stack([pad1(p["b1"]) for p in layers])[:, :, None]
    s2 = jnp.stack([p["s2"] for p in layers])[:, :, None]
    b2 = jnp.stack([p["b2"] for p in layers])[:, :, None]
    w1 = jnp.stack([
        jnp.pad(p["w1_bf16"], ((0, 0), (0, max_cin - p["w1_bf16"].shape[1])))
        for p in layers])                                        # (L, Cmid, max_cin)
    # per-tap layout: (L, 9, G, Cmid), tap index t = kh*3 + kw
    w2 = jnp.stack([
        jnp.transpose(p["w2_bf16"], (2, 3, 0, 1)).reshape(9, G, Cmid)
        for p in layers])
    return dict(s1=s1, b1=b1, w1=w1, s2=s2, b2=b2, w2=w2)


def _reference_forward(x_nchw, layers):
    """Pure-JAX reference (lax.conv, NCHW) with matching bf16 matmul operands."""
    feats = x_nchw
    for p in layers:
        h = jnp.maximum(feats * p["s1"][None, :, None, None]
                        + p["b1"][None, :, None, None], 0.0)
        h1 = jax.lax.conv_general_dilated(
            h.astype(jnp.bfloat16), p["w1_bf16"][:, :, None, None],
            (1, 1), "VALID", dimension_numbers=("NCHW", "OIHW", "NCHW"),
            preferred_element_type=jnp.float32)
        h2 = jnp.maximum(h1 * p["s2"][None, :, None, None]
                         + p["b2"][None, :, None, None], 0.0)
        y = jax.lax.conv_general_dilated(
            h2.astype(jnp.bfloat16), p["w2_bf16"], (1, 1), ((1, 1), (1, 1)),
            dimension_numbers=("NCHW", "OIHW", "NCHW"),
            preferred_element_type=jnp.float32)
        feats = jnp.concatenate([feats, y], axis=1)
    return feats


if __name__ == "__main__":
    # Module config (small): num_layers=3, in_channels=4, bn_size=2, growth_rate=4
    NUM_LAYERS, IN_CH, BN_SIZE, GROWTH = 3, 4, 2, 4
    N, H, W = 2, 16, 16

    key = jax.random.PRNGKey(0)
    kx, kp = jax.random.split(key)
    x = jax.random.normal(kx, (N, IN_CH, H, W), jnp.float32)   # NCHW, like PyTorch
    layers = init_dense_block_params(kp, NUM_LAYERS, IN_CH, BN_SIZE, GROWTH)
    packed = pack_dense_block_params(layers, IN_CH, GROWTH)

    y = jax.block_until_ready(dense_block_forward(x, packed))

    expected_ch = IN_CH + NUM_LAYERS * GROWTH
    assert y.shape == (N, expected_ch, H, W), y.shape

    y_ref = jax.block_until_ready(_reference_forward(x, layers))
    max_err = float(jnp.max(jnp.abs(y - y_ref)))
    # Both sides use identical bf16 matmul operands with f32 accumulation, so
    # the tolerance only covers accumulation-order differences.
    assert jnp.allclose(y, y_ref, rtol=1e-2, atol=1e-2), max_err

    print("KERNEL_OK")
</pallas_src>

<mosaic_0001>
module attributes {stable_mosaic.version = 11 : i64} {
  func.func @_dense_block_kernel(%arg0: i32, %arg1: memref<1x4x256xf32, #tpu.memory_space<vmem>>, %arg2: memref<3x12x1xf32, #tpu.memory_space<vmem>>, %arg3: memref<3x12x1xf32, #tpu.memory_space<vmem>>, %arg4: memref<3x8x12xbf16, #tpu.memory_space<vmem>>, %arg5: memref<3x8x1xf32, #tpu.memory_space<vmem>>, %arg6: memref<3x8x1xf32, #tpu.memory_space<vmem>>, %arg7: memref<3x9x4x8xbf16, #tpu.memory_space<vmem>>, %arg8: memref<1x16x256xf32, #tpu.memory_space<vmem>>) attributes {dimension_semantics = [#tpu.dimension_semantics<parallel>], iteration_bounds = array<i64: 2>, scalar_prefetch = 0 : i64, scratch_operands = 0 : i64, tpu.core_type = #tpu.core_type<tc>, window_params = [{transform_indices = @transform_0, window_bounds = array<i64: 1, 4, 256>}, {pipeline_mode = #tpu.pipeline_mode<synchronous>, transform_indices = @transform_1, window_bounds = array<i64: 3, 12, 1>}, {pipeline_mode = #tpu.pipeline_mode<synchronous>, transform_indices = @transform_2, window_bounds = array<i64: 3, 12, 1>}, {pipeline_mode = #tpu.pipeline_mode<synchronous>, transform_indices = @transform_3, window_bounds = array<i64: 3, 8, 12>}, {pipeline_mode = #tpu.pipeline_mode<synchronous>, transform_indices = @transform_4, window_bounds = array<i64: 3, 8, 1>}, {pipeline_mode = #tpu.pipeline_mode<synchronous>, transform_indices = @transform_5, window_bounds = array<i64: 3, 8, 1>}, {pipeline_mode = #tpu.pipeline_mode<synchronous>, transform_indices = @transform_6, window_bounds = array<i64: 3, 9, 4, 8>}, {transform_indices = @transform_7, window_bounds = array<i64: 1, 16, 256>}]} {
    %c0 = arith.constant 0 : index
    %c0_0 = arith.constant 0 : index
    %c0_1 = arith.constant 0 : index
    %0 = vector.load %arg1[%c0, %c0_0, %c0_1] : memref<1x4x256xf32, #tpu.memory_space<vmem>>, vector<1x4x256xf32>
    %1 = vector.shape_cast %0 : vector<1x4x256xf32> to vector<4x256xf32>
    %c0_2 = arith.constant 0 : index
    %c0_3 = arith.constant 0 : index
    %c0_4 = arith.constant 0 : index
    %2 = vector.load %arg8[%c0_2, %c0_3, %c0_4] : memref<1x16x256xf32, #tpu.memory_space<vmem>>, vector<1x4x256xf32>
    %3 = vector.shape_cast %2 : vector<1x4x256xf32> to vector<4x256xf32>
    %4 = vector.shape_cast %1 : vector<4x256xf32> to vector<1x4x256xf32>
    tpu.vector_store %arg8[%c0_2, %c0_3, %c0_4], %4 {strides = array<i32>} : memref<1x16x256xf32, #tpu.memory_space<vmem>>, vector<1x4x256xf32>,
    %5 = tpu.iota {dimensions = array<i32: 1>} : vector<1x256xi32>
    %c16_i32 = arith.constant 16 : i32
    %c0_i32 = arith.constant 0 : i32
    %6 = arith.cmpi eq, %c16_i32, %c0_i32 : i32
    %c1_i32 = arith.constant 1 : i32
    %7 = arith.select %6, %c1_i32, %c16_i32 : i32
    %8 = vector.broadcast %7 : i32 to vector<1x256xi32>
    %9 = arith.remsi %5, %8 : vector<1x256xi32>
    %c0_i32_5 = arith.constant 0 : i32
    %10 = vector.broadcast %c0_i32_5 : i32 to vector<1x256xi32>
    %11 = arith.cmpi ne, %9, %10 : vector<1x256xi32>
    %c0_i32_6 = arith.constant 0 : i32
    %12 = vector.broadcast %c0_i32_6 : i32 to vector<1x256xi32>
    %13 = arith.cmpi slt, %9, %12 : vector<1x256xi32>
    %c0_i32_7 = arith.constant 0 : i32
    %14 = arith.cmpi slt, %7, %c0_i32_7 : i32
    %15 = vector.broadcast %14 : i1 to vector<1x256xi1>
    %16 = vector.broadcast %15 : vector<1x256xi1> to vector<1x256xi1>
    %17 = arith.xori %13, %16 : vector<1x256xi1>
    %18 = arith.andi %17, %11 : vector<1x256xi1>
    %19 = vector.broadcast %7 : i32 to vector<1x256xi32>
    %20 = arith.addi %9, %19 : vector<1x256xi32>
    %21 = arith.select %18, %20, %9 : vector<1x256xi1>, vector<1x256xi32>
    %c16_i32_8 = arith.constant 16 : i32
    %22 = vector.broadcast %c16_i32_8 : i32 to vector<1x256xi32>
    %23 = arith.cmpi sge, %5, %22 : vector<1x256xi32>
    %c240_i32 = arith.constant 240 : i32
    %24 = vector.broadcast %c240_i32 : i32 to vector<1x256xi32>
    %25 = arith.cmpi slt, %5, %24 : vector<1x256xi32>
    %c1_i32_9 = arith.constant 1 : i32
    %26 = vector.broadcast %c1_i32_9 : i32 to vector<1x256xi32>
    %27 = arith.cmpi sge, %21, %26 : vector<1x256xi32>
    %c14_i32 = arith.constant 14 : i32
    %28 = vector.broadcast %c14_i32 : i32 to vector<1x256xi32>
    %29 = arith.cmpi sle, %21, %28 : vector<1x256xi32>
    %30 = arith.andi %23, %27 : vector<1x256xi1>
    %31 = arith.andi %23, %29 : vector<1x256xi1>
    %32 = arith.andi %25, %27 : vector<1x256xi1>
    %33 = arith.andi %25, %29 : vector<1x256xi1>
    %c0_10 = arith.constant 0 : index
    %c0_11 = arith.constant 0 : index
    %c0_12 = arith.constant 0 : index
    %34 = vector.load %arg8[%c0_10, %c0_11, %c0_12] : memref<1x16x256xf32, #tpu.memory_space<vmem>>, vector<1x4x256xf32>
    %35 = vector.shape_cast %34 : vector<1x4x256xf32> to vector<4x256xf32>
    %c0_13 = arith.constant 0 : index
    %c0_14 = arith.constant 0 : index
    %c0_15 = arith.constant 0 : index
    %36 = vector.load %arg2[%c0_13, %c0_14, %c0_15] : memref<3x12x1xf32, #tpu.memory_space<vmem>>, vector<1x4x1xf32>
    %37 = vector.shape_cast %36 : vector<1x4x1xf32> to vector<4x1xf32>
    %38 = vector.broadcast %37 : vector<4x1xf32> to vector<4x256xf32>
    %39 = arith.mulf %35, %38 : vector<4x256xf32>
    %c0_16 = arith.constant 0 : index
    %c0_17 = arith.constant 0 : index
    %c0_18 = arith.constant 0 : index
    %40 = vector.load %arg3[%c0_16, %c0_17, %c0_18] : memref<3x12x1xf32, #tpu.memory_space<vmem>>, vector<1x4x1xf32>
    %41 = vector.shape_cast %40 : vector<1x4x1xf32> to vector<4x1xf32>
    %42 = vector.broadcast %41 : vector<4x1xf32> to vector<4x256xf32>
    %43 = arith.addf %39, %42 : vector<4x256xf32>
    %cst = arith.constant 0.000000e+00 : f32
    %44 = vector.broadcast %cst : f32 to vector<4x256xf32>
    %45 = arith.maximumf %43, %44 : vector<4x256xf32>
    %c0_19 = arith.constant 0 : index
    %c0_20 = arith.constant 0 : index
    %c0_21 = arith.constant 0 : index
    %46 = vector.load %arg4[%c0_19, %c0_20, %c0_21] : memref<3x8x12xbf16, #tpu.memory_space<vmem>>, vector<1x8x4xbf16>
    %47 = vector.shape_cast %46 : vector<1x8x4xbf16> to vector<8x4xbf16>
    %48 = arith.truncf %45 : vector<4x256xf32> to vector<4x256xbf16>
    %cst_22 = arith.constant dense<0.000000e+00> : vector<8x256xf32>
    %49 = tpu.matmul %47, %48, %cst_22 {dimension_numbers = #tpu.dot_dimension_numbers<[1], [0], [0], [1], [0, 0, 1, 1], [], []>} : vector<8x4xbf16>, vector<4x256xbf16>, vector<8x256xf32> -> vector<8x256xf32>
    %c0_23 = arith.constant 0 : index
    %c0_24 = arith.constant 0 : index
    %c0_25 = arith.constant 0 : index
    %50 = vector.load %arg5[%c0_23, %c0_24, %c0_25] : memref<3x8x1xf32, #tpu.memory_space<vmem>>, vector<1x8x1xf32>
    %51 = vector.shape_cast %50 : vector<1x8x1xf32> to vector<8x1xf32>
    %52 = vector.broadcast %51 : vector<8x1xf32> to vector<8x256xf32>
    %53 = arith.mulf %49, %52 : vector<8x256xf32>
    %c0_26 = arith.constant 0 : index
    %c0_27 = arith.constant 0 : index
    %c0_28 = arith.constant 0 : index
    %54 = vector.load %arg6[%c0_26, %c0_27, %c0_28] : memref<3x8x1xf32, #tpu.memory_space<vmem>>, vector<1x8x1xf32>
    %55 = vector.shape_cast %54 : vector<1x8x1xf32> to vector<8x1xf32>
    %56 = vector.broadcast %55 : vector<8x1xf32> to vector<8x256xf32>
    %57 = arith.addf %53, %56 : vector<8x256xf32>
    %cst_29 = arith.constant 0.000000e+00 : f32
    %58 = vector.broadcast %cst_29 : f32 to vector<8x256xf32>
    %59 = arith.maximumf %57, %58 : vector<8x256xf32>
    %c17_i32 = arith.constant 17 : i32
    %60 = tpu.dynamic_rotate %59 by %c17_i32 dim 1 : vector<8x256xf32>, i32 -> vector<8x256xf32>
    %cst_30 = arith.constant 0.000000e+00 : f32
    %61 = vector.shape_cast %30 : vector<1x256xi1> to vector<1x256xi1>
    %62 = vector.broadcast %61 : vector<1x256xi1> to vector<8x256xi1>
    %63 = vector.broadcast %cst_30 : f32 to vector<8x256xf32>
    %64 = arith.select %62, %60, %63 : vector<8x256xi1>, vector<8x256xf32>
    %c0_31 = arith.constant 0 : index
    %c0_32 = arith.constant 0 : index
    %c0_33 = arith.constant 0 : index
    %c0_34 = arith.constant 0 : index
    %65 = vector.load %arg7[%c0_31, %c0_32, %c0_33, %c0_34] : memref<3x9x4x8xbf16, #tpu.memory_space<vmem>>, vector<1x1x4x8xbf16>
    %66 = vector.shape_cast %65 : vector<1x1x4x8xbf16> to vector<4x8xbf16>
    %67 = arith.truncf %64 : vector<8x256xf32> to vector<8x256xbf16>
    %cst_35 = arith.constant dense<0.000000e+00> : vector<4x256xf32>
    %68 = tpu.matmul %66, %67, %cst_35 {dimension_numbers = #tpu.dot_dimension_numbers<[1], [0], [0], [1], [0, 0, 1, 1], [], []>} : vector<4x8xbf16>, vector<8x256xbf16>, vector<4x256xf32> -> vector<4x256xf32>
    %c16_i32_36 = arith.constant 16 : i32
    %69 = tpu.dynamic_rotate %59 by %c16_i32_36 dim 1 : vector<8x256xf32>, i32 -> vector<8x256xf32>
    %cst_37 = arith.constant 0.000000e+00 : f32
    %70 = vector.shape_cast %23 : vector<1x256xi1> to vector<1x256xi1>
    %71 = vector.broadcast %70 : vector<1x256xi1> to vector<8x256xi1>
    %72 = vector.broadcast %cst_37 : f32 to vector<8x256xf32>
    %73 = arith.select %71, %69, %72 : vector<8x256xi1>, vector<8x256xf32>
    %c0_38 = arith.constant 0 : index
    %c1 = arith.constant 1 : index
    %c0_39 = arith.constant 0 : index
    %c0_40 = arith.constant 0 : index
    %74 = vector.load %arg7[%c0_38, %c1, %c0_39, %c0_40] : memref<3x9x4x8xbf16, #tpu.memory_space<vmem>>, vector<1x1x4x8xbf16>
    %75 = vector.shape_cast %74 : vector<1x1x4x8xbf16> to vector<4x8xbf16>
    %76 = arith.truncf %73 : vector<8x256xf32> to vector<8x256xbf16>
    %cst_41 = arith.constant dense<0.000000e+00> : vector<4x256xf32>
    %77 = tpu.matmul %75, %76, %cst_41 {dimension_numbers = #tpu.dot_dimension_numbers<[1], [0], [0], [1], [0, 0, 1, 1], [], []>} : vector<4x8xbf16>, vector<8x256xbf16>, vector<4x256xf32> -> vector<4x256xf32>
    %78 = arith.addf %68, %77 : vector<4x256xf32>
    %c15_i32 = arith.constant 15 : i32
    %79 = tpu.dynamic_rotate %59 by %c15_i32 dim 1 : vector<8x256xf32>, i32 -> vector<8x256xf32>
    %cst_42 = arith.constant 0.000000e+00 : f32
    %80 = vector.shape_cast %31 : vector<1x256xi1> to vector<1x256xi1>
    %81 = vector.broadcast %80 : vector<1x256xi1> to vector<8x256xi1>
    %82 = vector.broadcast %cst_42 : f32 to vector<8x256xf32>
    %83 = arith.select %81, %79, %82 : vector<8x256xi1>, vector<8x256xf32>
    %c0_43 = arith.constant 0 : index
    %c2 = arith.constant 2 : index
    %c0_44 = arith.constant 0 : index
    %c0_45 = arith.constant 0 : index
    %84 = vector.load %arg7[%c0_43, %c2, %c0_44, %c0_45] : memref<3x9x4x8xbf16, #tpu.memory_space<vmem>>, vector<1x1x4x8xbf16>
    %85 = vector.shape_cast %84 : vector<1x1x4x8xbf16> to vector<4x8xbf16>
    %86 = arith.truncf %83 : vector<8x256xf32> to vector<8x256xbf16>
    %cst_46 = arith.constant dense<0.000000e+00> : vector<4x256xf32>
    %87 = tpu.matmul %85, %86, %cst_46 {dimension_numbers = #tpu.dot_dimension_numbers<[1], [0], [0], [1], [0, 0, 1, 1], [], []>} : vector<4x8xbf16>, vector<8x256xbf16>, vector<4x256xf32> -> vector<4x256xf32>
    %88 = arith.addf %78, %87 : vector<4x256xf32>
    %c1_i32_47 = arith.constant 1 : i32
    %89 = tpu.dynamic_rotate %59 by %c1_i32_47 dim 1 : vector<8x256xf32>, i32 -> vector<8x256xf32>
    %cst_48 = arith.constant 0.000000e+00 : f32
    %90 = vector.shape_cast %27 : vector<1x256xi1> to vector<1x256xi1>
    %91 = vector.broadcast %90 : vector<1x256xi1> to vector<8x256xi1>
    %92 = vector.broadcast %cst_48 : f32 to vector<8x256xf32>
    %93 = arith.select %91, %89, %92 : vector<8x256xi1>, vector<8x256xf32>
    %c0_49 = arith.constant 0 : index
    %c3 = arith.constant 3 : index
    %c0_50 = arith.constant 0 : index
    %c0_51 = arith.constant 0 : index
    %94 = vector.load %arg7[%c0_49, %c3, %c0_50, %c0_51] : memref<3x9x4x8xbf16, #tpu.memory_space<vmem>>, vector<1x1x4x8xbf16>
    %95 = vector.shape_cast %94 : vector<1x1x4x8xbf16> to vector<4x8xbf16>
    %96 = arith.truncf %93 : vector<8x256xf32> to vector<8x256xbf16>
    %cst_52 = arith.constant dense<0.000000e+00> : vector<4x256xf32>
    %97 = tpu.matmul %95, %96, %cst_52 {dimension_numbers = #tpu.dot_dimension_numbers<[1], [0], [0], [1], [0, 0, 1, 1], [], []>} : vector<4x8xbf16>, vector<8x256xbf16>, vector<4x256xf32> -> vector<4x256xf32>
    %98 = arith.addf %88, %97 : vector<4x256xf32>
    %c0_53 = arith.constant 0 : index
    %c4 = arith.constant 4 : index
    %c0_54 = arith.constant 0 : index
    %c0_55 = arith.constant 0 : index
    %99 = vector.load %arg7[%c0_53, %c4, %c0_54, %c0_55] : memref<3x9x4x8xbf16, #tpu.memory_space<vmem>>, vector<1x1x4x8xbf16>
    %100 = vector.shape_cast %99 : vector<1x1x4x8xbf16> to vector<4x8xbf16>
    %101 = arith.truncf %59 : vector<8x256xf32> to vector<8x256xbf16>
    %cst_56 = arith.constant dense<0.000000e+00> : vector<4x256xf32>
    %102 = tpu.matmul %100, %101, %cst_56 {dimension_numbers = #tpu.dot_dimension_numbers<[1], [0], [0], [1], [0, 0, 1, 1], [], []>} : vector<4x8xbf16>, vector<8x256xbf16>, vector<4x256xf32> -> vector<4x256xf32>
    %103 = arith.addf %98, %102 : vector<4x256xf32>
    %c255_i32 = arith.constant 255 : i32
    %104 = tpu.dynamic_rotate %59 by %c255_i32 dim 1 : vector<8x256xf32>, i32 -> vector<8x256xf32>
    %cst_57 = arith.constant 0.000000e+00 : f32
    %105 = vector.shape_cast %29 : vector<1x256xi1> to vector<1x256xi1>
    %106 = vector.broadcast %105 : vector<1x256xi1> to vector<8x256xi1>
    %107 = vector.broadcast %cst_57 : f32 to vector<8x256xf32>
    %108 = arith.select %106, %104, %107 : vector<8x256xi1>, vector<8x256xf32>
    %c0_58 = arith.constant 0 : index
    %c5 = arith.constant 5 : index
    %c0_59 = arith.constant 0 : index
    %c0_60 = arith.constant 0 : index
    %109 = vector.load %arg7[%c0_58, %c5, %c0_59, %c0_60] : memref<3x9x4x8xbf16, #tpu.memory_space<vmem>>, vector<1x1x4x8xbf16>
    %110 = vector.shape_cast %109 : vector<1x1x4x8xbf16> to vector<4x8xbf16>
    %111 = arith.truncf %108 : vector<8x256xf32> to vector<8x256xbf16>
    %cst_61 = arith.constant dense<0.000000e+00> : vector<4x256xf32>
    %112 = tpu.matmul %110, %111, %cst_61 {dimension_numbers = #tpu.dot_dimension_numbers<[1], [0], [0], [1], [0, 0, 1, 1], [], []>} : vector<4x8xbf16>, vector<8x256xbf16>, vector<4x256xf32> -> vector<4x256xf32>
    %113 = arith.addf %103, %112 : vector<4x256xf32>
    %c241_i32 = arith.constant 241 : i32
    %114 = tpu.dynamic_rotate %59 by %c241_i32 dim 1 : vector<8x256xf32>, i32 -> vector<8x256xf32>
    %cst_62 = arith.constant 0.000000e+00 : f32
    %115 = vector.shape_cast %32 : vector<1x256xi1> to vector<1x256xi1>
    %116 = vector.broadcast %115 : vector<1x256xi1> to vector<8x256xi1>
    %117 = vector.broadcast %cst_62 : f32 to vector<8x256xf32>
    %118 = arith.select %116, %114, %117 : vector<8x256xi1>, vector<8x256xf32>
    %c0_63 = arith.constant 0 : index
    %c6 = arith.constant 6 : index
    %c0_64 = arith.constant 0 : index
    %c0_65 = arith.constant 0 : index
    %119 = vector.load %arg7[%c0_63, %c6, %c0_64, %c0_65] : memref<3x9x4x8xbf16, #tpu.memory_space<vmem>>, vector<1x1x4x8xbf16>
    %120 = vector.shape_cast %119 : vector<1x1x4x8xbf16> to vector<4x8xbf16>
    %121 = arith.truncf %118 : vector<8x256xf32> to vector<8x256xbf16>
    %cst_66 = arith.constant dense<0.000000e+00> : vector<4x256xf32>
    %122 = tpu.matmul %120, %121, %cst_66 {dimension_numbers = #tpu.dot_dimension_numbers<[1], [0], [0], [1], [0, 0, 1, 1], [], []>} : vector<4x8xbf16>, vector<8x256xbf16>, vector<4x256xf32> -> vector<4x256xf32>
    %123 = arith.addf %113, %122 : vector<4x256xf32>
    %c240_i32_67 = arith.constant 240 : i32
    %124 = tpu.dynamic_rotate %59 by %c240_i32_67 dim 1 : vector<8x256xf32>, i32 -> vector<8x256xf32>
    %cst_68 = arith.constant 0.000000e+00 : f32
    %125 = vector.shape_cast %25 : vector<1x256xi1> to vector<1x256xi1>
    %126 = vector.broadcast %125 : vector<1x256xi1> to vector<8x256xi1>
    %127 = vector.broadcast %cst_68 : f32 to vector<8x256xf32>
    %128 = arith.select %126, %124, %127 : vector<8x256xi1>, vector<8x256xf32>
    %c0_69 = arith.constant 0 : index
    %c7 = arith.constant 7 : index
    %c0_70 = arith.constant 0 : index
    %c0_71 = arith.constant 0 : index
    %129 = vector.load %arg7[%c0_69, %c7, %c0_70, %c0_71] : memref<3x9x4x8xbf16, #tpu.memory_space<vmem>>, vector<1x1x4x8xbf16>
    %130 = vector.shape_cast %129 : vector<1x1x4x8xbf16> to vector<4x8xbf16>
    %131 = arith.truncf %128 : vector<8x256xf32> to vector<8x256xbf16>
    %cst_72 = arith.constant dense<0.000000e+00> : vector<4x256xf32>
    %132 = tpu.matmul %130, %131, %cst_72 {dimension_numbers = #tpu.dot_dimension_numbers<[1], [0], [0], [1], [0, 0, 1, 1], [], []>} : vector<4x8xbf16>, vector<8x256xbf16>, vector<4x256xf32> -> vector<4x256xf32>
    %133 = arith.addf %123, %132 : vector<4x256xf32>
    %c239_i32 = arith.constant 239 : i32
    %134 = tpu.dynamic_rotate %59 by %c239_i32 dim 1 : vector<8x256xf32>, i32 -> vector<8x256xf32>
    %cst_73 = arith.constant 0.000000e+00 : f32
    %135 = vector.shape_cast %33 : vector<1x256xi1> to vector<1x256xi1>
    %136 = vector.broadcast %135 : vector<1x256xi1> to vector<8x256xi1>
    %137 = vector.broadcast %cst_73 : f32 to vector<8x256xf32>
    %138 = arith.select %136, %134, %137 : vector<8x256xi1>, vector<8x256xf32>
    %c0_74 = arith.constant 0 : index
    %c8 = arith.constant 8 : index
    %c0_75 = arith.constant 0 : index
    %c0_76 = arith.constant 0 : index
    %139 = vector.load %arg7[%c0_74, %c8, %c0_75, %c0_76] : memref<3x9x4x8xbf16, #tpu.memory_space<vmem>>, vector<1x1x4x8xbf16>
    %140 = vector.shape_cast %139 : vector<1x1x4x8xbf16> to vector<4x8xbf16>
    %141 = arith.truncf %138 : vector<8x256xf32> to vector<8x256xbf16>
    %cst_77 = arith.constant dense<0.000000e+00> : vector<4x256xf32>
    %142 = tpu.matmul %140, %141, %cst_77 {dimension_numbers = #tpu.dot_dimension_numbers<[1], [0], [0], [1], [0, 0, 1, 1], [], []>} : vector<4x8xbf16>, vector<8x256xbf16>, vector<4x256xf32> -> vector<4x256xf32>
    %143 = arith.addf %133, %142 : vector<4x256xf32>
    %c0_78 = arith.constant 0 : index
    %c4_79 = arith.constant 4 : index
    %c0_80 = arith.constant 0 : index
    %144 = vector.load %arg8[%c0_78, %c4_79, %c0_80] : memref<1x16x256xf32, #tpu.memory_space<vmem>>, vector<1x4x256xf32>
    %145 = vector.shape_cast %144 : vector<1x4x256xf32> to vector<4x256xf32>
    %146 = vector.shape_cast %143 : vector<4x256xf32> to vector<1x4x256xf32>
    tpu.vector_store %arg8[%c0_78, %c4_79, %c0_80], %146 {strides = array<i32>} : memref<1x16x256xf32, #tpu.memory_space<vmem>>, vector<1x4x256xf32>,
    %c0_81 = arith.constant 0 : index
    %c0_82 = arith.constant 0 : index
    %c0_83 = arith.constant 0 : index
    %147 = vector.load %arg8[%c0_81, %c0_82, %c0_83] : memref<1x16x256xf32, #tpu.memory_space<vmem>>, vector<1x8x256xf32>
    %148 = vector.shape_cast %147 : vector<1x8x256xf32> to vector<8x256xf32>
    %c1_84 = arith.constant 1 : index
    %c0_85 = arith.constant 0 : index
    %c0_86 = arith.constant 0 : index
    %149 = vector.load %arg2[%c1_84, %c0_85, %c0_86] : memref<3x12x1xf32, #tpu.memory_space<vmem>>, vector<1x8x1xf32>
    %150 = vector.shape_cast %149 : vector<1x8x1xf32> to vector<8x1xf32>
    %151 = vector.broadcast %150 : vector<8x1xf32> to vector<8x256xf32>
    %152 = arith.mulf %148, %151 : vector<8x256xf32>
    %c1_87 = arith.constant 1 : index
    %c0_88 = arith.constant 0 : index
    %c0_89 = arith.constant 0 : index
    %153 = vector.load %arg3[%c1_87, %c0_88, %c0_89] : memref<3x12x1xf32, #tpu.memory_space<vmem>>, vector<1x8x1xf32>
    %154 = vector.shape_cast %153 : vector<1x8x1xf32> to vector<8x1xf32>
    %155 = vector.broadcast %154 : vector<8x1xf32> to vector<8x256xf32>
    %156 = arith.addf %152, %155 : vector<8x256xf32>
    %cst_90 = arith.constant 0.000000e+00 : f32
    %157 = vector.broadcast %cst_90 : f32 to vector<8x256xf32>
    %158 = arith.maximumf %156, %157 : vector<8x256xf32>
    %c1_91 = arith.constant 1 : index
    %c0_92 = arith.constant 0 : index
    %c0_93 = arith.constant 0 : index
    %159 = vector.load %arg4[%c1_91, %c0_92, %c0_93] : memref<3x8x12xbf16, #tpu.memory_space<vmem>>, vector<1x8x8xbf16>
    %160 = vector.shape_cast %159 : vector<1x8x8xbf16> to vector<8x8xbf16>
    %161 = arith.truncf %158 : vector<8x256xf32> to vector<8x256xbf16>
    %cst_94 = arith.constant dense<0.000000e+00> : vector<8x256xf32>
    %162 = tpu.matmul %160, %161, %cst_94 {dimension_numbers = #tpu.dot_dimension_numbers<[1], [0], [0], [1], [0, 0, 1, 1], [], []>} : vector<8x8xbf16>, vector<8x256xbf16>, vector<8x256xf32> -> vector<8x256xf32>
    %c1_95 = arith.constant 1 : index
    %c0_96 = arith.constant 0 : index
    %c0_97 = arith.constant 0 : index
    %163 = vector.load %arg5[%c1_95, %c0_96, %c0_97] : memref<3x8x1xf32, #tpu.memory_space<vmem>>, vector<1x8x1xf32>
    %164 = vector.shape_cast %163 : vector<1x8x1xf32> to vector<8x1xf32>
    %165 = vector.broadcast %164 : vector<8x1xf32> to vector<8x256xf32>
    %166 = arith.mulf %162, %165 : vector<8x256xf32>
    %c1_98 = arith.constant 1 : index
    %c0_99 = arith.constant 0 : index
    %c0_100 = arith.constant 0 : index
    %167 = vector.load %arg6[%c1_98, %c0_99, %c0_100] : memref<3x8x1xf32, #tpu.memory_space<vmem>>, vector<1x8x1xf32>
    %168 = vector.shape_cast %167 : vector<1x8x1xf32> to vector<8x1xf32>
    %169 = vector.broadcast %168 : vector<8x1xf32> to vector<8x256xf32>
    %170 = arith.addf %166, %169 : vector<8x256xf32>
    %cst_101 = arith.constant 0.000000e+00 : f32
    %171 = vector.broadcast %cst_101 : f32 to vector<8x256xf32>
    %172 = arith.maximumf %170, %171 : vector<8x256xf32>
    %c17_i32_102 = arith.constant 17 : i32
    %173 = tpu.dynamic_rotate %172 by %c17_i32_102 dim 1 : vector<8x256xf32>, i32 -> vector<8x256xf32>
    %cst_103 = arith.constant 0.000000e+00 : f32
    %174 = vector.shape_cast %30 : vector<1x256xi1> to vector<1x256xi1>
    %175 = vector.broadcast %174 : vector<1x256xi1> to vector<8x256xi1>
    %176 = vector.broadcast %cst_103 : f32 to vector<8x256xf32>
    %177 = arith.select %175, %173, %176 : vector<8x256xi1>, vector<8x256xf32>
    %c1_104 = arith.constant 1 : index
    %c0_105 = arith.constant 0 : index
    %c0_106 = arith.constant 0 : index
    %c0_107 = arith.constant 0 : index
    %178 = vector.load %arg7[%c1_104, %c0_105, %c0_106, %c0_107] : memref<3x9x4x8xbf16, #tpu.memory_space<vmem>>, vector<1x1x4x8xbf16>
    %179 = vector.shape_cast %178 : vector<1x1x4x8xbf16> to vector<4x8xbf16>
    %180 = arith.truncf %177 : vector<8x256xf32> to vector<8x256xbf16>
    %cst_108 = arith.constant dense<0.000000e+00> : vector<4x256xf32>
    %181 = tpu.matmul %179, %180, %cst_108 {dimension_numbers = #tpu.dot_dimension_numbers<[1], [0], [0], [1], [0, 0, 1, 1], [], []>} : vector<4x8xbf16>, vector<8x256xbf16>, vector<4x256xf32> -> vector<4x256xf32>
    %c16_i32_109 = arith.constant 16 : i32
    %182 = tpu.dynamic_rotate %172 by %c16_i32_109 dim 1 : vector<8x256xf32>, i32 -> vector<8x256xf32>
    %cst_110 = arith.constant 0.000000e+00 : f32
    %183 = vector.shape_cast %23 : vector<1x256xi1> to vector<1x256xi1>
    %184 = vector.broadcast %183 : vector<1x256xi1> to vector<8x256xi1>
    %185 = vector.broadcast %cst_110 : f32 to vector<8x256xf32>
    %186 = arith.select %184, %182, %185 : vector<8x256xi1>, vector<8x256xf32>
    %c1_111 = arith.constant 1 : index
    %c1_112 = arith.constant 1 : index
    %c0_113 = arith.constant 0 : index
    %c0_114 = arith.constant 0 : index
    %187 = vector.load %arg7[%c1_111, %c1_112, %c0_113, %c0_114] : memref<3x9x4x8xbf16, #tpu.memory_space<vmem>>, vector<1x1x4x8xbf16>
    %188 = vector.shape_cast %187 : vector<1x1x4x8xbf16> to vector<4x8xbf16>
    %189 = arith.truncf %186 : vector<8x256xf32> to vector<8x256xbf16>
    %cst_115 = arith.constant dense<0.000000e+00> : vector<4x256xf32>
    %190 = tpu.matmul %188, %189, %cst_115 {dimension_numbers = #tpu.dot_dimension_numbers<[1], [0], [0], [1], [0, 0, 1, 1], [], []>} : vector<4x8xbf16>, vector<8x256xbf16>, vector<4x256xf32> -> vector<4x256xf32>
    %191 = arith.addf %181, %190 : vector<4x256xf32>
    %c15_i32_116 = arith.constant 15 : i32
    %192 = tpu.dynamic_rotate %172 by %c15_i32_116 dim 1 : vector<8x256xf32>, i32 -> vector<8x256xf32>
    %cst_117 = arith.constant 0.000000e+00 : f32
    %193 = vector.shape_cast %31 : vector<1x256xi1> to vector<1x256xi1>
    %194 = vector.broadcast %193 : vector<1x256xi1> to vector<8x256xi1>
    %195 = vector.broadcast %cst_117 : f32 to vector<8x256xf32>
    %196 = arith.select %194, %192, %195 : vector<8x256xi1>, vector<8x256xf32>
    %c1_118 = arith.constant 1 : index
    %c2_119 = arith.constant 2 : index
    %c0_120 = arith.constant 0 : index
    %c0_121 = arith.constant 0 : index
    %197 = vector.load %arg7[%c1_118, %c2_119, %c0_120, %c0_121] : memref<3x9x4x8xbf16, #tpu.memory_space<vmem>>, vector<1x1x4x8xbf16>
    %198 = vector.shape_cast %197 : vector<1x1x4x8xbf16> to vector<4x8xbf16>
    %199 = arith.truncf %196 : vector<8x256xf32> to vector<8x256xbf16>
    %cst_122 = arith.constant dense<0.000000e+00> : vector<4x256xf32>
    %200 = tpu.matmul %198, %199, %cst_122 {dimension_numbers = #tpu.dot_dimension_numbers<[1], [0], [0], [1], [0, 0, 1, 1], [], []>} : vector<4x8xbf16>, vector<8x256xbf16>, vector<4x256xf32> -> vector<4x256xf32>
    %201 = arith.addf %191, %200 : vector<4x256xf32>
    %c1_i32_123 = arith.constant 1 : i32
    %202 = tpu.dynamic_rotate %172 by %c1_i32_123 dim 1 : vector<8x256xf32>, i32 -> vector<8x256xf32>
    %cst_124 = arith.constant 0.000000e+00 : f32
    %203 = vector.shape_cast %27 : vector<1x256xi1> to vector<1x256xi1>
    %204 = vector.broadcast %203 : vector<1x256xi1> to vector<8x256xi1>
    %205 = vector.broadcast %cst_124 : f32 to vector<8x256xf32>
    %206 = arith.select %204, %202, %205 : vector<8x256xi1>, vector<8x256xf32>
    %c1_125 = arith.constant 1 : index
    %c3_126 = arith.constant 3 : index
    %c0_127 = arith.constant 0 : index
    %c0_128 = arith.constant 0 : index
    %207 = vector.load %arg7[%c1_125, %c3_126, %c0_127, %c0_128] : memref<3x9x4x8xbf16, #tpu.memory_space<vmem>>, vector<1x1x4x8xbf16>
    %208 = vector.shape_cast %207 : vector<1x1x4x8xbf16> to vector<4x8xbf16>
    %209 = arith.truncf %206 : vector<8x256xf32> to vector<8x256xbf16>
    %cst_129 = arith.constant dense<0.000000e+00> : vector<4x256xf32>
    %210 = tpu.matmul %208, %209, %cst_129 {dimension_numbers = #tpu.dot_dimension_numbers<[1], [0], [0], [1], [0, 0, 1, 1], [], []>} : vector<4x8xbf16>, vector<8x256xbf16>, vector<4x256xf32> -> vector<4x256xf32>
    %211 = arith.addf %201, %210 : vector<4x256xf32>
    %c1_130 = arith.constant 1 : index
    %c4_131 = arith.constant 4 : index
    %c0_132 = arith.constant 0 : index
    %c0_133 = arith.constant 0 : index
    %212 = vector.load %arg7[%c1_130, %c4_131, %c0_132, %c0_133] : memref<3x9x4x8xbf16, #tpu.memory_space<vmem>>, vector<1x1x4x8xbf16>
    %213 = vector.shape_cast %212 : vector<1x1x4x8xbf16> to vector<4x8xbf16>
    %214 = arith.truncf %172 : vector<8x256xf32> to vector<8x256xbf16>
    %cst_134 = arith.constant dense<0.000000e+00> : vector<4x256xf32>
    %215 = tpu.matmul %213, %214, %cst_134 {dimension_numbers = #tpu.dot_dimension_numbers<[1], [0], [0], [1], [0, 0, 1, 1], [], []>} : vector<4x8xbf16>, vector<8x256xbf16>, vector<4x256xf32> -> vector<4x256xf32>
    %216 = arith.addf %211, %215 : vector<4x256xf32>
    %c255_i32_135 = arith.constant 255 : i32
    %217 = tpu.dynamic_rotate %172 by %c255_i32_135 dim 1 : vector<8x256xf32>, i32 -> vector<8x256xf32>
    %cst_136 = arith.constant 0.000000e+00 : f32
    %218 = vector.shape_cast %29 : vector<1x256xi1> to vector<1x256xi1>
    %219 = vector.broadcast %218 : vector<1x256xi1> to vector<8x256xi1>
    %220 = vector.broadcast %cst_136 : f32 to vector<8x256xf32>
    %221 = arith.select %219, %217, %220 : vector<8x256xi1>, vector<8x256xf32>
    %c1_137 = arith.constant 1 : index
    %c5_138 = arith.constant 5 : index
    %c0_139 = arith.constant 0 : index
    %c0_140 = arith.constant 0 : index
    %222 = vector.load %arg7[%c1_137, %c5_138, %c0_139, %c0_140] : memref<3x9x4x8xbf16, #tpu.memory_space<vmem>>, vector<1x1x4x8xbf16>
    %223 = vector.shape_cast %222 : vector<1x1x4x8xbf16> to vector<4x8xbf16>
    %224 = arith.truncf %221 : vector<8x256xf32> to vector<8x256xbf16>
    %cst_141 = arith.constant dense<0.000000e+00> : vector<4x256xf32>
    %225 = tpu.matmul %223, %224, %cst_141 {dimension_numbers = #tpu.dot_dimension_numbers<[1], [0], [0], [1], [0, 0, 1, 1], [], []>} : vector<4x8xbf16>, vector<8x256xbf16>, vector<4x256xf32> -> vector<4x256xf32>
    %226 = arith.addf %216, %225 : vector<4x256xf32>
    %c241_i32_142 = arith.constant 241 : i32
    %227 = tpu.dynamic_rotate %172 by %c241_i32_142 dim 1 : vector<8x256xf32>, i32 -> vector<8x256xf32>
    %cst_143 = arith.constant 0.000000e+00 : f32
    %228 = vector.shape_cast %32 : vector<1x256xi1> to vector<1x256xi1>
    %229 = vector.broadcast %228 : vector<1x256xi1> to vector<8x256xi1>
    %230 = vector.broadcast %cst_143 : f32 to vector<8x256xf32>
    %231 = arith.select %229, %227, %230 : vector<8x256xi1>, vector<8x256xf32>
    %c1_144 = arith.constant 1 : index
    %c6_145 = arith.constant 6 : index
    %c0_146 = arith.constant 0 : index
    %c0_147 = arith.constant 0 : index
    %232 = vector.load %arg7[%c1_144, %c6_145, %c0_146, %c0_147] : memref<3x9x4x8xbf16, #tpu.memory_space<vmem>>, vector<1x1x4x8xbf16>
    %233 = vector.shape_cast %232 : vector<1x1x4x8xbf16> to vector<4x8xbf16>
    %234 = arith.truncf %231 : vector<8x256xf32> to vector<8x256xbf16>
    %cst_148 = arith.constant dense<0.000000e+00> : vector<4x256xf32>
    %235 = tpu.matmul %233, %234, %cst_148 {dimension_numbers = #tpu.dot_dimension_numbers<[1], [0], [0], [1], [0, 0, 1, 1], [], []>} : vector<4x8xbf16>, vector<8x256xbf16>, vector<4x256xf32> -> vector<4x256xf32>
    %236 = arith.addf %226, %235 : vector<4x256xf32>
    %c240_i32_149 = arith.constant 240 : i32
    %237 = tpu.dynamic_rotate %172 by %c240_i32_149 dim 1 : vector<8x256xf32>, i32 -> vector<8x256xf32>
    %cst_150 = arith.constant 0.000000e+00 : f32
    %238 = vector.shape_cast %25 : vector<1x256xi1> to vector<1x256xi1>
    %239 = vector.broadcast %238 : vector<1x256xi1> to vector<8x256xi1>
    %240 = vector.broadcast %cst_150 : f32 to vector<8x256xf32>
    %241 = arith.select %239, %237, %240 : vector<8x256xi1>, vector<8x256xf32>
    %c1_151 = arith.constant 1 : index
    %c7_152 = arith.constant 7 : index
    %c0_153 = arith.constant 0 : index
    %c0_154 = arith.constant 0 : index
    %242 = vector.load %arg7[%c1_151, %c7_152, %c0_153, %c0_154] : memref<3x9x4x8xbf16, #tpu.memory_space<vmem>>, vector<1x1x4x8xbf16>
    %243 = vector.shape_cast %242 : vector<1x1x4x8xbf16> to vector<4x8xbf16>
    %244 = arith.truncf %241 : vector<8x256xf32> to vector<8x256xbf16>
    %cst_155 = arith.constant dense<0.000000e+00> : vector<4x256xf32>
    %245 = tpu.matmul %243, %244, %cst_155 {dimension_numbers = #tpu.dot_dimension_numbers<[1], [0], [0], [1], [0, 0, 1, 1], [], []>} : vector<4x8xbf16>, vector<8x256xbf16>, vector<4x256xf32> -> vector<4x256xf32>
    %246 = arith.addf %236, %245 : vector<4x256xf32>
    %c239_i32_156 = arith.constant 239 : i32
    %247 = tpu.dynamic_rotate %172 by %c239_i32_156 dim 1 : vector<8x256xf32>, i32 -> vector<8x256xf32>
    %cst_157 = arith.constant 0.000000e+00 : f32
    %248 = vector.shape_cast %33 : vector<1x256xi1> to vector<1x256xi1>
    %249 = vector.broadcast %248 : vector<1x256xi1> to vector<8x256xi1>
    %250 = vector.broadcast %cst_157 : f32 to vector<8x256xf32>
    %251 = arith.select %249, %247, %250 : vector<8x256xi1>, vector<8x256xf32>
    %c1_158 = arith.constant 1 : index
    %c8_159 = arith.constant 8 : index
    %c0_160 = arith.constant 0 : index
    %c0_161 = arith.constant 0 : index
    %252 = vector.load %arg7[%c1_158, %c8_159, %c0_160, %c0_161] : memref<3x9x4x8xbf16, #tpu.memory_space<vmem>>, vector<1x1x4x8xbf16>
    %253 = vector.shape_cast %252 : vector<1x1x4x8xbf16> to vector<4x8xbf16>
    %254 = arith.truncf %251 : vector<8x256xf32> to vector<8x256xbf16>
    %cst_162 = arith.constant dense<0.000000e+00> : vector<4x256xf32>
    %255 = tpu.matmul %253, %254, %cst_162 {dimension_numbers = #tpu.dot_dimension_numbers<[1], [0], [0], [1], [0, 0, 1, 1], [], []>} : vector<4x8xbf16>, vector<8x256xbf16>, vector<4x256xf32> -> vector<4x256xf32>
    %256 = arith.addf %246, %255 : vector<4x256xf32>
    %c0_163 = arith.constant 0 : index
    %c8_164 = arith.constant 8 : index
    %c0_165 = arith.constant 0 : index
    %257 = vector.load %arg8[%c0_163, %c8_164, %c0_165] : memref<1x16x256xf32, #tpu.memory_space<vmem>>, vector<1x4x256xf32>
    %258 = vector.shape_cast %257 : vector<1x4x256xf32> to vector<4x256xf32>
    %259 = vector.shape_cast %256 : vector<4x256xf32> to vector<1x4x256xf32>
    tpu.vector_store %arg8[%c0_163, %c8_164, %c0_165], %259 {strides = array<i32>} : memref<1x16x256xf32, #tpu.memory_space<vmem>>, vector<1x4x256xf32>,
    %c0_166 = arith.constant 0 : index
    %c0_167 = arith.constant 0 : index
    %c0_168 = arith.constant 0 : index
    %260 = vector.load %arg8[%c0_166, %c0_167, %c0_168] : memref<1x16x256xf32, #tpu.memory_space<vmem>>, vector<1x12x256xf32>
    %261 = vector.shape_cast %260 : vector<1x12x256xf32> to vector<12x256xf32>
    %c2_169 = arith.constant 2 : index
    %c0_170 = arith.constant 0 : index
    %c0_171 = arith.constant 0 : index
    %262 = vector.load %arg2[%c2_169, %c0_170, %c0_171] : memref<3x12x1xf32, #tpu.memory_space<vmem>>, vector<1x12x1xf32>
    %263 = vector.shape_cast %262 : vector<1x12x1xf32> to vector<12x1xf32>
    %264 = vector.broadcast %263 : vector<12x1xf32> to vector<12x256xf32>
    %265 = arith.mulf %261, %264 : vector<12x256xf32>
    %c2_172 = arith.constant 2 : index
    %c0_173 = arith.constant 0 : index
    %c0_174 = arith.constant 0 : index
    %266 = vector.load %arg3[%c2_172, %c0_173, %c0_174] : memref<3x12x1xf32, #tpu.memory_space<vmem>>, vector<1x12x1xf32>
    %267 = vector.shape_cast %266 : vector<1x12x1xf32> to vector<12x1xf32>
    %268 = vector.broadcast %267 : vector<12x1xf32> to vector<12x256xf32>
    %269 = arith.addf %265, %268 : vector<12x256xf32>
    %cst_175 = arith.constant 0.000000e+00 : f32
    %270 = vector.broadcast %cst_175 : f32 to vector<12x256xf32>
    %271 = arith.maximumf %269, %270 : vector<12x256xf32>
    %c2_176 = arith.constant 2 : index
    %c0_177 = arith.constant 0 : index
    %c0_178 = arith.constant 0 : index
    %272 = vector.load %arg4[%c2_176, %c0_177, %c0_178] : memref<3x8x12xbf16, #tpu.memory_space<vmem>>, vector<1x8x12xbf16>
    %273 = vector.shape_cast %272 : vector<1x8x12xbf16> to vector<8x12xbf16>
    %274 = arith.truncf %271 : vector<12x256xf32> to vector<12x256xbf16>
    %cst_179 = arith.constant dense<0.000000e+00> : vector<8x256xf32>
    %275 = tpu.matmul %273, %274, %cst_179 {dimension_numbers = #tpu.dot_dimension_numbers<[1], [0], [0], [1], [0, 0, 1, 1], [], []>} : vector<8x12xbf16>, vector<12x256xbf16>, vector<8x256xf32> -> vector<8x256xf32>
    %c2_180 = arith.constant 2 : index
    %c0_181 = arith.constant 0 : index
    %c0_182 = arith.constant 0 : index
    %276 = vector.load %arg5[%c2_180, %c0_181, %c0_182] : memref<3x8x1xf32, #tpu.memory_space<vmem>>, vector<1x8x1xf32>
    %277 = vector.shape_cast %276 : vector<1x8x1xf32> to vector<8x1xf32>
    %278 = vector.broadcast %277 : vector<8x1xf32> to vector<8x256xf32>
    %279 = arith.mulf %275, %278 : vector<8x256xf32>
    %c2_183 = arith.constant 2 : index
    %c0_184 = arith.constant 0 : index
    %c0_185 = arith.constant 0 : index
    %280 = vector.load %arg6[%c2_183, %c0_184, %c0_185] : memref<3x8x1xf32, #tpu.memory_space<vmem>>, vector<1x8x1xf32>
    %281 = vector.shape_cast %280 : vector<1x8x1xf32> to vector<8x1xf32>
    %282 = vector.broadcast %281 : vector<8x1xf32> to vector<8x256xf32>
    %283 = arith.addf %279, %282 : vector<8x256xf32>
    %cst_186 = arith.constant 0.000000e+00 : f32
    %284 = vector.broadcast %cst_186 : f32 to vector<8x256xf32>
    %285 = arith.maximumf %283, %284 : vector<8x256xf32>
    %c17_i32_187 = arith.constant 17 : i32
    %286 = tpu.dynamic_rotate %285 by %c17_i32_187 dim 1 : vector<8x256xf32>, i32 -> vector<8x256xf32>
    %cst_188 = arith.constant 0.000000e+00 : f32
    %287 = vector.shape_cast %30 : vector<1x256xi1> to vector<1x256xi1>
    %288 = vector.broadcast %287 : vector<1x256xi1> to vector<8x256xi1>
    %289 = vector.broadcast %cst_188 : f32 to vector<8x256xf32>
    %290 = arith.select %288, %286, %289 : vector<8x256xi1>, vector<8x256xf32>
    %c2_189 = arith.constant 2 : index
    %c0_190 = arith.constant 0 : index
    %c0_191 = arith.constant 0 : index
    %c0_192 = arith.constant 0 : index
    %291 = vector.load %arg7[%c2_189, %c0_190, %c0_191, %c0_192] : memref<3x9x4x8xbf16, #tpu.memory_space<vmem>>, vector<1x1x4x8xbf16>
    %292 = vector.shape_cast %291 : vector<1x1x4x8xbf16> to vector<4x8xbf16>
    %293 = arith.truncf %290 : vector<8x256xf32> to vector<8x256xbf16>
    %cst_193 = arith.constant dense<0.000000e+00> : vector<4x256xf32>
    %294 = tpu.matmul %292, %293, %cst_193 {dimension_numbers = #tpu.dot_dimension_numbers<[1], [0], [0], [1], [0, 0, 1, 1], [], []>} : vector<4x8xbf16>, vector<8x256xbf16>, vector<4x256xf32> -> vector<4x256xf32>
    %c16_i32_194 = arith.constant 16 : i32
    %295 = tpu.dynamic_rotate %285 by %c16_i32_194 dim 1 : vector<8x256xf32>, i32 -> vector<8x256xf32>
    %cst_195 = arith.constant 0.000000e+00 : f32
    %296 = vector.shape_cast %23 : vector<1x256xi1> to vector<1x256xi1>
    %297 = vector.broadcast %296 : vector<1x256xi1> to vector<8x256xi1>
    %298 = vector.broadcast %cst_195 : f32 to vector<8x256xf32>
    %299 = arith.select %297, %295, %298 : vector<8x256xi1>, vector<8x256xf32>
    %c2_196 = arith.constant 2 : index
    %c1_197 = arith.constant 1 : index
    %c0_198 = arith.constant 0 : index
    %c0_199 = arith.constant 0 : index
    %300 = vector.load %arg7[%c2_196, %c1_197, %c0_198, %c0_199] : memref<3x9x4x8xbf16, #tpu.memory_space<vmem>>, vector<1x1x4x8xbf16>
    %301 = vector.shape_cast %300 : vector<1x1x4x8xbf16> to vector<4x8xbf16>
    %302 = arith.truncf %299 : vector<8x256xf32> to vector<8x256xbf16>
    %cst_200 = arith.constant dense<0.000000e+00> : vector<4x256xf32>
    %303 = tpu.matmul %301, %302, %cst_200 {dimension_numbers = #tpu.dot_dimension_numbers<[1], [0], [0], [1], [0, 0, 1, 1], [], []>} : vector<4x8xbf16>, vector<8x256xbf16>, vector<4x256xf32> -> vector<4x256xf32>
    %304 = arith.addf %294, %303 : vector<4x256xf32>
    %c15_i32_201 = arith.constant 15 : i32
    %305 = tpu.dynamic_rotate %285 by %c15_i32_201 dim 1 : vector<8x256xf32>, i32 -> vector<8x256xf32>
    %cst_202 = arith.constant 0.000000e+00 : f32
    %306 = vector.shape_cast %31 : vector<1x256xi1> to vector<1x256xi1>
    %307 = vector.broadcast %306 : vector<1x256xi1> to vector<8x256xi1>
    %308 = vector.broadcast %cst_202 : f32 to vector<8x256xf32>
    %309 = arith.select %307, %305, %308 : vector<8x256xi1>, vector<8x256xf32>
    %c2_203 = arith.constant 2 : index
    %c2_204 = arith.constant 2 : index
    %c0_205 = arith.constant 0 : index
    %c0_206 = arith.constant 0 : index
    %310 = vector.load %arg7[%c2_203, %c2_204, %c0_205, %c0_206] : memref<3x9x4x8xbf16, #tpu.memory_space<vmem>>, vector<1x1x4x8xbf16>
    %311 = vector.shape_cast %310 : vector<1x1x4x8xbf16> to vector<4x8xbf16>
    %312 = arith.truncf %309 : vector<8x256xf32> to vector<8x256xbf16>
    %cst_207 = arith.constant dense<0.000000e+00> : vector<4x256xf32>
    %313 = tpu.matmul %311, %312, %cst_207 {dimension_numbers = #tpu.dot_dimension_numbers<[1], [0], [0], [1], [0, 0, 1, 1], [], []>} : vector<4x8xbf16>, vector<8x256xbf16>, vector<4x256xf32> -> vector<4x256xf32>
    %314 = arith.addf %304, %313 : vector<4x256xf32>
    %c1_i32_208 = arith.constant 1 : i32
    %315 = tpu.dynamic_rotate %285 by %c1_i32_208 dim 1 : vector<8x256xf32>, i32 -> vector<8x256xf32>
    %cst_209 = arith.constant 0.000000e+00 : f32
    %316 = vector.shape_cast %27 : vector<1x256xi1> to vector<1x256xi1>
    %317 = vector.broadcast %316 : vector<1x256xi1> to vector<8x256xi1>
    %318 = vector.broadcast %cst_209 : f32 to vector<8x256xf32>
    %319 = arith.select %317, %315, %318 : vector<8x256xi1>, vector<8x256xf32>
    %c2_210 = arith.constant 2 : index
    %c3_211 = arith.constant 3 : index
    %c0_212 = arith.constant 0 : index
    %c0_213 = arith.constant 0 : index
    %320 = vector.load %arg7[%c2_210, %c3_211, %c0_212, %c0_213] : memref<3x9x4x8xbf16, #tpu.memory_space<vmem>>, vector<1x1x4x8xbf16>
    %321 = vector.shape_cast %320 : vector<1x1x4x8xbf16> to vector<4x8xbf16>
    %322 = arith.truncf %319 : vector<8x256xf32> to vector<8x256xbf16>
    %cst_214 = arith.constant dense<0.000000e+00> : vector<4x256xf32>
    %323 = tpu.matmul %321, %322, %cst_214 {dimension_numbers = #tpu.dot_dimension_numbers<[1], [0], [0], [1], [0, 0, 1, 1], [], []>} : vector<4x8xbf16>, vector<8x256xbf16>, vector<4x256xf32> -> vector<4x256xf32>
    %324 = arith.addf %314, %323 : vector<4x256xf32>
    %c2_215 = arith.constant 2 : index
    %c4_216 = arith.constant 4 : index
    %c0_217 = arith.constant 0 : index
    %c0_218 = arith.constant 0 : index
    %325 = vector.load %arg7[%c2_215, %c4_216, %c0_217, %c0_218] : memref<3x9x4x8xbf16, #tpu.memory_space<vmem>>, vector<1x1x4x8xbf16>
    %326 = vector.shape_cast %325 : vector<1x1x4x8xbf16> to vector<4x8xbf16>
    %327 = arith.truncf %285 : vector<8x256xf32> to vector<8x256xbf16>
    %cst_219 = arith.constant dense<0.000000e+00> : vector<4x256xf32>
    %328 = tpu.matmul %326, %327, %cst_219 {dimension_numbers = #tpu.dot_dimension_numbers<[1], [0], [0], [1], [0, 0, 1, 1], [], []>} : vector<4x8xbf16>, vector<8x256xbf16>, vector<4x256xf32> -> vector<4x256xf32>
    %329 = arith.addf %324, %328 : vector<4x256xf32>
    %c255_i32_220 = arith.constant 255 : i32
    %330 = tpu.dynamic_rotate %285 by %c255_i32_220 dim 1 : vector<8x256xf32>, i32 -> vector<8x256xf32>
    %cst_221 = arith.constant 0.000000e+00 : f32
    %331 = vector.shape_cast %29 : vector<1x256xi1> to vector<1x256xi1>
    %332 = vector.broadcast %331 : vector<1x256xi1> to vector<8x256xi1>
    %333 = vector.broadcast %cst_221 : f32 to vector<8x256xf32>
    %334 = arith.select %332, %330, %333 : vector<8x256xi1>, vector<8x256xf32>
    %c2_222 = arith.constant 2 : index
    %c5_223 = arith.constant 5 : index
    %c0_224 = arith.constant 0 : index
    %c0_225 = arith.constant 0 : index
    %335 = vector.load %arg7[%c2_222, %c5_223, %c0_224, %c0_225] : memref<3x9x4x8xbf16, #tpu.memory_space<vmem>>, vector<1x1x4x8xbf16>
    %336 = vector.shape_cast %335 : vector<1x1x4x8xbf16> to vector<4x8xbf16>
    %337 = arith.truncf %334 : vector<8x256xf32> to vector<8x256xbf16>
    %cst_226 = arith.constant dense<0.000000e+00> : vector<4x256xf32>
    %338 = tpu.matmul %336, %337, %cst_226 {dimension_numbers = #tpu.dot_dimension_numbers<[1], [0], [0], [1], [0, 0, 1, 1], [], []>} : vector<4x8xbf16>, vector<8x256xbf16>, vector<4x256xf32> -> vector<4x256xf32>
    %339 = arith.addf %329, %338 : vector<4x256xf32>
    %c241_i32_227 = arith.constant 241 : i32
    %340 = tpu.dynamic_rotate %285 by %c241_i32_227 dim 1 : vector<8x256xf32>, i32 -> vector<8x256xf32>
    %cst_228 = arith.constant 0.000000e+00 : f32
    %341 = vector.shape_cast %32 : vector<1x256xi1> to vector<1x256xi1>
    %342 = vector.broadcast %341 : vector<1x256xi1> to vector<8x256xi1>
    %343 = vector.broadcast %cst_228 : f32 to vector<8x256xf32>
    %344 = arith.select %342, %340, %343 : vector<8x256xi1>, vector<8x256xf32>
    %c2_229 = arith.constant 2 : index
    %c6_230 = arith.constant 6 : index
    %c0_231 = arith.constant 0 : index
    %c0_232 = arith.constant 0 : index
    %345 = vector.load %arg7[%c2_229, %c6_230, %c0_231, %c0_232] : memref<3x9x4x8xbf16, #tpu.memory_space<vmem>>, vector<1x1x4x8xbf16>
    %346 = vector.shape_cast %345 : vector<1x1x4x8xbf16> to vector<4x8xbf16>
    %347 = arith.truncf %344 : vector<8x256xf32> to vector<8x256xbf16>
    %cst_233 = arith.constant dense<0.000000e+00> : vector<4x256xf32>
    %348 = tpu.matmul %346, %347, %cst_233 {dimension_numbers = #tpu.dot_dimension_numbers<[1], [0], [0], [1], [0, 0, 1, 1], [], []>} : vector<4x8xbf16>, vector<8x256xbf16>, vector<4x256xf32> -> vector<4x256xf32>
    %349 = arith.addf %339, %348 : vector<4x256xf32>
    %c240_i32_234 = arith.constant 240 : i32
    %350 = tpu.dynamic_rotate %285 by %c240_i32_234 dim 1 : vector<8x256xf32>, i32 -> vector<8x256xf32>
    %cst_235 = arith.constant 0.000000e+00 : f32
    %351 = vector.shape_cast %25 : vector<1x256xi1> to vector<1x256xi1>
    %352 = vector.broadcast %351 : vector<1x256xi1> to vector<8x256xi1>
    %353 = vector.broadcast %cst_235 : f32 to vector<8x256xf32>
    %354 = arith.select %352, %350, %353 : vector<8x256xi1>, vector<8x256xf32>
    %c2_236 = arith.constant 2 : index
    %c7_237 = arith.constant 7 : index
    %c0_238 = arith.constant 0 : index
    %c0_239 = arith.constant 0 : index
    %355 = vector.load %arg7[%c2_236, %c7_237, %c0_238, %c0_239] : memref<3x9x4x8xbf16, #tpu.memory_space<vmem>>, vector<1x1x4x8xbf16>
    %356 = vector.shape_cast %355 : vector<1x1x4x8xbf16> to vector<4x8xbf16>
    %357 = arith.truncf %354 : vector<8x256xf32> to vector<8x256xbf16>
    %cst_240 = arith.constant dense<0.000000e+00> : vector<4x256xf32>
    %358 = tpu.matmul %356, %357, %cst_240 {dimension_numbers = #tpu.dot_dimension_numbers<[1], [0], [0], [1], [0, 0, 1, 1], [], []>} : vector<4x8xbf16>, vector<8x256xbf16>, vector<4x256xf32> -> vector<4x256xf32>
    %359 = arith.addf %349, %358 : vector<4x256xf32>
    %c239_i32_241 = arith.constant 239 : i32
    %360 = tpu.dynamic_rotate %285 by %c239_i32_241 dim 1 : vector<8x256xf32>, i32 -> vector<8x256xf32>
    %cst_242 = arith.constant 0.000000e+00 : f32
    %361 = vector.shape_cast %33 : vector<1x256xi1> to vector<1x256xi1>
    %362 = vector.broadcast %361 : vector<1x256xi1> to vector<8x256xi1>
    %363 = vector.broadcast %cst_242 : f32 to vector<8x256xf32>
    %364 = arith.select %362, %360, %363 : vector<8x256xi1>, vector<8x256xf32>
    %c2_243 = arith.constant 2 : index
    %c8_244 = arith.constant 8 : index
    %c0_245 = arith.constant 0 : index
    %c0_246 = arith.constant 0 : index
    %365 = vector.load %arg7[%c2_243, %c8_244, %c0_245, %c0_246] : memref<3x9x4x8xbf16, #tpu.memory_space<vmem>>, vector<1x1x4x8xbf16>
    %366 = vector.shape_cast %365 : vector<1x1x4x8xbf16> to vector<4x8xbf16>
    %367 = arith.truncf %364 : vector<8x256xf32> to vector<8x256xbf16>
    %cst_247 = arith.constant dense<0.000000e+00> : vector<4x256xf32>
    %368 = tpu.matmul %366, %367, %cst_247 {dimension_numbers = #tpu.dot_dimension_numbers<[1], [0], [0], [1], [0, 0, 1, 1], [], []>} : vector<4x8xbf16>, vector<8x256xbf16>, vector<4x256xf32> -> vector<4x256xf32>
    %369 = arith.addf %359, %368 : vector<4x256xf32>
    %c0_248 = arith.constant 0 : index
    %c12 = arith.constant 12 : index
    %c0_249 = arith.constant 0 : index
    %370 = vector.load %arg8[%c0_248, %c12, %c0_249] : memref<1x16x256xf32, #tpu.memory_space<vmem>>, vector<1x4x256xf32>
    %371 = vector.shape_cast %370 : vector<1x4x256xf32> to vector<4x256xf32>
    %372 = vector.shape_cast %369 : vector<4x256xf32> to vector<1x4x256xf32>
    tpu.vector_store %arg8[%c0_248, %c12, %c0_249], %372 {strides = array<i32>} : memref<1x16x256xf32, #tpu.memory_space<vmem>>, vector<1x4x256xf32>,
    return
  }
  func.func @transform_0(%arg0: i32) -> (i32, i32, i32) {
    %c0_i32 = arith.constant 0 : i32
    %c0_i32_0 = arith.constant 0 : i32
    %c0_i32_1 = arith.constant 0 : i32
    return %arg0, %c0_i32, %c0_i32_0 : i32, i32, i32
  }
  func.func @transform_1(%arg0: i32) -> (i32, i32, i32) {
    %c0_i32 = arith.constant 0 : i32
    %c0_i32_0 = arith.constant 0 : i32
    %c0_i32_1 = arith.constant 0 : i32
    %c0_i32_2 = arith.constant 0 : i32
    return %c0_i32, %c0_i32_0, %c0_i32_1 : i32, i32, i32
  }
  func.func @transform_2(%arg0: i32) -> (i32, i32, i32) {
    %c0_i32 = arith.constant 0 : i32
    %c0_i32_0 = arith.constant 0 : i32
    %c0_i32_1 = arith.constant 0 : i32
    %c0_i32_2 = arith.constant 0 : i32
    return %c0_i32, %c0_i32_0, %c0_i32_1 : i32, i32, i32
  }
  func.func @transform_3(%arg0: i32) -> (i32, i32, i32) {
    %c0_i32 = arith.constant 0 : i32
    %c0_i32_0 = arith.constant 0 : i32
    %c0_i32_1 = arith.constant 0 : i32
    %c0_i32_2 = arith.constant 0 : i32
    return %c0_i32, %c0_i32_0, %c0_i32_1 : i32, i32, i32
  }
  func.func @transform_4(%arg0: i32) -> (i32, i32, i32) {
    %c0_i32 = arith.constant 0 : i32
    %c0_i32_0 = arith.constant 0 : i32
    %c0_i32_1 = arith.constant 0 : i32
    %c0_i32_2 = arith.constant 0 : i32
    return %c0_i32, %c0_i32_0, %c0_i32_1 : i32, i32, i32
  }
  func.func @transform_5(%arg0: i32) -> (i32, i32, i32) {
    %c0_i32 = arith.constant 0 : i32
    %c0_i32_0 = arith.constant 0 : i32
    %c0_i32_1 = arith.constant 0 : i32
    %c0_i32_2 = arith.constant 0 : i32
    return %c0_i32, %c0_i32_0, %c0_i32_1 : i32, i32, i32
  }
  func.func @transform_6(%arg0: i32) -> (i32, i32, i32, i32) {
    %c0_i32 = arith.constant 0 : i32
    %c0_i32_0 = arith.constant 0 : i32
    %c0_i32_1 = arith.constant 0 : i32
    %c0_i32_2 = arith.constant 0 : i32
    %c0_i32_3 = arith.constant 0 : i32
    return %c0_i32, %c0_i32_0, %c0_i32_1, %c0_i32_2 : i32, i32, i32, i32
  }
  func.func @transform_7(%arg0: i32) -> (i32, i32, i32) {
    %c0_i32 = arith.constant 0 : i32
    %c0_i32_0 = arith.constant 0 : i32
    %c0_i32_1 = arith.constant 0 : i32
    return %arg0, %c0_i32, %c0_i32_0 : i32, i32, i32
  }
}

</mosaic_0001>

<llo_original>
// kernel: dense_block_forward.1
$region0: #{dense_block_forward.1}
  #allocation0 [shape = 'u32[]', space=smem, size = 0x4, offset = 0x4, fixed_abs, tag = 'smem constant byte address 0x4 - core index']
  #allocation1 [shape = 'u32[144,128]{1,0:T(1,128)}', space=vmem, size = 0x12000, scoped, tag = 'internal scratch']
  %s0 = inlined_call_operand.vmem [shape: f32[2,4,256], index: 0, kind: input, shape index: {}]
  %s1 = inlined_call_operand.vmem [shape: f32[3,12,1], index: 1, kind: input, shape index: {}]
  %s2 = inlined_call_operand.vmem [shape: f32[3,12,1], index: 2, kind: input, shape index: {}]
  %s3 = inlined_call_operand.vmem [shape: bf16[3,8,12], index: 3, kind: input, shape index: {}]
  %s4 = inlined_call_operand.vmem [shape: f32[3,8,1], index: 4, kind: input, shape index: {}]
  %s5 = inlined_call_operand.vmem [shape: f32[3,8,1], index: 5, kind: input, shape index: {}]
  %s6 = inlined_call_operand.vmem [shape: bf16[3,9,4,8], index: 6, kind: input, shape index: {}]
  %s7 = inlined_call_operand.vmem [shape: f32[2,16,256], index: 7, kind: output, shape index: {}]
  %s8 = sld [smem:[#allocation0]]
  $region61: #{dense_block_forward.1} parent=0
    _
  %s10 = ssub.s32 1, %s8
  %s11 = scalar_select 0, %s10, %s8
  loop: start=0, step=1, limit=4
  $region2: #{dense_block_forward.1} parent=0 // loop_pre_header
    _
  $region3: #{dense_block_forward.1} parent=0 // loop_header
    %s13 = sphi 0, %s17
    %p14 = scmp.ge.s32.totalorder %s13, 4
    %s23 = sphi 0, %s25
    %s26 = sphi 0, %s23
    %s27 = sphi 0, %s26
    %s43 = sphi 0, %s27
    %s47 = sphi 0, %s47
    %s49 = sphi 0, %s47
    %s50 = sphi 0, %s49
    %s64 = sphi 0, %s50
    %s68 = sphi 0, %s68
    %s70 = sphi 0, %s68
    %s71 = sphi 0, %s70
    %s85 = sphi 0, %s71
    %s89 = sphi 0, %s89
    %s91 = sphi 0, %s89
    %s92 = sphi 0, %s91
    %s106 = sphi 0, %s92
    %s110 = sphi 0, %s110
    %s112 = sphi 0, %s110
    %s113 = sphi 0, %s112
    %s127 = sphi 0, %s113
    %s131 = sphi 0, %s131
    %s133 = sphi 0, %s131
    %s134 = sphi 0, %s133
    %s148 = sphi 0, %s134
    %s152 = sphi 0, %s152
    %s154 = sphi 0, %s152
    %s155 = sphi 0, %s154
    %s169 = sphi 0, %s155
    %s175 = sphi 0, %s177
    %s178 = sphi 0, %s175
    %s179 = sphi 0, %s178
    %s195 = sphi 0, %s179
  $region4: #{dense_block_forward.1} parent=0 // loop_header_branch
    %16 = sbr.rel (%p14) target = $region8
  $region5: #{dense_block_forward.1} parent=0 // loop_body
    %s18 = ssub.s32 %s13, 1
    %s19 = ssub.s32 %s13, 2
    %s20 = sadd.s32 %s13, 1
    %s21 = ssub.s32 %s13, %s20
    %p22 = scmp.eq.s32.totalorder %s21, 0
    %s24 = sadd.s32 %s23, 1
    %s25 = scalar_select %p22, %s23, %s24
    %p28 = pneg %p22
    %p29 = scmp.eq.s32.totalorder %s13, 1
    %p30 = por %p28, %p29
    %p31 = scmp.ne.s32.totalorder %s23, %s26
    %p32 = scmp.eq.s32.totalorder %s13, 0
    %p33 = por %p31, %p32
    %p34 = scmp.ne.s32.totalorder %s23, %s26
    %p35 = scmp.eq.s32.totalorder %s18, 1
    %p36 = por %p34, %p35
    %p37 = scmp.ne.s32.totalorder %s26, %s27
    %p38 = scmp.eq.s32.totalorder %s18, 0
    %p39 = por %p37, %p38
    %p40 = scmp.ne.s32.totalorder %s26, %s27
    %p41 = scmp.eq.s32.totalorder %s19, 1
    %p42 = por %p40, %p41
    %p44 = scmp.ne.s32.totalorder %s27, %s43
    %p45 = scmp.eq.s32.totalorder %s19, 0
    %p46 = por %p44, %p45
    %s48 = sadd.s32 %s47, 1
    %p51 = scmp.eq.s32.totalorder %s13, 1
    %p52 = scmp.ne.s32.totalorder %s47, %s49
    %p53 = scmp.eq.s32.totalorder %s13, 0
    %p54 = por %p52, %p53
    %p55 = scmp.ne.s32.totalorder %s47, %s49
    %p56 = scmp.eq.s32.totalorder %s18, 1
    %p57 = por %p55, %p56
    %p58 = scmp.ne.s32.totalorder %s49, %s50
    %p59 = scmp.eq.s32.totalorder %s18, 0
    %p60 = por %p58, %p59
    %p61 = scmp.ne.s32.totalorder %s49, %s50
    %p62 = scmp.eq.s32.totalorder %s19, 1
    %p63 = por %p61, %p62
    %p65 = scmp.ne.s32.totalorder %s50, %s64
    %p66 = scmp.eq.s32.totalorder %s19, 0
    %p67 = por %p65, %p66
    %s69 = sadd.s32 %s68, 1
    %p72 = scmp.eq.s32.totalorder %s13, 1
    %p73 = scmp.ne.s32.totalorder %s68, %s70
    %p74 = scmp.eq.s32.totalorder %s13, 0
    %p75 = por %p73, %p74
    %p76 = scmp.ne.s32.totalorder %s68, %s70
    %p77 = scmp.eq.s32.totalorder %s18, 1
    %p78 = por %p76, %p77
    %p79 = scmp.ne.s32.totalorder %s70, %s71
    %p80 = scmp.eq.s32.totalorder %s18, 0
    %p81 = por %p79, %p80
    %p82 = scmp.ne.s32.totalorder %s70, %s71
    %p83 = scmp.eq.s32.totalorder %s19, 1
    %p84 = por %p82, %p83
    %p86 = scmp.ne.s32.totalorder %s71, %s85
    %p87 = scmp.eq.s32.totalorder %s19, 0
    %p88 = por %p86, %p87
    %s90 = sadd.s32 %s89, 1
    %p93 = scmp.eq.s32.totalorder %s13, 1
    %p94 = scmp.ne.s32.totalorder %s89, %s91
    %p95 = scmp.eq.s32.totalorder %s13, 0
    %p96 = por %p94, %p95
    %p97 = scmp.ne.s32.totalorder %s89, %s91
    %p98 = scmp.eq.s32.totalorder %s18, 1
    %p99 = por %p97, %p98
    %p100 = scmp.ne.s32.totalorder %s91, %s92
    %p101 = scmp.eq.s32.totalorder %s18, 0
    %p102 = por %p100, %p101
    %p103 = scmp.ne.s32.totalorder %s91, %s92
    %p104 = scmp.eq.s32.totalorder %s19, 1
    %p105 = por %p103, %p104
    %p107 = scmp.ne.s32.totalorder %s92, %s106
    %p108 = scmp.eq.s32.totalorder %s19, 0
    %p109 = por %p107, %p108
    %s111 = sadd.s32 %s110, 1
    %p114 = scmp.eq.s32.totalorder %s13, 1
    %p115 = scmp.ne.s32.totalorder %s110, %s112
    %p116 = scmp.eq.s32.totalorder %s13, 0
    %p117 = por %p115, %p116
    %p118 = scmp.ne.s32.totalorder %s110, %s112
    %p119 = scmp.eq.s32.totalorder %s18, 1
    %p120 = por %p118, %p119
    %p121 = scmp.ne.s32.totalorder %s112, %s113
    %p122 = scmp.eq.s32.totalorder %s18, 0
    %p123 = por %p121, %p122
    %p124 = scmp.ne.s32.totalorder %s112, %s113
    %p125 = scmp.eq.s32.totalorder %s19, 1
    %p126 = por %p124, %p125
    %p128 = scmp.ne.s32.totalorder %s113, %s127
    %p129 = scmp.eq.s32.totalorder %s19, 0
    %p130 = por %p128, %p129
    %s132 = sadd.s32 %s131, 1
    %p135 = scmp.eq.s32.totalorder %s13, 1
    %p136 = scmp.ne.s32.totalorder %s131, %s133
    %p137 = scmp.eq.s32.totalorder %s13, 0
    %p138 = por %p136, %p137
    %p139 = scmp.ne.s32.totalorder %s131, %s133
    %p140 = scmp.eq.s32.totalorder %s18, 1
    %p141 = por %p139, %p140
    %p142 = scmp.ne.s32.totalorder %s133, %s134
    %p143 = scmp.eq.s32.totalorder %s18, 0
    %p144 = por %p142, %p143
    %p145 = scmp.ne.s32.totalorder %s133, %s134
    %p146 = scmp.eq.s32.totalorder %s19, 1
    %p147 = por %p145, %p146
    %p149 = scmp.ne.s32.totalorder %s134, %s148
    %p150 = scmp.eq.s32.totalorder %s19, 0
    %p151 = por %p149, %p150
    %s153 = sadd.s32 %s152, 1
    %p156 = scmp.eq.s32.totalorder %s13, 1
    %p157 = scmp.ne.s32.totalorder %s152, %s154
    %p158 = scmp.eq.s32.totalorder %s13, 0
    %p159 = por %p157, %p158
    %p160 = scmp.ne.s32.totalorder %s152, %s154
    %p161 = scmp.eq.s32.totalorder %s18, 1
    %p162 = por %p160, %p161
    %p163 = scmp.ne.s32.totalorder %s154, %s155
    %p164 = scmp.eq.s32.totalorder %s18, 0
    %p165 = por %p163, %p164
    %p166 = scmp.ne.s32.totalorder %s154, %s155
    %p167 = scmp.eq.s32.totalorder %s19, 1
    %p168 = por %p166, %p167
    %p170 = scmp.ne.s32.totalorder %s155, %s169
    %p171 = scmp.eq.s32.totalorder %s19, 0
    %p172 = por %p170, %p171
    %s173 = ssub.s32 %s13, %s20
    %p174 = scmp.eq.s32.totalorder %s173, 0
    %s176 = sadd.s32 %s175, 1
    %s177 = scalar_select %p174, %s175, %s176
    %p180 = pneg %p174
    %p181 = scmp.eq.s32.totalorder %s13, 1
    %p182 = por %p180, %p181
    %p183 = scmp.ne.s32.totalorder %s175, %s178
    %p184 = scmp.eq.s32.totalorder %s13, 0
    %p185 = por %p183, %p184
    %p186 = scmp.ne.s32.totalorder %s175, %s178
    %p187 = scmp.eq.s32.totalorder %s18, 1
    %p188 = por %p186, %p187
    %p189 = scmp.ne.s32.totalorder %s178, %s179
    %p190 = scmp.eq.s32.totalorder %s18, 0
    %p191 = por %p189, %p190
    %p192 = scmp.ne.s32.totalorder %s178, %s179
    %p193 = scmp.eq.s32.totalorder %s19, 1
    %p194 = por %p192, %p193
    %p196 = scmp.ne.s32.totalorder %s179, %s195
    %p197 = scmp.eq.s32.totalorder %s19, 0
    %p198 = por %p196, %p197
    %p199 = scmp.le.s32.totalorder 1, %s13
    %p200 = scmp.lt.s32.totalorder %s13, 3
    %p201 = pnand %p199, %p200
    %p202 = pneg %p201
    // Predicated region
    $region9: #{dense_block_forward.1} parent=5 // pred_check
      _
    $region10: #{dense_block_forward.1} parent=5 // pred_check_branch
      %204 = sbr.rel (%p201) target = $region12
    $region11: #{dense_block_forward.1} parent=5 // pred_region
      %s205 = ssub.s32 %s13, 1
      // Predicated region
      $region13: #{dense_block_forward.1} parent=11 // pred_check
        %p206 = pneg %p60
      $region14: #{dense_block_forward.1} parent=11 // pred_check_branch
        %208 = sbr.rel (%p206) target = $region16
      $region15: #{dense_block_forward.1} parent=11 // pred_region
        _
      $region16: #{dense_block_forward.1} parent=11 // pred_fallthru
        _
      // Predicated region
      $region17: #{dense_block_forward.1} parent=11 // pred_check
        %p209 = pneg %p81
      $region18: #{dense_block_forward.1} parent=11 // pred_check_branch
        %211 = sbr.rel (%p209) target = $region20
      $region19: #{dense_block_forward.1} parent=11 // pred_region
        _
      $region20: #{dense_block_forward.1} parent=11 // pred_fallthru
        _
      // Predicated region
      $region21: #{dense_block_forward.1} parent=11 // pred_check
        %p212 = pneg %p102
      $region22: #{dense_block_forward.1} parent=11 // pred_check_branch
        %214 = sbr.rel (%p212) target = $region24
      $region23: #{dense_block_forward.1} parent=11 // pred_region
        _
      $region24: #{dense_block_forward.1} parent=11 // pred_fallthru
        _
      // Predicated region
      $region25: #{dense_block_forward.1} parent=11 // pred_check
        %p215 = pneg %p123
      $region26: #{dense_block_forward.1} parent=11 // pred_check_branch
        %217 = sbr.rel (%p215) target = $region28
      $region27: #{dense_block_forward.1} parent=11 // pred_region
        _
      $region28: #{dense_block_forward.1} parent=11 // pred_fallthru
        _
      // Predicated region
      $region29: #{dense_block_forward.1} parent=11 // pred_check
        %p218 = pneg %p144
      $region30: #{dense_block_forward.1} parent=11 // pred_check_branch
        %220 = sbr.rel (%p218) target = $region32
      $region31: #{dense_block_forward.1} parent=11 // pred_region
        _
      $region32: #{dense_block_forward.1} parent=11 // pred_fallthru
        _
      // Predicated region
      $region33: #{dense_block_forward.1} parent=11 // pred_check
        %p221 = pneg %p165
      $region34: #{dense_block_forward.1} parent=11 // pred_check_branch
        %223 = sbr.rel (%p221) target = $region36
      $region35: #{dense_block_forward.1} parent=11 // pred_region
        _
      $region36: #{dense_block_forward.1} parent=11 // pred_fallthru
        _
    $region12: #{dense_block_forward.1} parent=5 // pred_fallthru
      _
    %p224 = scmp.lt.s32.totalorder %s13, 2
    // Predicated region
    $region37: #{dense_block_forward.1} parent=5 // pred_check
      %p225 = pneg %p224
    $region38: #{dense_block_forward.1} parent=5 // pred_check_branch
      %227 = sbr.rel (%p225) target = $region40
    $region39: #{dense_block_forward.1} parent=5 // pred_region
      // Predicated region
      $region41: #{dense_block_forward.1} parent=39 // pred_check
        %p228 = pneg %p33
      $region42: #{dense_block_forward.1} parent=39 // pred_check_branch
        %230 = sbr.rel (%p228) target = $region44
      $region43: #{dense_block_forward.1} parent=39 // pred_region
        %p231 = scmp.lt.s32.totalorder %s13, 1
        %s232 = scalar_select %p231, %s13, 1
        %s233 = smul.addr %s232, 2
        %s234 = smul.addr %s233, 4
        %s235 = scalar_lea.vmem %s0, %s234
      $region44: #{dense_block_forward.1} parent=39 // pred_fallthru
        _
    $region40: #{dense_block_forward.1} parent=5 // pred_fallthru
      _
    %p236 = scmp.le.s32.totalorder 1, %s13
    %p237 = scmp.lt.s32.totalorder %s13, 3
    %p238 = pnand %p236, %p237
    %p239 = pneg %p238
    // Predicated region
    $region45: #{dense_block_forward.1} parent=5 // pred_check
      _
    $region46: #{dense_block_forward.1} parent=5 // pred_check_branch
      %241 = sbr.rel (%p238) target = $region48
    $region47: #{dense_block_forward.1} parent=5 // pred_region
      %s242 = ssub.s32 %s13, 1
      %p243 = scmp.lt.s32.totalorder %s18, 1
      %s244 = scalar_select %p243, %s18, 1
      %s245 = smul.addr %s244, 2
      %s246 = smul.addr %s245, 4
      %s247 = scalar_lea.vmem %s0, %s246
      %p248 = pneg %p39
      %p249 = pneg %p36
      %p250 = pneg %p60
      %p251 = pneg %p57
      %p252 = pneg %p81
      %p253 = pneg %p78
      %p254 = pneg %p102
      %p255 = pneg %p99
      %p256 = pneg %p123
      %p257 = pneg %p120
      %p258 = pneg %p144
      %p259 = pneg %p141
      %p260 = pneg %p165
      %p261 = pneg %p162
      %p262 = pneg %p191
      %p263 = pneg %p188
      %p264 = scmp.lt.s32.totalorder %s18, 1
      %s265 = scalar_select %p264, %s18, 1
      %s266 = smul.addr %s265, 4
      %s267 = smul.addr %s266, 8
      %s268 = scalar_lea.vmem %s7, %s267
      %p269 = scmp.lt.s32.totalorder %s18, 1
      %s270 = scalar_select %p269, %s18, 1
      %s271 = smul.addr %s270, 2
      %s272 = smul.addr %s271, 4
      %s273 = scalar_lea.vmem %s0, %s272
      %p274 = scmp.lt.s32.totalorder %s18, 1
      %s275 = scalar_select %p274, %s18, 1
      %s276 = smul.addr %s275, 4
      %s277 = smul.addr %s276, 8
      %s278 = scalar_lea.vmem %s7, %s277
      %v280 = vld [vmem:[%s273] sm:$0xff]
      %v282 = vcombine.high %v280, %v280
      %284 = vst [vmem:[%s278] sm:$0xf] %v280
      %285 = vst [vmem:[%s278 + $0x8] sm:$0xf] %v282
      %v286 = vlaneseq
      %v287 = vand.u32 %v286, 127
      %v288 = vadd.s32 %v287, 128
      %vm289 = vcmp.lt.s32.totalorder %v287, 0
      %v290 = vsub.s32 0, %v287
      %v291 = vsel %vm289, %v290, %v287
      %v292 = vshrl.u32 %v291, 4
      %v293 = vand.u32 %v291, 15
      %v294 = vsub.s32 0, %v293
      %v295 = vsel %vm289, %v294, %v293
      %vm296 = vcmp.lt.s32.totalorder %v288, 0
      %v297 = vsub.s32 0, %v288
      %v298 = vsel %vm296, %v297, %v288
      %v299 = vshrl.u32 %v298, 4
      %v300 = vand.u32 %v298, 15
      %v301 = vsub.s32 0, %v300
      %v302 = vsel %vm296, %v301, %v300
      %vm303 = vcmp.ne.s32.totalorder %v295, 0
      %vm304 = vcmp.ne.s32.totalorder %v302, 0
      %vm305 = vcmp.lt.s32.totalorder %v295, 0
      %vm306 = vcmp.lt.s32.totalorder %v302, 0
      %vm307 = vmand %vm305, %vm303
      %vm308 = vmand %vm306, %vm304
      %v309 = vadd.s32 %v295, 16
      %v310 = vadd.s32 %v302, 16
      %v311 = vsel %vm307, %v309, %v295
      %v312 = vsel %vm308, %v310, %v302
      %vm313 = vcmp.ge.s32.totalorder %v287, 16
      %vm314 = vcmp.ge.s32.totalorder %v288, 16
      %vm315 = vcmp.lt.s32.totalorder %v287, 240
      %vm316 = vcmp.lt.s32.totalorder %v288, 240
      %vm317 = vcmp.ge.s32.totalorder %v311, 1
      %vm318 = vcmp.ge.s32.totalorder %v312, 1
      %vm319 = vcmp.le.s32.totalorder %v311, 14
      %vm320 = vcmp.le.s32.totalorder %v312, 14
      %vm321 = vmand %vm313, %vm317
      %vm322 = vmand %vm314, %vm318
      %vm323 = vmand %vm313, %vm319
      %vm324 = vmand %vm314, %vm320
      %vm325 = vmand %vm315, %vm317
      %vm326 = vmand %vm316, %vm318
      %vm327 = vmand %vm315, %vm319
      %vm328 = vmand %vm316, %vm320
      %v329 = vld [vmem:[%s278] sm:$0xf]
      %v330 = vld [vmem:[%s278 + $0x8] sm:$0xf]
      %v331 = vld [vmem:[%s1] sm:$0xf]
      %333 = vset.pattern.permute.xlu0 0
      %334 = vperm.xlu0 %333, %v331
      %v335 = vpop.permute.xlu0 %334
      %v337 = vmul.f32 %v329, %v335
      %v338 = vmul.f32 %v330, %v335
      %v339 = vld [vmem:[%s2] sm:$0xf]
      %341 = vset.pattern.permute.xlu0 0
      %342 = vperm.xlu0 %341, %v339
      %v343 = vpop.permute.xlu0 %342
      %v345 = vadd.f32 %v337, %v343
      %v346 = vadd.f32 %v338, %v343
      %v347 = vmax.f32 %v345, 0.0
      %v348 = vmax.f32 %v346, 0.0
      %v349 = vld [vmem:[%s3] sm:$0xf]
      %v350 = vpack.c.bf16 %v347, %v347
      %v351 = vpack.c.bf16 %v348, %v348
      %vm352 = vcmask 31744
      %v354 = vsel %vm352, %v349, 0
      %vm356 = vcmask 1041408
      %v358 = vsel %vm356, %v350, 0
      %v361 = vsel %vm356, %v351, 0
      %363 = vmatprep.subr.bf16.mxu0 0
      %364 = vmatpush1.bf16.msra.mxu0 0
      %365 = vmatprep.subr.bf16.mxu0 0
      %366 = vmatpush1.bf16.msra.mxu0 0
      %367 = vmatprep.subr.bf16.mxu0 0
      %368 = vmatpush1.bf16.msra.mxu0 0
      %369 = vmatprep.subr.bf16.mxu0 0
      %370 = vmatpush1.bf16.msra.mxu0 0
      %371 = vmatprep.subr.bf16.mxu0 0
      %372 = vmatpush1.bf16.msra.mxu0 0
      %373 = vmatprep.subr.bf16.mxu0 0
      %374 = vmatpush1.bf16.msra.mxu0 0
      %375 = vmatprep.subr.bf16.mxu0 0
      %376 = vmatpush1.bf16.msra.mxu0 0
      %377 = vmatprep.subr.bf16.mxu0 %v361
      %378 = vmatpush1.bf16.msra.mxu0 %v358
      %379 = vmatprep.subr.bf16.mxu0 0
      %380 = vmatpush2.bf16.msra.mxu0 0
      %381 = vmatprep.subr.bf16.mxu0 0
      %382 = vmatpush2.bf16.msra.mxu0 0
      %383 = vmatprep.subr.bf16.mxu0 0
      %384 = vmatpush2.bf16.msra.mxu0 0
      %385 = vmatprep.subr.bf16.mxu0 0
      %386 = vmatpush2.bf16.msra.mxu0 0
      %387 = vmatprep.subr.bf16.mxu0 0
      %388 = vmatpush2.bf16.msra.mxu0 0
      %389 = vmatprep.subr.bf16.mxu0 0
      %390 = vmatpush2.bf16.msra.mxu0 0
      %391 = vmatprep.subr.bf16.mxu0 0
      %392 = vmatpush2.bf16.msra.mxu0 0
      %393 = vmatprep.subr.bf16.mxu0 0
      %394 = vmatpush2.bf16.msra.mxu0 0
      %395 = vmatprep.mubr.bf16.mxu0 0
      %396 = vmatmul.mubr.bf16.gmra.mxu0 %v354
      %v397 = vpop.f32.mrf.mxu0
      %v398 = vadd.f32 0.0, %v397
      %v399 = vpop.f32.mrf.mxu0
      %v400 = vadd.f32 0.0, %v399
      %v401 = vpop.f32.mrf.mxu0
      %v402 = vpop.f32.mrf.mxu0
      %403 = vdwg.mxu0
      %v404 = vld [vmem:[%s4] sm:$0xff]
      %406 = vset.pattern.permute.xlu0 0
      %407 = vperm.xlu0 %406, %v404
      %v408 = vpop.permute.xlu0 %407
      %v410 = vmul.f32 %v398, %v408
      %v411 = vmul.f32 %v400, %v408
      %v412 = vld [vmem:[%s5] sm:$0xff]
      %414 = vset.pattern.permute.xlu0 0
      %415 = vperm.xlu0 %414, %v412
      %v416 = vpop.permute.xlu0 %415
      %v418 = vadd.f32 %v410, %v416
      %v419 = vadd.f32 %v411, %v416
      %v420 = vmax.f32 %v418, 0.0
      %v421 = vmax.f32 %v419, 0.0
      %422 = vrot.lane.b32.xlu0 %v420, 17
      %v423 = vpop.permute.xlu0 %422
      %424 = vrot.lane.b32.xlu0 %v421, 17
      %v425 = vpop.permute.xlu0 %424
      %vm426 = vcmp.lt.s32.totalorder %v287, 17
      %v427 = vsel %vm426, %v423, %v425
      %v428 = vsel %vm426, %v425, %v423
      %v429 = vsel %vm321, 1, 0
      %v430 = vsel %vm322, 1, 0
      %vm431 = vcmp.eq.s32.totalorder %v429, 1
      %vm432 = vcmp.eq.s32.totalorder %v430, 1
      %v433 = vsel %vm431, %v428, 0.0
      %v434 = vsel %vm432, %v427, 0.0
      %v435 = vld [vmem:[%s6] sm:$0x3]
      %v436 = vpack.c.bf16 %v433, %v433
      %v437 = vpack.c.bf16 %v434, %v434
      %438 = vrot.lane.b32.xlu0 %v420, 16
      %v439 = vpop.permute.xlu0 %438
      %440 = vrot.lane.b32.xlu0 %v421, 16
      %v441 = vpop.permute.xlu0 %440
      %vm442 = vcmp.lt.s32.totalorder %v287, 16
      %v443 = vsel %vm442, %v439, %v441
      %v444 = vsel %vm442, %v441, %v439
      %v445 = vsel %vm313, 1, 0
      %v446 = vsel %vm314, 1, 0
      %vm447 = vcmp.eq.s32.totalorder %v445, 1
      %vm448 = vcmp.eq.s32.totalorder %v446, 1
      %v449 = vsel %vm447, %v444, 0.0
      %v450 = vsel %vm448, %v443, 0.0
      %s451 = scalar_lea.vmem %s6, 2
      %v452 = vld [vmem:[%s451] sm:$0x3]
      %v453 = vpack.c.bf16 %v449, %v449
      %v454 = vpack.c.bf16 %v450, %v450
      %vm455 = vcmask 64512
      %v457 = vsel %vm455, %v452, 0
      %vm459 = vcmask 1043456
      %v461 = vsel %vm459, %v453, 0
      %v464 = vsel %vm459, %v454, 0
      %466 = vmatprep.subr.bf16.mxu0 0
      %467 = vmatpush1.bf16.msra.mxu0 0
      %468 = vmatprep.subr.bf16.mxu0 0
      %469 = vmatpush1.bf16.msra.mxu0 0
      %470 = vmatprep.subr.bf16.mxu0 0
      %471 = vmatpush1.bf16.msra.mxu0 0
      %472 = vmatprep.subr.bf16.mxu0 0
      %473 = vmatpush1.bf16.msra.mxu0 0
      %474 = vmatprep.subr.bf16.mxu0 0
      %475 = vmatpush1.bf16.msra.mxu0 0
      %476 = vmatprep.subr.bf16.mxu0 0
      %477 = vmatpush1.bf16.msra.mxu0 0
      %478 = vmatprep.subr.bf16.mxu0 0
      %479 = vmatpush1.bf16.msra.mxu0 0
      %480 = vmatprep.subr.bf16.mxu0 %v464
      %481 = vmatpush1.bf16.msra.mxu0 %v461
      %482 = vmatprep.subr.bf16.mxu0 0
      %483 = vmatpush2.bf16.msra.mxu0 0
      %484 = vmatprep.subr.bf16.mxu0 0
      %485 = vmatpush2.bf16.msra.mxu0 0
      %486 = vmatprep.subr.bf16.mxu0 0
      %487 = vmatpush2.bf16.msra.mxu0 0
      %488 = vmatprep.subr.bf16.mxu0 0
      %489 = vmatpush2.bf16.msra.mxu0 0
      %490 = vmatprep.subr.bf16.mxu0 0
      %491 = vmatpush2.bf16.msra.mxu0 0
      %492 = vmatprep.subr.bf16.mxu0 0
      %493 = vmatpush2.bf16.msra.mxu0 0
      %494 = vmatprep.subr.bf16.mxu0 0
      %495 = vmatpush2.bf16.msra.mxu0 0
      %496 = vmatprep.subr.bf16.mxu0 0
      %497 = vmatpush2.bf16.msra.mxu0 0
      %498 = vmatprep.mubr.bf16.mxu0 0
      %499 = vmatmul.mubr.bf16.gmra.mxu0 %v457
      %v500 = vpop.f32.mrf.mxu0
      %v501 = vadd.f32 0.0, %v500
      %v502 = vpop.f32.mrf.mxu0
      %v503 = vadd.f32 0.0, %v502
      %v504 = vpop.f32.mrf.mxu0
      %v505 = vpop.f32.mrf.mxu0
      %506 = vdwg.mxu0
      %v508 = vsel %vm455, %v435, 0
      %v511 = vsel %vm459, %v436, 0
      %v514 = vsel %vm459, %v437, 0
      %516 = vmatprep.subr.bf16.mxu0 0
      %517 = vmatpush1.bf16.msra.mxu0 0
      %518 = vmatprep.subr.bf16.mxu0 0
      %519 = vmatpush1.bf16.msra.mxu0 0
      %520 = vmatprep.subr.bf16.mxu0 0
      %521 = vmatpush1.bf16.msra.mxu0 0
      %522 = vmatprep.subr.bf16.mxu0 0
      %523 = vmatpush1.bf16.msra.mxu0 0
      %524 = vmatprep.subr.bf16.mxu0 0
      %525 = vmatpush1.bf16.msra.mxu0 0
      %526 = vmatprep.subr.bf16.mxu0 0
      %527 = vmatpush1.bf16.msra.mxu0 0
      %528 = vmatprep.subr.bf16.mxu0 0
      %529 = vmatpush1.bf16.msra.mxu0 0
      %530 = vmatprep.subr.bf16.mxu0 %v514
      %531 = vmatpush1.bf16.msra.mxu0 %v511
      %532 = vmatprep.subr.bf16.mxu0 0
      %533 = vmatpush2.bf16.msra.mxu0 0
      %534 = vmatprep.subr.bf16.mxu0 0
      %535 = vmatpush2.bf16.msra.mxu0 0
      %536 = vmatprep.subr.bf16.mxu0 0
      %537 = vmatpush2.bf16.msra.mxu0 0
      %538 = vmatprep.subr.bf16.mxu0 0
      %539 = vmatpush2.bf16.msra.mxu0 0
      %540 = vmatprep.subr.bf16.mxu0 0
      %541 = vmatpush2.bf16.msra.mxu0 0
      %542 = vmatprep.subr.bf16.mxu0 0
      %543 = vmatpush2.bf16.msra.mxu0 0
      %544 = vmatprep.subr.bf16.mxu0 0
      %545 = vmatpush2.bf16.msra.mxu0 0
      %546 = vmatprep.subr.bf16.mxu0 0
      %547 = vmatpush2.bf16.msra.mxu0 0
      %548 = vmatprep.mubr.bf16.mxu0 0
      %549 = vmatmul.mubr.bf16.gmra.mxu0 %v508
      %v550 = vpop.f32.mrf.mxu0
      %v551 = vadd.f32 %v501, %v550
      %v552 = vpop.f32.mrf.mxu0
      %v553 = vadd.f32 %v503, %v552
      %v554 = vpop.f32.mrf.mxu0
      %v555 = vpop.f32.mrf.mxu0
      %556 = vdwg.mxu0
      %557 = vrot.lane.b32.xlu0 %v420, 15
      %v558 = vpop.permute.xlu0 %557
      %559 = vrot.lane.b32.xlu0 %v421, 15
      %v560 = vpop.permute.xlu0 %559
      %vm561 = vcmp.lt.s32.totalorder %v287, 15
      %v562 = vsel %vm561, %v558, %v560
      %v563 = vsel %vm561, %v560, %v558
      %v564 = vsel %vm323, 1, 0
      %v565 = vsel %vm324, 1, 0
      %vm566 = vcmp.eq.s32.totalorder %v564, 1
      %vm567 = vcmp.eq.s32.totalorder %v565, 1
      %v568 = vsel %vm566, %v563, 0.0
      %v569 = vsel %vm567, %v562, 0.0
      %s570 = scalar_lea.vmem %s6, 4
      %v571 = vld [vmem:[%s570] sm:$0x3]
      %v572 = vpack.c.bf16 %v568, %v568
      %v573 = vpack.c.bf16 %v569, %v569
      %v575 = vsel %vm455, %v571, 0
      %v578 = vsel %vm459, %v572, 0
      %v581 = vsel %vm459, %v573, 0
      %583 = vmatprep.subr.bf16.mxu0 0
      %584 = vmatpush1.bf16.msra.mxu0 0
      %585 = vmatprep.subr.bf16.mxu0 0
      %586 = vmatpush1.bf16.msra.mxu0 0
      %587 = vmatprep.subr.bf16.mxu0 0
      %588 = vmatpush1.bf16.msra.mxu0 0
      %589 = vmatprep.subr.bf16.mxu0 0
      %590 = vmatpush1.bf16.msra.mxu0 0
      %591 = vmatprep.subr.bf16.mxu0 0
      %592 = vmatpush1.bf16.msra.mxu0 0
      %593 = vmatprep.subr.bf16.mxu0 0
      %594 = vmatpush1.bf16.msra.mxu0 0
      %595 = vmatprep.subr.bf16.mxu0 0
      %596 = vmatpush1.bf16.msra.mxu0 0
      %597 = vmatprep.subr.bf16.mxu0 %v581
      %598 = vmatpush1.bf16.msra.mxu0 %v578
      %599 = vmatprep.subr.bf16.mxu0 0
      %600 = vmatpush2.bf16.msra.mxu0 0
      %601 = vmatprep.subr.bf16.mxu0 0
      %602 = vmatpush2.bf16.msra.mxu0 0
      %603 = vmatprep.subr.bf16.mxu0 0
      %604 = vmatpush2.bf16.msra.mxu0 0
      %605 = vmatprep.subr.bf16.mxu0 0
      %606 = vmatpush2.bf16.msra.mxu0 0
      %607 = vmatprep.subr.bf16.mxu0 0
      %608 = vmatpush2.bf16.msra.mxu0 0
      %609 = vmatprep.subr.bf16.mxu0 0
      %610 = vmatpush2.bf16.msra.mxu0 0
      %611 = vmatprep.subr.bf16.mxu0 0
      %612 = vmatpush2.bf16.msra.mxu0 0
      %613 = vmatprep.subr.bf16.mxu0 0
      %614 = vmatpush2.bf16.msra.mxu0 0
      %615 = vmatprep.mubr.bf16.mxu0 0
      %616 = vmatmul.mubr.bf16.gmra.mxu0 %v575
      %v617 = vpop.f32.mrf.mxu0
      %v618 = vadd.f32 0.0, %v617
      %v619 = vpop.f32.mrf.mxu0
      %v620 = vadd.f32 0.0, %v619
      %v621 = vpop.f32.mrf.mxu0
      %v622 = vpop.f32.mrf.mxu0
      %623 = vdwg.mxu0
      %v624 = vadd.f32 %v551, %v618
      %v625 = vadd.f32 %v553, %v620
      %626 = vrot.lane.b32.xlu0 %v420, 1
      %v627 = vpop.permute.xlu0 %626
      %628 = vrot.lane.b32.xlu0 %v421, 1
      %v629 = vpop.permute.xlu0 %628
      %vm630 = vcmp.lt.s32.totalorder %v287, 1
      %v631 = vsel %vm630, %v627, %v629
      %v632 = vsel %vm630, %v629, %v627
      %v633 = vsel %vm317, 1, 0
      %v634 = vsel %vm318, 1, 0
      %vm635 = vcmp.eq.s32.totalorder %v633, 1
      %vm636 = vcmp.eq.s32.totalorder %v634, 1
      %v637 = vsel %vm635, %v632, 0.0
      %v638 = vsel %vm636, %v631, 0.0
      %s639 = scalar_lea.vmem %s6, 6
      %v640 = vld [vmem:[%s639] sm:$0x3]
      %v641 = vpack.c.bf16 %v637, %v637
      %v642 = vpack.c.bf16 %v638, %v638
      %v644 = vsel %vm455, %v640, 0
      %v647 = vsel %vm459, %v641, 0
      %v650 = vsel %vm459, %v642, 0
      %652 = vmatprep.subr.bf16.mxu0 0
      %653 = vmatpush1.bf16.msra.mxu0 0
      %654 = vmatprep.subr.bf16.mxu0 0
      %655 = vmatpush1.bf16.msra.mxu0 0
      %656 = vmatprep.subr.bf16.mxu0 0
      %657 = vmatpush1.bf16.msra.mxu0 0
      %658 = vmatprep.subr.bf16.mxu0 0
      %659 = vmatpush1.bf16.msra.mxu0 0
      %660 = vmatprep.subr.bf16.mxu0 0
      %661 = vmatpush1.bf16.msra.mxu0 0
      %662 = vmatprep.subr.bf16.mxu0 0
      %663 = vmatpush1.bf16.msra.mxu0 0
      %664 = vmatprep.subr.bf16.mxu0 0
      %665 = vmatpush1.bf16.msra.mxu0 0
      %666 = vmatprep.subr.bf16.mxu0 %v650
      %667 = vmatpush1.bf16.msra.mxu0 %v647
      %668 = vmatprep.subr.bf16.mxu0 0
      %669 = vmatpush2.bf16.msra.mxu0 0
      %670 = vmatprep.subr.bf16.mxu0 0
      %671 = vmatpush2.bf16.msra.mxu0 0
      %672 = vmatprep.subr.bf16.mxu0 0
      %673 = vmatpush2.bf16.msra.mxu0 0
      %674 = vmatprep.subr.bf16.mxu0 0
      %675 = vmatpush2.bf16.msra.mxu0 0
      %676 = vmatprep.subr.bf16.mxu0 0
      %677 = vmatpush2.bf16.msra.mxu0 0
      %678 = vmatprep.subr.bf16.mxu0 0
      %679 = vmatpush2.bf16.msra.mxu0 0
      %680 = vmatprep.subr.bf16.mxu0 0
      %681 = vmatpush2.bf16.msra.mxu0 0
      %682 = vmatprep.subr.bf16.mxu0 0
      %683 = vmatpush2.bf16.msra.mxu0 0
      %684 = vmatprep.mubr.bf16.mxu0 0
      %685 = vmatmul.mubr.bf16.gmra.mxu0 %v644
      %v686 = vpop.f32.mrf.mxu0
      %v687 = vadd.f32 0.0, %v686
      %v688 = vpop.f32.mrf.mxu0
      %v689 = vadd.f32 0.0, %v688
      %v690 = vpop.f32.mrf.mxu0
      %v691 = vpop.f32.mrf.mxu0
      %692 = vdwg.mxu0
      %v693 = vadd.f32 %v624, %v687
      %v694 = vadd.f32 %v625, %v689
      %s695 = scalar_lea.vmem %s6, 8
      %v696 = vld [vmem:[%s695] sm:$0x3]
      %v697 = vpack.c.bf16 %v420, %v420
      %v698 = vpack.c.bf16 %v421, %v421
      %v700 = vsel %vm455, %v696, 0
      %v703 = vsel %vm459, %v697, 0
      %v706 = vsel %vm459, %v698, 0
      %708 = vmatprep.subr.bf16.mxu0 0
      %709 = vmatpush1.bf16.msra.mxu0 0
      %710 = vmatprep.subr.bf16.mxu0 0
      %711 = vmatpush1.bf16.msra.mxu0 0
      %712 = vmatprep.subr.bf16.mxu0 0
      %713 = vmatpush1.bf16.msra.mxu0 0
      %714 = vmatprep.subr.bf16.mxu0 0
      %715 = vmatpush1.bf16.msra.mxu0 0
      %716 = vmatprep.subr.bf16.mxu0 0
      %717 = vmatpush1.bf16.msra.mxu0 0
      %718 = vmatprep.subr.bf16.mxu0 0
      %719 = vmatpush1.bf16.msra.mxu0 0
      %720 = vmatprep.subr.bf16.mxu0 0
      %721 = vmatpush1.bf16.msra.mxu0 0
      %722 = vmatprep.subr.bf16.mxu0 %v706
      %723 = vmatpush1.bf16.msra.mxu0 %v703
      %724 = vmatprep.subr.bf16.mxu0 0
      %725 = vmatpush2.bf16.msra.mxu0 0
      %726 = vmatprep.subr.bf16.mxu0 0
      %727 = vmatpush2.bf16.msra.mxu0 0
      %728 = vmatprep.subr.bf16.mxu0 0
      %729 = vmatpush2.bf16.msra.mxu0 0
      %730 = vmatprep.subr.bf16.mxu0 0
      %731 = vmatpush2.bf16.msra.mxu0 0
      %732 = vmatprep.subr.bf16.mxu0 0
      %733 = vmatpush2.bf16.msra.mxu0 0
      %734 = vmatprep.subr.bf16.mxu0 0
      %735 = vmatpush2.bf16.msra.mxu0 0
      %736 = vmatprep.subr.bf16.mxu0 0
      %737 = vmatpush2.bf16.msra.mxu0 0
      %738 = vmatprep.subr.bf16.mxu0 0
      %739 = vmatpush2.bf16.msra.mxu0 0
      %740 = vmatprep.mubr.bf16.mxu0 0
      %741 = vmatmul.mubr.bf16.gmra.mxu0 %v700
      %v742 = vpop.f32.mrf.mxu0
      %v743 = vadd.f32 0.0, %v742
      %v744 = vpop.f32.mrf.mxu0
      %v745 = vadd.f32 0.0, %v744
      %v746 = vpop.f32.mrf.mxu0
      %v747 = vpop.f32.mrf.mxu0
      %748 = vdwg.mxu0
      %v749 = vadd.f32 %v693, %v743
      %v750 = vadd.f32 %v694, %v745
      %751 = vrot.lane.b32.xlu0 %v420, 127
      %v752 = vpop.permute.xlu0 %751
      %753 = vrot.lane.b32.xlu0 %v421, 127
      %v754 = vpop.permute.xlu0 %753
      %vm755 = vcmp.lt.s32.totalorder %v287, 127
      %v756 = vsel %vm755, %v752, %v754
      %v757 = vsel %vm755, %v754, %v752
      %v758 = vsel %vm319, 1, 0
      %v759 = vsel %vm320, 1, 0
      %vm760 = vcmp.eq.s32.totalorder %v758, 1
      %vm761 = vcmp.eq.s32.totalorder %v759, 1
      %v762 = vsel %vm760, %v756, 0.0
      %v763 = vsel %vm761, %v757, 0.0
      %s764 = scalar_lea.vmem %s6, 10
      %v765 = vld [vmem:[%s764] sm:$0x3]
      %v766 = vpack.c.bf16 %v762, %v762
      %v767 = vpack.c.bf16 %v763, %v763
      %v769 = vsel %vm455, %v765, 0
      %v772 = vsel %vm459, %v766, 0
      %v775 = vsel %vm459, %v767, 0
      %777 = vmatprep.subr.bf16.mxu0 0
      %778 = vmatpush1.bf16.msra.mxu0 0
      %779 = vmatprep.subr.bf16.mxu0 0
      %780 = vmatpush1.bf16.msra.mxu0 0
      %781 = vmatprep.subr.bf16.mxu0 0
      %782 = vmatpush1.bf16.msra.mxu0 0
      %783 = vmatprep.subr.bf16.mxu0 0
      %784 = vmatpush1.bf16.msra.mxu0 0
      %785 = vmatprep.subr.bf16.mxu0 0
      %786 = vmatpush1.bf16.msra.mxu0 0
      %787 = vmatprep.subr.bf16.mxu0 0
      %788 = vmatpush1.bf16.msra.mxu0 0
      %789 = vmatprep.subr.bf16.mxu0 0
      %790 = vmatpush1.bf16.msra.mxu0 0
      %791 = vmatprep.subr.bf16.mxu0 %v775
      %792 = vmatpush1.bf16.msra.mxu0 %v772
      %793 = vmatprep.subr.bf16.mxu0 0
      %794 = vmatpush2.bf16.msra.mxu0 0
      %795 = vmatprep.subr.bf16.mxu0 0
      %796 = vmatpush2.bf16.msra.mxu0 0
      %797 = vmatprep.subr.bf16.mxu0 0
      %798 = vmatpush2.bf16.msra.mxu0 0
      %799 = vmatprep.subr.bf16.mxu0 0
      %800 = vmatpush2.bf16.msra.mxu0 0
      %801 = vmatprep.subr.bf16.mxu0 0
      %802 = vmatpush2.bf16.msra.mxu0 0
      %803 = vmatprep.subr.bf16.mxu0 0
      %804 = vmatpush2.bf16.msra.mxu0 0
      %805 = vmatprep.subr.bf16.mxu0 0
      %806 = vmatpush2.bf16.msra.mxu0 0
      %807 = vmatprep.subr.bf16.mxu0 0
      %808 = vmatpush2.bf16.msra.mxu0 0
      %809 = vmatprep.mubr.bf16.mxu0 0
      %810 = vmatmul.mubr.bf16.gmra.mxu0 %v769
      %v811 = vpop.f32.mrf.mxu0
      %v812 = vadd.f32 0.0, %v811
      %v813 = vpop.f32.mrf.mxu0
      %v814 = vadd.f32 0.0, %v813
      %v815 = vpop.f32.mrf.mxu0
      %v816 = vpop.f32.mrf.mxu0
      %817 = vdwg.mxu0
      %v818 = vadd.f32 %v749, %v812
      %v819 = vadd.f32 %v750, %v814
      %820 = vrot.lane.b32.xlu0 %v420, 113
      %v821 = vpop.permute.xlu0 %820
      %822 = vrot.lane.b32.xlu0 %v421, 113
      %v823 = vpop.permute.xlu0 %822
      %vm824 = vcmp.lt.s32.totalorder %v287, 113
      %v825 = vsel %vm824, %v821, %v823
      %v826 = vsel %vm824, %v823, %v821
      %v827 = vsel %vm325, 1, 0
      %v828 = vsel %vm326, 1, 0
      %vm829 = vcmp.eq.s32.totalorder %v827, 1
      %vm830 = vcmp.eq.s32.totalorder %v828, 1
      %v831 = vsel %vm829, %v825, 0.0
      %v832 = vsel %vm830, %v826, 0.0
      %s833 = scalar_lea.vmem %s6, 12
      %v834 = vld [vmem:[%s833] sm:$0x3]
      %v835 = vpack.c.bf16 %v831, %v831
      %v836 = vpack.c.bf16 %v832, %v832
      %v838 = vsel %vm455, %v834, 0
      %v841 = vsel %vm459, %v835, 0
      %v844 = vsel %vm459, %v836, 0
      %846 = vmatprep.subr.bf16.mxu0 0
      %847 = vmatpush1.bf16.msra.mxu0 0
      %848 = vmatprep.subr.bf16.mxu0 0
      %849 = vmatpush1.bf16.msra.mxu0 0
      %850 = vmatprep.subr.bf16.mxu0 0
      %851 = vmatpush1.bf16.msra.mxu0 0
      %852 = vmatprep.subr.bf16.mxu0 0
      %853 = vmatpush1.bf16.msra.mxu0 0
      %854 = vmatprep.subr.bf16.mxu0 0
      %855 = vmatpush1.bf16.msra.mxu0 0
      %856 = vmatprep.subr.bf16.mxu0 0
      %857 = vmatpush1.bf16.msra.mxu0 0
      %858 = vmatprep.subr.bf16.mxu0 0
      %859 = vmatpush1.bf16.msra.mxu0 0
      %860 = vmatprep.subr.bf16.mxu0 %v844
      %861 = vmatpush1.bf16.msra.mxu0 %v841
      %862 = vmatprep.subr.bf16.mxu0 0
      %863 = vmatpush2.bf16.msra.mxu0 0
      %864 = vmatprep.subr.bf16.mxu0 0
      %865 = vmatpush2.bf16.msra.mxu0 0
      %866 = vmatprep.subr.bf16.mxu0 0
      %867 = vmatpush2.bf16.msra.mxu0 0
      %868 = vmatprep.subr.bf16.mxu0 0
      %869 = vmatpush2.bf16.msra.mxu0 0
      %870 = vmatprep.subr.bf16.mxu0 0
      %871 = vmatpush2.bf16.msra.mxu0 0
      %872 = vmatprep.subr.bf16.mxu0 0
      %873 = vmatpush2.bf16.msra.mxu0 0
      %874 = vmatprep.subr.bf16.mxu0 0
      %875 = vmatpush2.bf16.msra.mxu0 0
      %876 = vmatprep.subr.bf16.mxu0 0
      %877 = vmatpush2.bf16.msra.mxu0 0
      %878 = vmatprep.mubr.bf16.mxu0 0
      %879 = vmatmul.mubr.bf16.gmra.mxu0 %v838
      %v880 = vpop.f32.mrf.mxu0
      %v881 = vadd.f32 0.0, %v880
      %v882 = vpop.f32.mrf.mxu0
      %v883 = vadd.f32 0.0, %v882
      %v884 = vpop.f32.mrf.mxu0
      %v885 = vpop.f32.mrf.mxu0
      %886 = vdwg.mxu0
      %v887 = vadd.f32 %v818, %v881
      %v888 = vadd.f32 %v819, %v883
      %889 = vrot.lane.b32.xlu0 %v420, 112
      %v890 = vpop.permute.xlu0 %889
      %891 = vrot.lane.b32.xlu0 %v421, 112
      %v892 = vpop.permute.xlu0 %891
      %vm893 = vcmp.lt.s32.totalorder %v287, 112
      %v894 = vsel %vm893, %v890, %v892
      %v895 = vsel %vm893, %v892, %v890
      %v896 = vsel %vm315, 1, 0
      %v897 = vsel %vm316, 1, 0
      %vm898 = vcmp.eq.s32.totalorder %v896, 1
      %vm899 = vcmp.eq.s32.totalorder %v897, 1
      %v900 = vsel %vm898, %v894, 0.0
      %v901 = vsel %vm899, %v895, 0.0
      %s902 = scalar_lea.vmem %s6, 14
      %v903 = vld [vmem:[%s902] sm:$0x3]
      %v904 = vpack.c.bf16 %v900, %v900
      %v905 = vpack.c.bf16 %v901, %v901
      %v907 = vsel %vm455, %v903, 0
      %v910 = vsel %vm459, %v904, 0
      %v913 = vsel %vm459, %v905, 0
      %915 = vmatprep.subr.bf16.mxu0 0
      %916 = vmatpush1.bf16.msra.mxu0 0
      %917 = vmatprep.subr.bf16.mxu0 0
      %918 = vmatpush1.bf16.msra.mxu0 0
      %919 = vmatprep.subr.bf16.mxu0 0
      %920 = vmatpush1.bf16.msra.mxu0 0
      %921 = vmatprep.subr.bf16.mxu0 0
      %922 = vmatpush1.bf16.msra.mxu0 0
      %923 = vmatprep.subr.bf16.mxu0 0
      %924 = vmatpush1.bf16.msra.mxu0 0
      %925 = vmatprep.subr.bf16.mxu0 0
      %926 = vmatpush1.bf16.msra.mxu0 0
      %927 = vmatprep.subr.bf16.mxu0 0
      %928 = vmatpush1.bf16.msra.mxu0 0
      %929 = vmatprep.subr.bf16.mxu0 %v913
      %930 = vmatpush1.bf16.msra.mxu0 %v910
      %931 = vmatprep.subr.bf16.mxu0 0
      %932 = vmatpush2.bf16.msra.mxu0 0
      %933 = vmatprep.subr.bf16.mxu0 0
      %934 = vmatpush2.bf16.msra.mxu0 0
      %935 = vmatprep.subr.bf16.mxu0 0
      %936 = vmatpush2.bf16.msra.mxu0 0
      %937 = vmatprep.subr.bf16.mxu0 0
      %938 = vmatpush2.bf16.msra.mxu0 0
      %939 = vmatprep.subr.bf16.mxu0 0
      %940 = vmatpush2.bf16.msra.mxu0 0
      %941 = vmatprep.subr.bf16.mxu0 0
      %942 = vmatpush2.bf16.msra.mxu0 0
      %943 = vmatprep.subr.bf16.mxu0 0
      %944 = vmatpush2.bf16.msra.mxu0 0
      %945 = vmatprep.subr.bf16.mxu0 0
      %946 = vmatpush2.bf16.msra.mxu0 0
      %947 = vmatprep.mubr.bf16.mxu0 0
      %948 = vmatmul.mubr.bf16.gmra.mxu0 %v907
      %v949 = vpop.f32.mrf.mxu0
      %v950 = vadd.f32 0.0, %v949
      %v951 = vpop.f32.mrf.mxu0
      %v952 = vadd.f32 0.0, %v951
      %v953 = vpop.f32.mrf.mxu0
      %v954 = vpop.f32.mrf.mxu0
      %955 = vdwg.mxu0
      %v956 = vadd.f32 %v887, %v950
      %v957 = vadd.f32 %v888, %v952
      %958 = vrot.lane.b32.xlu0 %v420, 111
      %v959 = vpop.permute.xlu0 %958
      %960 = vrot.lane.b32.xlu0 %v421, 111
      %v961 = vpop.permute.xlu0 %960
      %vm962 = vcmp.lt.s32.totalorder %v287, 111
      %v963 = vsel %vm962, %v959, %v961
      %v964 = vsel %vm962, %v961, %v959
      %v965 = vsel %vm327, 1, 0
      %v966 = vsel %vm328, 1, 0
      %vm967 = vcmp.eq.s32.totalorder %v965, 1
      %vm968 = vcmp.eq.s32.totalorder %v966, 1
      %v969 = vsel %vm967, %v963, 0.0
      %v970 = vsel %vm968, %v964, 0.0
      %s971 = scalar_lea.vmem %s6, 16
      %v972 = vld [vmem:[%s971] sm:$0x3]
      %v973 = vpack.c.bf16 %v969, %v969
      %v974 = vpack.c.bf16 %v970, %v970
      %v976 = vsel %vm455, %v972, 0
      %v979 = vsel %vm459, %v973, 0
      %v982 = vsel %vm459, %v974, 0
      %984 = vmatprep.subr.bf16.mxu0 0
      %985 = vmatpush1.bf16.msra.mxu0 0
      %986 = vmatprep.subr.bf16.mxu0 0
      %987 = vmatpush1.bf16.msra.mxu0 0
      %988 = vmatprep.subr.bf16.mxu0 0
      %989 = vmatpush1.bf16.msra.mxu0 0
      %990 = vmatprep.subr.bf16.mxu0 0
      %991 = vmatpush1.bf16.msra.mxu0 0
      %992 = vmatprep.subr.bf16.mxu0 0
      %993 = vmatpush1.bf16.msra.mxu0 0
      %994 = vmatprep.subr.bf16.mxu0 0
      %995 = vmatpush1.bf16.msra.mxu0 0
      %996 = vmatprep.subr.bf16.mxu0 0
      %997 = vmatpush1.bf16.msra.mxu0 0
      %998 = vmatprep.subr.bf16.mxu0 %v982
      %999 = vmatpush1.bf16.msra.mxu0 %v979
      %1000 = vmatprep.subr.bf16.mxu0 0
      %1001 = vmatpush2.bf16.msra.mxu0 0
      %1002 = vmatprep.subr.bf16.mxu0 0
      %1003 = vmatpush2.bf16.msra.mxu0 0
      %1004 = vmatprep.subr.bf16.mxu0 0
      %1005 = vmatpush2.bf16.msra.mxu0 0
      %1006 = vmatprep.subr.bf16.mxu0 0
      %1007 = vmatpush2.bf16.msra.mxu0 0
      %1008 = vmatprep.subr.bf16.mxu0 0
      %1009 = vmatpush2.bf16.msra.mxu0 0
      %1010 = vmatprep.subr.bf16.mxu0 0
      %1011 = vmatpush2.bf16.msra.mxu0 0
      %1012 = vmatprep.subr.bf16.mxu0 0
      %1013 = vmatpush2.bf16.msra.mxu0 0
      %1014 = vmatprep.subr.bf16.mxu0 0
      %1015 = vmatpush2.bf16.msra.mxu0 0
      %1016 = vmatprep.mubr.bf16.mxu0 0
      %1017 = vmatmul.mubr.bf16.gmra.mxu0 %v976
      %v1018 = vpop.f32.mrf.mxu0
      %v1019 = vadd.f32 0.0, %v1018
      %v1020 = vpop.f32.mrf.mxu0
      %v1021 = vadd.f32 0.0, %v1020
      %v1022 = vpop.f32.mrf.mxu0
      %v1023 = vpop.f32.mrf.mxu0
      %1024 = vdwg.mxu0
      %v1025 = vadd.f32 %v956, %v1019
      %v1026 = vadd.f32 %v957, %v1021
      %v1029 = vrot.slane %v1025, 4
      %v1030 = vrot.slane %v1026, 4
      %1033 = vst [vmem:[%s278] sm:$0xf0] %v1029
      %1034 = vst [vmem:[%s278 + $0x8] sm:$0xf0] %v1030
      %v1035 = vld [vmem:[%s278] sm:$0xff]
      %v1036 = vld [vmem:[%s278 + $0x8] sm:$0xff]
      %s1037 = scalar_lea.vmem %s1, 16
      %v1038 = vld [vmem:[%s1037] sm:$0xff]
      %1040 = vset.pattern.permute.xlu0 0
      %1041 = vperm.xlu0 %1040, %v1038
      %v1042 = vpop.permute.xlu0 %1041
      %v1044 = vmul.f32 %v1035, %v1042
      %v1045 = vmul.f32 %v1036, %v1042
      %s1046 = scalar_lea.vmem %s2, 16
      %v1047 = vld [vmem:[%s1046] sm:$0xff]
      %1049 = vset.pattern.permute.xlu0 0
      %1050 = vperm.xlu0 %1049, %v1047
      %v1051 = vpop.permute.xlu0 %1050
      %v1053 = vadd.f32 %v1044, %v1051
      %v1054 = vadd.f32 %v1045, %v1051
      %v1055 = vmax.f32 %v1053, 0.0
      %v1056 = vmax.f32 %v1054, 0.0
      %s1057 = scalar_lea.vmem %s3, 4
      %v1058 = vld [vmem:[%s1057] sm:$0xf]
      %v1059 = vpack.c.bf16 %v1055, %v1055
      %v1060 = vpack.c.bf16 %v1056, %v1056
      %v1062 = vsel %vm455, %v1058, 0
      %v1065 = vsel %vm459, %v1059, 0
      %v1068 = vsel %vm459, %v1060, 0
      %1070 = vmatprep.subr.bf16.mxu0 0
      %1071 = vmatpush1.bf16.msra.mxu0 0
      %1072 = vmatprep.subr.bf16.mxu0 0
      %1073 = vmatpush1.bf16.msra.mxu0 0
      %1074 = vmatprep.subr.bf16.mxu0 0
      %1075 = vmatpush1.bf16.msra.mxu0 0
      %1076 = vmatprep.subr.bf16.mxu0 0
      %1077 = vmatpush1.bf16.msra.mxu0 0
      %1078 = vmatprep.subr.bf16.mxu0 0
      %1079 = vmatpush1.bf16.msra.mxu0 0
      %1080 = vmatprep.subr.bf16.mxu0 0
      %1081 = vmatpush1.bf16.msra.mxu0 0
      %1082 = vmatprep.subr.bf16.mxu0 0
      %1083 = vmatpush1.bf16.msra.mxu0 0
      %1084 = vmatprep.subr.bf16.mxu0 %v1068
      %1085 = vmatpush1.bf16.msra.mxu0 %v1065
      %1086 = vmatprep.subr.bf16.mxu0 0
      %1087 = vmatpush2.bf16.msra.mxu0 0
      %1088 = vmatprep.subr.bf16.mxu0 0
      %1089 = vmatpush2.bf16.msra.mxu0 0
      %1090 = vmatprep.subr.bf16.mxu0 0
      %1091 = vmatpush2.bf16.msra.mxu0 0
      %1092 = vmatprep.subr.bf16.mxu0 0
      %1093 = vmatpush2.bf16.msra.mxu0 0
      %1094 = vmatprep.subr.bf16.mxu0 0
      %1095 = vmatpush2.bf16.msra.mxu0 0
      %1096 = vmatprep.subr.bf16.mxu0 0
      %1097 = vmatpush2.bf16.msra.mxu0 0
      %1098 = vmatprep.subr.bf16.mxu0 0
      %1099 = vmatpush2.bf16.msra.mxu0 0
      %1100 = vmatprep.subr.bf16.mxu0 0
      %1101 = vmatpush2.bf16.msra.mxu0 0
      %1102 = vmatprep.mubr.bf16.mxu0 0
      %1103 = vmatmul.mubr.bf16.gmra.mxu0 %v1062
      %v1104 = vpop.f32.mrf.mxu0
      %v1105 = vadd.f32 0.0, %v1104
      %v1106 = vpop.f32.mrf.mxu0
      %v1107 = vadd.f32 0.0, %v1106
      %v1108 = vpop.f32.mrf.mxu0
      %v1109 = vpop.f32.mrf.mxu0
      %1110 = vdwg.mxu0
      %s1111 = scalar_lea.vmem %s4, 8
      %v1112 = vld [vmem:[%s1111] sm:$0xff]
      %1114 = vset.pattern.permute.xlu0 0
      %1115 = vperm.xlu0 %1114, %v1112
      %v1116 = vpop.permute.xlu0 %1115
      %v1118 = vmul.f32 %v1105, %v1116
      %v1119 = vmul.f32 %v1107, %v1116
      %s1120 = scalar_lea.vmem %s5, 8
      %v1121 = vld [vmem:[%s1120] sm:$0xff]
      %1123 = vset.pattern.permute.xlu0 0
      %1124 = vperm.xlu0 %1123, %v1121
      %v1125 = vpop.permute.xlu0 %1124
      %v1127 = vadd.f32 %v1118, %v1125
      %v1128 = vadd.f32 %v1119, %v1125
      %v1129 = vmax.f32 %v1127, 0.0
      %v1130 = vmax.f32 %v1128, 0.0
      %1131 = vrot.lane.b32.xlu0 %v1129, 17
      %v1132 = vpop.permute.xlu0 %1131
      %1133 = vrot.lane.b32.xlu0 %v1130, 17
      %v1134 = vpop.permute.xlu0 %1133
      %v1135 = vsel %vm426, %v1132, %v1134
      %v1136 = vsel %vm426, %v1134, %v1132
      %v1137 = vsel %vm431, %v1136, 0.0
      %v1138 = vsel %vm432, %v1135, 0.0
      %s1139 = scalar_lea.vmem %s6, 18
      %v1140 = vld [vmem:[%s1139] sm:$0x3]
      %v1141 = vpack.c.bf16 %v1137, %v1137
      %v1142 = vpack.c.bf16 %v1138, %v1138
      %1143 = vrot.lane.b32.xlu0 %v1129, 16
      %v1144 = vpop.permute.xlu0 %1143
      %1145 = vrot.lane.b32.xlu0 %v1130, 16
      %v1146 = vpop.permute.xlu0 %1145
      %v1147 = vsel %vm442, %v1144, %v1146
      %v1148 = vsel %vm442, %v1146, %v1144
      %v1149 = vsel %vm447, %v1148, 0.0
      %v1150 = vsel %vm448, %v1147, 0.0
      %s1151 = scalar_lea.vmem %s6, 20
      %v1152 = vld [vmem:[%s1151] sm:$0x3]
      %v1153 = vpack.c.bf16 %v1149, %v1149
      %v1154 = vpack.c.bf16 %v1150, %v1150
      %v1156 = vsel %vm455, %v1152, 0
      %v1159 = vsel %vm459, %v1153, 0
      %v1162 = vsel %vm459, %v1154, 0
      %1164 = vmatprep.subr.bf16.mxu0 0
      %1165 = vmatpush1.bf16.msra.mxu0 0
      %1166 = vmatprep.subr.bf16.mxu0 0
      %1167 = vmatpush1.bf16.msra.mxu0 0
      %1168 = vmatprep.subr.bf16.mxu0 0
      %1169 = vmatpush1.bf16.msra.mxu0 0
      %1170 = vmatprep.subr.bf16.mxu0 0
      %1171 = vmatpush1.bf16.msra.mxu0 0
      %1172 = vmatprep.subr.bf16.mxu0 0
      %1173 = vmatpush1.bf16.msra.mxu0 0
      %1174 = vmatprep.subr.bf16.mxu0 0
      %1175 = vmatpush1.bf16.msra.mxu0 0
      %1176 = vmatprep.subr.bf16.mxu0 0
      %1177 = vmatpush1.bf16.msra.mxu0 0
      %1178 = vmatprep.subr.bf16.mxu0 %v1162
      %1179 = vmatpush1.bf16.msra.mxu0 %v1159
      %1180 = vmatprep.subr.bf16.mxu0 0
      %1181 = vmatpush2.bf16.msra.mxu0 0
      %1182 = vmatprep.subr.bf16.mxu0 0
      %1183 = vmatpush2.bf16.msra.mxu0 0
      %1184 = vmatprep.subr.bf16.mxu0 0
      %1185 = vmatpush2.bf16.msra.mxu0 0
      %1186 = vmatprep.subr.bf16.mxu0 0
      %1187 = vmatpush2.bf16.msra.mxu0 0
      %1188 = vmatprep.subr.bf16.mxu0 0
      %1189 = vmatpush2.bf16.msra.mxu0 0
      %1190 = vmatprep.subr.bf16.mxu0 0
      %1191 = vmatpush2.bf16.msra.mxu0 0
      %1192 = vmatprep.subr.bf16.mxu0 0
      %1193 = vmatpush2.bf16.msra.mxu0 0
      %1194 = vmatprep.subr.bf16.mxu0 0
      %1195 = vmatpush2.bf16.msra.mxu0 0
      %1196 = vmatprep.mubr.bf16.mxu0 0
      %1197 = vmatmul.mubr.bf16.gmra.mxu0 %v1156
      %v1198 = vpop.f32.mrf.mxu0
      %v1199 = vadd.f32 0.0, %v1198
      %v1200 = vpop.f32.mrf.mxu0
      %v1201 = vadd.f32 0.0, %v1200
      %v1202 = vpop.f32.mrf.mxu0
      %v1203 = vpop.f32.mrf.mxu0
      %1204 = vdwg.mxu0
      %v1206 = vsel %vm455, %v1140, 0
      %v1209 = vsel %vm459, %v1141, 0
      %v1212 = vsel %vm459, %v1142, 0
      %1214 = vmatprep.subr.bf16.mxu0 0
      %1215 = vmatpush1.bf16.msra.mxu0 0
      %1216 = vmatprep.subr.bf16.mxu0 0
      %1217 = vmatpush1.bf16.msra.mxu0 0
      %1218 = vmatprep.subr.bf16.mxu0 0
      %1219 = vmatpush1.bf16.msra.mxu0 0
      %1220 = vmatprep.subr.bf16.mxu0 0
      %1221 = vmatpush1.bf16.msra.mxu0 0
      %1222 = vmatprep.subr.bf16.mxu0 0
      %1223 = vmatpush1.bf16.msra.mxu0 0
      %1224 = vmatprep.subr.bf16.mxu0 0
      %1225 = vmatpush1.bf16.msra.mxu0 0
      %1226 = vmatprep.subr.bf16.mxu0 0
      %1227 = vmatpush1.bf16.msra.mxu0 0
      %1228 = vmatprep.subr.bf16.mxu0 %v1212
      %1229 = vmatpush1.bf16.msra.mxu0 %v1209
      %1230 = vmatprep.subr.bf16.mxu0 0
      %1231 = vmatpush2.bf16.msra.mxu0 0
      %1232 = vmatprep.subr.bf16.mxu0 0
      %1233 = vmatpush2.bf16.msra.mxu0 0
      %1234 = vmatprep.subr.bf16.mxu0 0
      %1235 = vmatpush2.bf16.msra.mxu0 0
      %1236 = vmatprep.subr.bf16.mxu0 0
      %1237 = vmatpush2.bf16.msra.mxu0 0
      %1238 = vmatprep.subr.bf16.mxu0 0
      %1239 = vmatpush2.bf16.msra.mxu0 0
      %1240 = vmatprep.subr.bf16.mxu0 0
      %1241 = vmatpush2.bf16.msra.mxu0 0
      %1242 = vmatprep.subr.bf16.mxu0 0
      %1243 = vmatpush2.bf16.msra.mxu0 0
      %1244 = vmatprep.subr.bf16.mxu0 0
      %1245 = vmatpush2.bf16.msra.mxu0 0
      %1246 = vmatprep.mubr.bf16.mxu0 0
      %1247 = vmatmul.mubr.bf16.gmra.mxu0 %v1206
      %v1248 = vpop.f32.mrf.mxu0
      %v1249 = vadd.f32 %v1199, %v1248
      %v1250 = vpop.f32.mrf.mxu0
      %v1251 = vadd.f32 %v1201, %v1250
      %v1252 = vpop.f32.mrf.mxu0
      %v1253 = vpop.f32.mrf.mxu0
      %1254 = vdwg.mxu0
      %1255 = vrot.lane.b32.xlu0 %v1129, 15
      %v1256 = vpop.permute.xlu0 %1255
      %1257 = vrot.lane.b32.xlu0 %v1130, 15
      %v1258 = vpop.permute.xlu0 %1257
      %v1259 = vsel %vm561, %v1256, %v1258
      %v1260 = vsel %vm561, %v1258, %v1256
      %v1261 = vsel %vm566, %v1260, 0.0
      %v1262 = vsel %vm567, %v1259, 0.0
      %s1263 = scalar_lea.vmem %s6, 22
      %v1264 = vld [vmem:[%s1263] sm:$0x3]
      %v1265 = vpack.c.bf16 %v1261, %v1261
      %v1266 = vpack.c.bf16 %v1262, %v1262
      %v1268 = vsel %vm455, %v1264, 0
      %v1271 = vsel %vm459, %v1265, 0
      %v1274 = vsel %vm459, %v1266, 0
      %1276 = vmatprep.subr.bf16.mxu0 0
      %1277 = vmatpush1.bf16.msra.mxu0 0
      %1278 = vmatprep.subr.bf16.mxu0 0
      %1279 = vmatpush1.bf16.msra.mxu0 0
      %1280 = vmatprep.subr.bf16.mxu0 0
      %1281 = vmatpush1.bf16.msra.mxu0 0
      %1282 = vmatprep.subr.bf16.mxu0 0
      %1283 = vmatpush1.bf16.msra.mxu0 0
      %1284 = vmatprep.subr.bf16.mxu0 0
      %1285 = vmatpush1.bf16.msra.mxu0 0
      %1286 = vmatprep.subr.bf16.mxu0 0
      %1287 = vmatpush1.bf16.msra.mxu0 0
      %1288 = vmatprep.subr.bf16.mxu0 0
      %1289 = vmatpush1.bf16.msra.mxu0 0
      %1290 = vmatprep.subr.bf16.mxu0 %v1274
      %1291 = vmatpush1.bf16.msra.mxu0 %v1271
      %1292 = vmatprep.subr.bf16.mxu0 0
      %1293 = vmatpush2.bf16.msra.mxu0 0
      %1294 = vmatprep.subr.bf16.mxu0 0
      %1295 = vmatpush2.bf16.msra.mxu0 0
      %1296 = vmatprep.subr.bf16.mxu0 0
      %1297 = vmatpush2.bf16.msra.mxu0 0
      %1298 = vmatprep.subr.bf16.mxu0 0
      %1299 = vmatpush2.bf16.msra.mxu0 0
      %1300 = vmatprep.subr.bf16.mxu0 0
      %1301 = vmatpush2.bf16.msra.mxu0 0
      %1302 = vmatprep.subr.bf16.mxu0 0
      %1303 = vmatpush2.bf16.msra.mxu0 0
      %1304 = vmatprep.subr.bf16.mxu0 0
      %1305 = vmatpush2.bf16.msra.mxu0 0
      %1306 = vmatprep.subr.bf16.mxu0 0
      %1307 = vmatpush2.bf16.msra.mxu0 0
      %1308 = vmatprep.mubr.bf16.mxu0 0
      %1309 = vmatmul.mubr.bf16.gmra.mxu0 %v1268
      %v1310 = vpop.f32.mrf.mxu0
      %v1311 = vadd.f32 0.0, %v1310
      %v1312 = vpop.f32.mrf.mxu0
      %v1313 = vadd.f32 0.0, %v1312
      %v1314 = vpop.f32.mrf.mxu0
      %v1315 = vpop.f32.mrf.mxu0
      %1316 = vdwg.mxu0
      %v1317 = vadd.f32 %v1249, %v1311
      %v1318 = vadd.f32 %v1251, %v1313
      %1319 = vrot.lane.b32.xlu0 %v1129, 1
      %v1320 = vpop.permute.xlu0 %1319
      %1321 = vrot.lane.b32.xlu0 %v1130, 1
      %v1322 = vpop.permute.xlu0 %1321
      %v1323 = vsel %vm630, %v1320, %v1322
      %v1324 = vsel %vm630, %v1322, %v1320
      %v1325 = vsel %vm635, %v1324, 0.0
      %v1326 = vsel %vm636, %v1323, 0.0
      %s1327 = scalar_lea.vmem %s6, 24
      %v1328 = vld [vmem:[%s1327] sm:$0x3]
      %v1329 = vpack.c.bf16 %v1325, %v1325
      %v1330 = vpack.c.bf16 %v1326, %v1326
      %v1332 = vsel %vm455, %v1328, 0
      %v1335 = vsel %vm459, %v1329, 0
      %v1338 = vsel %vm459, %v1330, 0
      %1340 = vmatprep.subr.bf16.mxu0 0
      %1341 = vmatpush1.bf16.msra.mxu0 0
      %1342 = vmatprep.subr.bf16.mxu0 0
      %1343 = vmatpush1.bf16.msra.mxu0 0
      %1344 = vmatprep.subr.bf16.mxu0 0
      %1345 = vmatpush1.bf16.msra.mxu0 0
      %1346 = vmatprep.subr.bf16.mxu0 0
      %1347 = vmatpush1.bf16.msra.mxu0 0
      %1348 = vmatprep.subr.bf16.mxu0 0
      %1349 = vmatpush1.bf16.msra.mxu0 0
      %1350 = vmatprep.subr.bf16.mxu0 0
      %1351 = vmatpush1.bf16.msra.mxu0 0
      %1352 = vmatprep.subr.bf16.mxu0 0
      %1353 = vmatpush1.bf16.msra.mxu0 0
      %1354 = vmatprep.subr.bf16.mxu0 %v1338
      %1355 = vmatpush1.bf16.msra.mxu0 %v1335
      %1356 = vmatprep.subr.bf16.mxu0 0
      %1357 = vmatpush2.bf16.msra.mxu0 0
      %1358 = vmatprep.subr.bf16.mxu0 0
      %1359 = vmatpush2.bf16.msra.mxu0 0
      %1360 = vmatprep.subr.bf16.mxu0 0
      %1361 = vmatpush2.bf16.msra.mxu0 0
      %1362 = vmatprep.subr.bf16.mxu0 0
      %1363 = vmatpush2.bf16.msra.mxu0 0
      %1364 = vmatprep.subr.bf16.mxu0 0
      %1365 = vmatpush2.bf16.msra.mxu0 0
      %1366 = vmatprep.subr.bf16.mxu0 0
      %1367 = vmatpush2.bf16.msra.mxu0 0
      %1368 = vmatprep.subr.bf16.mxu0 0
      %1369 = vmatpush2.bf16.msra.mxu0 0
      %1370 = vmatprep.subr.bf16.mxu0 0
      %1371 = vmatpush2.bf16.msra.mxu0 0
      %1372 = vmatprep.mubr.bf16.mxu0 0
      %1373 = vmatmul.mubr.bf16.gmra.mxu0 %v1332
      %v1374 = vpop.f32.mrf.mxu0
      %v1375 = vadd.f32 0.0, %v1374
      %v1376 = vpop.f32.mrf.mxu0
      %v1377 = vadd.f32 0.0, %v1376
      %v1378 = vpop.f32.mrf.mxu0
      %v1379 = vpop.f32.mrf.mxu0
      %1380 = vdwg.mxu0
      %v1381 = vadd.f32 %v1317, %v1375
      %v1382 = vadd.f32 %v1318, %v1377
      %s1383 = scalar_lea.vmem %s6, 26
      %v1384 = vld [vmem:[%s1383] sm:$0x3]
      %v1385 = vpack.c.bf16 %v1129, %v1129
      %v1386 = vpack.c.bf16 %v1130, %v1130
      %v1388 = vsel %vm455, %v1384, 0
      %v1391 = vsel %vm459, %v1385, 0
      %v1394 = vsel %vm459, %v1386, 0
      %1396 = vmatprep.subr.bf16.mxu0 0
      %1397 = vmatpush1.bf16.msra.mxu0 0
      %1398 = vmatprep.subr.bf16.mxu0 0
      %1399 = vmatpush1.bf16.msra.mxu0 0
      %1400 = vmatprep.subr.bf16.mxu0 0
      %1401 = vmatpush1.bf16.msra.mxu0 0
      %1402 = vmatprep.subr.bf16.mxu0 0
      %1403 = vmatpush1.bf16.msra.mxu0 0
      %1404 = vmatprep.subr.bf16.mxu0 0
      %1405 = vmatpush1.bf16.msra.mxu0 0
      %1406 = vmatprep.subr.bf16.mxu0 0
      %1407 = vmatpush1.bf16.msra.mxu0 0
      %1408 = vmatprep.subr.bf16.mxu0 0
      %1409 = vmatpush1.bf16.msra.mxu0 0
      %1410 = vmatprep.subr.bf16.mxu0 %v1394
      %1411 = vmatpush1.bf16.msra.mxu0 %v1391
      %1412 = vmatprep.subr.bf16.mxu0 0
      %1413 = vmatpush2.bf16.msra.mxu0 0
      %1414 = vmatprep.subr.bf16.mxu0 0
      %1415 = vmatpush2.bf16.msra.mxu0 0
      %1416 = vmatprep.subr.bf16.mxu0 0
      %1417 = vmatpush2.bf16.msra.mxu0 0
      %1418 = vmatprep.subr.bf16.mxu0 0
      %1419 = vmatpush2.bf16.msra.mxu0 0
      %1420 = vmatprep.subr.bf16.mxu0 0
      %1421 = vmatpush2.bf16.msra.mxu0 0
      %1422 = vmatprep.subr.bf16.mxu0 0
      %1423 = vmatpush2.bf16.msra.mxu0 0
      %1424 = vmatprep.subr.bf16.mxu0 0
      %1425 = vmatpush2.bf16.msra.mxu0 0
      %1426 = vmatprep.subr.bf16.mxu0 0
      %1427 = vmatpush2.bf16.msra.mxu0 0
      %1428 = vmatprep.mubr.bf16.mxu0 0
      %1429 = vmatmul.mubr.bf16.gmra.mxu0 %v1388
      %v1430 = vpop.f32.mrf.mxu0
      %v1431 = vadd.f32 0.0, %v1430
      %v1432 = vpop.f32.mrf.mxu0
      %v1433 = vadd.f32 0.0, %v1432
      %v1434 = vpop.f32.mrf.mxu0
      %v1435 = vpop.f32.mrf.mxu0
      %1436 = vdwg.mxu0
      %v1437 = vadd.f32 %v1381, %v1431
      %v1438 = vadd.f32 %v1382, %v1433
      %1439 = vrot.lane.b32.xlu0 %v1129, 127
      %v1440 = vpop.permute.xlu0 %1439
      %1441 = vrot.lane.b32.xlu0 %v1130, 127
      %v1442 = vpop.permute.xlu0 %1441
      %v1443 = vsel %vm755, %v1440, %v1442
      %v1444 = vsel %vm755, %v1442, %v1440
      %v1445 = vsel %vm760, %v1443, 0.0
      %v1446 = vsel %vm761, %v1444, 0.0
      %s1447 = scalar_lea.vmem %s6, 28
      %v1448 = vld [vmem:[%s1447] sm:$0x3]
      %v1449 = vpack.c.bf16 %v1445, %v1445
      %v1450 = vpack.c.bf16 %v1446, %v1446
      %v1452 = vsel %vm455, %v1448, 0
      %v1455 = vsel %vm459, %v1449, 0
      %v1458 = vsel %vm459, %v1450, 0
      %1460 = vmatprep.subr.bf16.mxu0 0
      %1461 = vmatpush1.bf16.msra.mxu0 0
      %1462 = vmatprep.subr.bf16.mxu0 0
      %1463 = vmatpush1.bf16.msra.mxu0 0
      %1464 = vmatprep.subr.bf16.mxu0 0
      %1465 = vmatpush1.bf16.msra.mxu0 0
      %1466 = vmatprep.subr.bf16.mxu0 0
      %1467 = vmatpush1.bf16.msra.mxu0 0
      %1468 = vmatprep.subr.bf16.mxu0 0
      %1469 = vmatpush1.bf16.msra.mxu0 0
      %1470 = vmatprep.subr.bf16.mxu0 0
      %1471 = vmatpush1.bf16.msra.mxu0 0
      %1472 = vmatprep.subr.bf16.mxu0 0
      %1473 = vmatpush1.bf16.msra.mxu0 0
      %1474 = vmatprep.subr.bf16.mxu0 %v1458
      %1475 = vmatpush1.bf16.msra.mxu0 %v1455
      %1476 = vmatprep.subr.bf16.mxu0 0
      %1477 = vmatpush2.bf16.msra.mxu0 0
      %1478 = vmatprep.subr.bf16.mxu0 0
      %1479 = vmatpush2.bf16.msra.mxu0 0
      %1480 = vmatprep.subr.bf16.mxu0 0
      %1481 = vmatpush2.bf16.msra.mxu0 0
      %1482 = vmatprep.subr.bf16.mxu0 0
      %1483 = vmatpush2.bf16.msra.mxu0 0
      %1484 = vmatprep.subr.bf16.mxu0 0
      %1485 = vmatpush2.bf16.msra.mxu0 0
      %1486 = vmatprep.subr.bf16.mxu0 0
      %1487 = vmatpush2.bf16.msra.mxu0 0
      %1488 = vmatprep.subr.bf16.mxu0 0
      %1489 = vmatpush2.bf16.msra.mxu0 0
      %1490 = vmatprep.subr.bf16.mxu0 0
      %1491 = vmatpush2.bf16.msra.mxu0 0
      %1492 = vmatprep.mubr.bf16.mxu0 0
      %1493 = vmatmul.mubr.bf16.gmra.mxu0 %v1452
      %v1494 = vpop.f32.mrf.mxu0
      %v1495 = vadd.f32 0.0, %v1494
      %v1496 = vpop.f32.mrf.mxu0
      %v1497 = vadd.f32 0.0, %v1496
      %v1498 = vpop.f32.mrf.mxu0
      %v1499 = vpop.f32.mrf.mxu0
      %1500 = vdwg.mxu0
      %v1501 = vadd.f32 %v1437, %v1495
      %v1502 = vadd.f32 %v1438, %v1497
      %1503 = vrot.lane.b32.xlu0 %v1129, 113
      %v1504 = vpop.permute.xlu0 %1503
      %1505 = vrot.lane.b32.xlu0 %v1130, 113
      %v1506 = vpop.permute.xlu0 %1505
      %v1507 = vsel %vm824, %v1504, %v1506
      %v1508 = vsel %vm824, %v1506, %v1504
      %v1509 = vsel %vm829, %v1507, 0.0
      %v1510 = vsel %vm830, %v1508, 0.0
      %s1511 = scalar_lea.vmem %s6, 30
      %v1512 = vld [vmem:[%s1511] sm:$0x3]
      %v1513 = vpack.c.bf16 %v1509, %v1509
      %v1514 = vpack.c.bf16 %v1510, %v1510
      %v1516 = vsel %vm455, %v1512, 0
      %v1519 = vsel %vm459, %v1513, 0
      %v1522 = vsel %vm459, %v1514, 0
      %1524 = vmatprep.subr.bf16.mxu0 0
      %1525 = vmatpush1.bf16.msra.mxu0 0
      %1526 = vmatprep.subr.bf16.mxu0 0
      %1527 = vmatpush1.bf16.msra.mxu0 0
      %1528 = vmatprep.subr.bf16.mxu0 0
      %1529 = vmatpush1.bf16.msra.mxu0 0
      %1530 = vmatprep.subr.bf16.mxu0 0
      %1531 = vmatpush1.bf16.msra.mxu0 0
      %1532 = vmatprep.subr.bf16.mxu0 0
      %1533 = vmatpush1.bf16.msra.mxu0 0
      %1534 = vmatprep.subr.bf16.mxu0 0
      %1535 = vmatpush1.bf16.msra.mxu0 0
      %1536 = vmatprep.subr.bf16.mxu0 0
      %1537 = vmatpush1.bf16.msra.mxu0 0
      %1538 = vmatprep.subr.bf16.mxu0 %v1522
      %1539 = vmatpush1.bf16.msra.mxu0 %v1519
      %1540 = vmatprep.subr.bf16.mxu0 0
      %1541 = vmatpush2.bf16.msra.mxu0 0
      %1542 = vmatprep.subr.bf16.mxu0 0
      %1543 = vmatpush2.bf16.msra.mxu0 0
      %1544 = vmatprep.subr.bf16.mxu0 0
      %1545 = vmatpush2.bf16.msra.mxu0 0
      %1546 = vmatprep.subr.bf16.mxu0 0
      %1547 = vmatpush2.bf16.msra.mxu0 0
      %1548 = vmatprep.subr.bf16.mxu0 0
      %1549 = vmatpush2.bf16.msra.mxu0 0
      %1550 = vmatprep.subr.bf16.mxu0 0
      %1551 = vmatpush2.bf16.msra.mxu0 0
      %1552 = vmatprep.subr.bf16.mxu0 0
      %1553 = vmatpush2.bf16.msra.mxu0 0
      %1554 = vmatprep.subr.bf16.mxu0 0
      %1555 = vmatpush2.bf16.msra.mxu0 0
      %1556 = vmatprep.mubr.bf16.mxu0 0
      %1557 = vmatmul.mubr.bf16.gmra.mxu0 %v1516
      %v1558 = vpop.f32.mrf.mxu0
      %v1559 = vadd.f32 0.0, %v1558
      %v1560 = vpop.f32.mrf.mxu0
      %v1561 = vadd.f32 0.0, %v1560
      %v1562 = vpop.f32.mrf.mxu0
      %v1563 = vpop.f32.mrf.mxu0
      %1564 = vdwg.mxu0
      %v1565 = vadd.f32 %v1501, %v1559
      %v1566 = vadd.f32 %v1502, %v1561
      %1567 = vrot.lane.b32.xlu0 %v1129, 112
      %v1568 = vpop.permute.xlu0 %1567
      %1569 = vrot.lane.b32.xlu0 %v1130, 112
      %v1570 = vpop.permute.xlu0 %1569
      %v1571 = vsel %vm893, %v1568, %v1570
      %v1572 = vsel %vm893, %v1570, %v1568
      %v1573 = vsel %vm898, %v1571, 0.0
      %v1574 = vsel %vm899, %v1572, 0.0
      %s1575 = scalar_lea.vmem %s6, 32
      %v1576 = vld [vmem:[%s1575] sm:$0x3]
      %v1577 = vpack.c.bf16 %v1573, %v1573
      %v1578 = vpack.c.bf16 %v1574, %v1574
      %v1580 = vsel %vm455, %v1576, 0
      %v1583 = vsel %vm459, %v1577, 0
      %v1586 = vsel %vm459, %v1578, 0
      %1588 = vmatprep.subr.bf16.mxu0 0
      %1589 = vmatpush1.bf16.msra.mxu0 0
      %1590 = vmatprep.subr.bf16.mxu0 0
      %1591 = vmatpush1.bf16.msra.mxu0 0
      %1592 = vmatprep.subr.bf16.mxu0 0
      %1593 = vmatpush1.bf16.msra.mxu0 0
      %1594 = vmatprep.subr.bf16.mxu0 0
      %1595 = vmatpush1.bf16.msra.mxu0 0
      %1596 = vmatprep.subr.bf16.mxu0 0
      %1597 = vmatpush1.bf16.msra.mxu0 0
      %1598 = vmatprep.subr.bf16.mxu0 0
      %1599 = vmatpush1.bf16.msra.mxu0 0
      %1600 = vmatprep.subr.bf16.mxu0 0
      %1601 = vmatpush1.bf16.msra.mxu0 0
      %1602 = vmatprep.subr.bf16.mxu0 %v1586
      %1603 = vmatpush1.bf16.msra.mxu0 %v1583
      %1604 = vmatprep.subr.bf16.mxu0 0
      %1605 = vmatpush2.bf16.msra.mxu0 0
      %1606 = vmatprep.subr.bf16.mxu0 0
      %1607 = vmatpush2.bf16.msra.mxu0 0
      %1608 = vmatprep.subr.bf16.mxu0 0
      %1609 = vmatpush2.bf16.msra.mxu0 0
      %1610 = vmatprep.subr.bf16.mxu0 0
      %1611 = vmatpush2.bf16.msra.mxu0 0
      %1612 = vmatprep.subr.bf16.mxu0 0
      %1613 = vmatpush2.bf16.msra.mxu0 0
      %1614 = vmatprep.subr.bf16.mxu0 0
      %1615 = vmatpush2.bf16.msra.mxu0 0
      %1616 = vmatprep.subr.bf16.mxu0 0
      %1617 = vmatpush2.bf16.msra.mxu0 0
      %1618 = vmatprep.subr.bf16.mxu0 0
      %1619 = vmatpush2.bf16.msra.mxu0 0
      %1620 = vmatprep.mubr.bf16.mxu0 0
      %1621 = vmatmul.mubr.bf16.gmra.mxu0 %v1580
      %v1622 = vpop.f32.mrf.mxu0
      %v1623 = vadd.f32 0.0, %v1622
      %v1624 = vpop.f32.mrf.mxu0
      %v1625 = vadd.f32 0.0, %v1624
      %v1626 = vpop.f32.mrf.mxu0
      %v1627 = vpop.f32.mrf.mxu0
      %1628 = vdwg.mxu0
      %v1629 = vadd.f32 %v1565, %v1623
      %v1630 = vadd.f32 %v1566, %v1625
      %1631 = vrot.lane.b32.xlu0 %v1129, 111
      %v1632 = vpop.permute.xlu0 %1631
      %1633 = vrot.lane.b32.xlu0 %v1130, 111
      %v1634 = vpop.permute.xlu0 %1633
      %v1635 = vsel %vm962, %v1632, %v1634
      %v1636 = vsel %vm962, %v1634, %v1632
      %v1637 = vsel %vm967, %v1635, 0.0
      %v1638 = vsel %vm968, %v1636, 0.0
      %s1639 = scalar_lea.vmem %s6, 34
      %v1640 = vld [vmem:[%s1639] sm:$0x3]
      %v1641 = vpack.c.bf16 %v1637, %v1637
      %v1642 = vpack.c.bf16 %v1638, %v1638
      %v1644 = vsel %vm455, %v1640, 0
      %v1647 = vsel %vm459, %v1641, 0
      %v1650 = vsel %vm459, %v1642, 0
      %1652 = vmatprep.subr.bf16.mxu0 0
      %1653 = vmatpush1.bf16.msra.mxu0 0
      %1654 = vmatprep.subr.bf16.mxu0 0
      %1655 = vmatpush1.bf16.msra.mxu0 0
      %1656 = vmatprep.subr.bf16.mxu0 0
      %1657 = vmatpush1.bf16.msra.mxu0 0
      %1658 = vmatprep.subr.bf16.mxu0 0
      %1659 = vmatpush1.bf16.msra.mxu0 0
      %1660 = vmatprep.subr.bf16.mxu0 0
      %1661 = vmatpush1.bf16.msra.mxu0 0
      %1662 = vmatprep.subr.bf16.mxu0 0
      %1663 = vmatpush1.bf16.msra.mxu0 0
      %1664 = vmatprep.subr.bf16.mxu0 0
      %1665 = vmatpush1.bf16.msra.mxu0 0
      %1666 = vmatprep.subr.bf16.mxu0 %v1650
      %1667 = vmatpush1.bf16.msra.mxu0 %v1647
      %1668 = vmatprep.subr.bf16.mxu0 0
      %1669 = vmatpush2.bf16.msra.mxu0 0
      %1670 = vmatprep.subr.bf16.mxu0 0
      %1671 = vmatpush2.bf16.msra.mxu0 0
      %1672 = vmatprep.subr.bf16.mxu0 0
      %1673 = vmatpush2.bf16.msra.mxu0 0
      %1674 = vmatprep.subr.bf16.mxu0 0
      %1675 = vmatpush2.bf16.msra.mxu0 0
      %1676 = vmatprep.subr.bf16.mxu0 0
      %1677 = vmatpush2.bf16.msra.mxu0 0
      %1678 = vmatprep.subr.bf16.mxu0 0
      %1679 = vmatpush2.bf16.msra.mxu0 0
      %1680 = vmatprep.subr.bf16.mxu0 0
      %1681 = vmatpush2.bf16.msra.mxu0 0
      %1682 = vmatprep.subr.bf16.mxu0 0
      %1683 = vmatpush2.bf16.msra.mxu0 0
      %1684 = vmatprep.mubr.bf16.mxu0 0
      %1685 = vmatmul.mubr.bf16.gmra.mxu0 %v1644
      %v1686 = vpop.f32.mrf.mxu0
      %v1687 = vadd.f32 0.0, %v1686
      %v1688 = vpop.f32.mrf.mxu0
      %v1689 = vadd.f32 0.0, %v1688
      %v1690 = vpop.f32.mrf.mxu0
      %v1691 = vpop.f32.mrf.mxu0
      %1692 = vdwg.mxu0
      %v1693 = vadd.f32 %v1629, %v1687
      %v1694 = vadd.f32 %v1630, %v1689
      %1695 = vst [vmem:[%s278 + $0x10] sm:$0xf] %v1693
      %1696 = vst [vmem:[%s278 + $0x18] sm:$0xf] %v1694
      %v1697 = vld [vmem:[%s278] sm:$0xff]
      %v1698 = vld [vmem:[%s278 + $0x8] sm:$0xff]
      %v1699 = vld [vmem:[%s278 + $0x10] sm:$0xf]
      %v1700 = vld [vmem:[%s278 + $0x18] sm:$0xf]
      %s1701 = scalar_lea.vmem %s1, 32
      %v1702 = vld [vmem:[%s1701] sm:$0xff]
      %v1703 = vld [vmem:[%s1701 + $0x8] sm:$0xf]
      %1705 = vset.pattern.permute.xlu0 0
      %1706 = vperm.xlu0 %1705, %v1702
      %v1707 = vpop.permute.xlu0 %1706
      %1710 = vset.pattern.permute.xlu0 0
      %1711 = vperm.xlu0 %1710, %v1703
      %v1712 = vpop.permute.xlu0 %1711
      %v1714 = vmul.f32 %v1697, %v1707
      %v1715 = vmul.f32 %v1698, %v1707
      %v1716 = vmul.f32 %v1699, %v1712
      %v1717 = vmul.f32 %v1700, %v1712
      %s1718 = scalar_lea.vmem %s2, 32
      %v1719 = vld [vmem:[%s1718] sm:$0xff]
      %v1720 = vld [vmem:[%s1718 + $0x8] sm:$0xf]
      %1722 = vset.pattern.permute.xlu0 0
      %1723 = vperm.xlu0 %1722, %v1719
      %v1724 = vpop.permute.xlu0 %1723
      %1727 = vset.pattern.permute.xlu0 0
      %1728 = vperm.xlu0 %1727, %v1720
      %v1729 = vpop.permute.xlu0 %1728
      %v1731 = vadd.f32 %v1714, %v1724
      %v1732 = vadd.f32 %v1715, %v1724
      %v1733 = vadd.f32 %v1716, %v1729
      %v1734 = vadd.f32 %v1717, %v1729
      %v1735 = vmax.f32 %v1731, 0.0
      %v1736 = vmax.f32 %v1732, 0.0
      %v1737 = vmax.f32 %v1733, 0.0
      %v1738 = vmax.f32 %v1734, 0.0
      %s1739 = scalar_lea.vmem %s3, 8
      %v1740 = vld [vmem:[%s1739] sm:$0xf]
      %v1741 = vpack.c.bf16 %v1737, %v1735
      %v1742 = vpack.c.bf16 %v1738, %v1736
      %vm1743 = vcmask 97280
      %v1745 = vsel %vm1743, %v1740, 0
      %vm1747 = vcmask 1045504
      %v1749 = vsel %vm1747, %v1741, 0
      %v1752 = vsel %vm1747, %v1742, 0
      %1754 = vmatprep.subr.bf16.mxu0 0
      %1755 = vmatpush1.bf16.msra.mxu0 0
      %1756 = vmatprep.subr.bf16.mxu0 0
      %1757 = vmatpush1.bf16.msra.mxu0 0
      %1758 = vmatprep.subr.bf16.mxu0 0
      %1759 = vmatpush1.bf16.msra.mxu0 0
      %1760 = vmatprep.subr.bf16.mxu0 0
      %1761 = vmatpush1.bf16.msra.mxu0 0
      %1762 = vmatprep.subr.bf16.mxu0 0
      %1763 = vmatpush1.bf16.msra.mxu0 0
      %1764 = vmatprep.subr.bf16.mxu0 0
      %1765 = vmatpush1.bf16.msra.mxu0 0
      %1766 = vmatprep.subr.bf16.mxu0 0
      %1767 = vmatpush1.bf16.msra.mxu0 0
      %1768 = vmatprep.subr.bf16.mxu0 %v1752
      %1769 = vmatpush1.bf16.msra.mxu0 %v1749
      %1770 = vmatprep.subr.bf16.mxu0 0
      %1771 = vmatpush2.bf16.msra.mxu0 0
      %1772 = vmatprep.subr.bf16.mxu0 0
      %1773 = vmatpush2.bf16.msra.mxu0 0
      %1774 = vmatprep.subr.bf16.mxu0 0
      %1775 = vmatpush2.bf16.msra.mxu0 0
      %1776 = vmatprep.subr.bf16.mxu0 0
      %1777 = vmatpush2.bf16.msra.mxu0 0
      %1778 = vmatprep.subr.bf16.mxu0 0
      %1779 = vmatpush2.bf16.msra.mxu0 0
      %1780 = vmatprep.subr.bf16.mxu0 0
      %1781 = vmatpush2.bf16.msra.mxu0 0
      %1782 = vmatprep.subr.bf16.mxu0 0
      %1783 = vmatpush2.bf16.msra.mxu0 0
      %1784 = vmatprep.subr.bf16.mxu0 0
      %1785 = vmatpush2.bf16.msra.mxu0 0
      %1786 = vmatprep.mubr.bf16.mxu0 0
      %1787 = vmatmul.mubr.bf16.gmra.mxu0 %v1745
      %v1788 = vpop.f32.mrf.mxu0
      %v1789 = vadd.f32 0.0, %v1788
      %v1790 = vpop.f32.mrf.mxu0
      %v1791 = vadd.f32 0.0, %v1790
      %v1792 = vpop.f32.mrf.mxu0
      %v1793 = vpop.f32.mrf.mxu0
      %1794 = vdwg.mxu0
      %s1795 = scalar_lea.vmem %s4, 16
      %v1796 = vld [vmem:[%s1795] sm:$0xff]
      %1798 = vset.pattern.permute.xlu0 0
      %1799 = vperm.xlu0 %1798, %v1796
      %v1800 = vpop.permute.xlu0 %1799
      %v1802 = vmul.f32 %v1789, %v1800
      %v1803 = vmul.f32 %v1791, %v1800
      %s1804 = scalar_lea.vmem %s5, 16
      %v1805 = vld [vmem:[%s1804] sm:$0xff]
      %1807 = vset.pattern.permute.xlu0 0
      %1808 = vperm.xlu0 %1807, %v1805
      %v1809 = vpop.permute.xlu0 %1808
      %v1811 = vadd.f32 %v1802, %v1809
      %v1812 = vadd.f32 %v1803, %v1809
      %v1813 = vmax.f32 %v1811, 0.0
      %v1814 = vmax.f32 %v1812, 0.0
      %1815 = vrot.lane.b32.xlu0 %v1813, 17
      %v1816 = vpop.permute.xlu0 %1815
      %1817 = vrot.lane.b32.xlu0 %v1814, 17
      %v1818 = vpop.permute.xlu0 %1817
      %v1819 = vsel %vm426, %v1816, %v1818
      %v1820 = vsel %vm426, %v1818, %v1816
      %v1821 = vsel %vm431, %v1820, 0.0
      %v1822 = vsel %vm432, %v1819, 0.0
      %s1823 = scalar_lea.vmem %s6, 36
      %v1824 = vld [vmem:[%s1823] sm:$0x3]
      %v1825 = vpack.c.bf16 %v1821, %v1821
      %v1826 = vpack.c.bf16 %v1822, %v1822
      %1827 = vrot.lane.b32.xlu0 %v1813, 16
      %v1828 = vpop.permute.xlu0 %1827
      %1829 = vrot.lane.b32.xlu0 %v1814, 16
      %v1830 = vpop.permute.xlu0 %1829
      %v1831 = vsel %vm442, %v1828, %v1830
      %v1832 = vsel %vm442, %v1830, %v1828
      %v1833 = vsel %vm447, %v1832, 0.0
      %v1834 = vsel %vm448, %v1831, 0.0
      %s1835 = scalar_lea.vmem %s6, 38
      %v1836 = vld [vmem:[%s1835] sm:$0x3]
      %v1837 = vpack.c.bf16 %v1833, %v1833
      %v1838 = vpack.c.bf16 %v1834, %v1834
      %v1840 = vsel %vm455, %v1836, 0
      %v1843 = vsel %vm459, %v1837, 0
      %v1846 = vsel %vm459, %v1838, 0
      %1848 = vmatprep.subr.bf16.mxu0 0
      %1849 = vmatpush1.bf16.msra.mxu0 0
      %1850 = vmatprep.subr.bf16.mxu0 0
      %1851 = vmatpush1.bf16.msra.mxu0 0
      %1852 = vmatprep.subr.bf16.mxu0 0
      %1853 = vmatpush1.bf16.msra.mxu0 0
      %1854 = vmatprep.subr.bf16.mxu0 0
      %1855 = vmatpush1.bf16.msra.mxu0 0
      %1856 = vmatprep.subr.bf16.mxu0 0
      %1857 = vmatpush1.bf16.msra.mxu0 0
      %1858 = vmatprep.subr.bf16.mxu0 0
      %1859 = vmatpush1.bf16.msra.mxu0 0
      %1860 = vmatprep.subr.bf16.mxu0 0
      %1861 = vmatpush1.bf16.msra.mxu0 0
      %1862 = vmatprep.subr.bf16.mxu0 %v1846
      %1863 = vmatpush1.bf16.msra.mxu0 %v1843
      %1864 = vmatprep.subr.bf16.mxu0 0
      %1865 = vmatpush2.bf16.msra.mxu0 0
      %1866 = vmatprep.subr.bf16.mxu0 0
      %1867 = vmatpush2.bf16.msra.mxu0 0
      %1868 = vmatprep.subr.bf16.mxu0 0
      %1869 = vmatpush2.bf16.msra.mxu0 0
      %1870 = vmatprep.subr.bf16.mxu0 0
      %1871 = vmatpush2.bf16.msra.mxu0 0
      %1872 = vmatprep.subr.bf16.mxu0 0
      %1873 = vmatpush2.bf16.msra.mxu0 0
      %1874 = vmatprep.subr.bf16.mxu0 0
      %1875 = vmatpush2.bf16.msra.mxu0 0
      %1876 = vmatprep.subr.bf16.mxu0 0
      %1877 = vmatpush2.bf16.msra.mxu0 0
      %1878 = vmatprep.subr.bf16.mxu0 0
      %1879 = vmatpush2.bf16.msra.mxu0 0
      %1880 = vmatprep.mubr.bf16.mxu0 0
      %1881 = vmatmul.mubr.bf16.gmra.mxu0 %v1840
      %v1882 = vpop.f32.mrf.mxu0
      %v1883 = vadd.f32 0.0, %v1882
      %v1884 = vpop.f32.mrf.mxu0
      %v1885 = vadd.f32 0.0, %v1884
      %v1886 = vpop.f32.mrf.mxu0
      %v1887 = vpop.f32.mrf.mxu0
      %1888 = vdwg.mxu0
      %v1890 = vsel %vm455, %v1824, 0
      %v1893 = vsel %vm459, %v1825, 0
      %v1896 = vsel %vm459, %v1826, 0
      %1898 = vmatprep.subr.bf16.mxu0 0
      %1899 = vmatpush1.bf16.msra.mxu0 0
      %1900 = vmatprep.subr.bf16.mxu0 0
      %1901 = vmatpush1.bf16.msra.mxu0 0
      %1902 = vmatprep.subr.bf16.mxu0 0
      %1903 = vmatpush1.bf16.msra.mxu0 0
      %1904 = vmatprep.subr.bf16.mxu0 0
      %1905 = vmatpush1.bf16.msra.mxu0 0
      %1906 = vmatprep.subr.bf16.mxu0 0
      %1907 = vmatpush1.bf16.msra.mxu0 0
      %1908 = vmatprep.subr.bf16.mxu0 0
      %1909 = vmatpush1.bf16.msra.mxu0 0
      %1910 = vmatprep.subr.bf16.mxu0 0
      %1911 = vmatpush1.bf16.msra.mxu0 0
      %1912 = vmatprep.subr.bf16.mxu0 %v1896
      %1913 = vmatpush1.bf16.msra.mxu0 %v1893
      %1914 = vmatprep.subr.bf16.mxu0 0
      %1915 = vmatpush2.bf16.msra.mxu0 0
      %1916 = vmatprep.subr.bf16.mxu0 0
      %1917 = vmatpush2.bf16.msra.mxu0 0
      %1918 = vmatprep.subr.bf16.mxu0 0
      %1919 = vmatpush2.bf16.msra.mxu0 0
      %1920 = vmatprep.subr.bf16.mxu0 0
      %1921 = vmatpush2.bf16.msra.mxu0 0
      %1922 = vmatprep.subr.bf16.mxu0 0
      %1923 = vmatpush2.bf16.msra.mxu0 0
      %1924 = vmatprep.subr.bf16.mxu0 0
      %1925 = vmatpush2.bf16.msra.mxu0 0
      %1926 = vmatprep.subr.bf16.mxu0 0
      %1927 = vmatpush2.bf16.msra.mxu0 0
      %1928 = vmatprep.subr.bf16.mxu0 0
      %1929 = vmatpush2.bf16.msra.mxu0 0
      %1930 = vmatprep.mubr.bf16.mxu0 0
      %1931 = vmatmul.mubr.bf16.gmra.mxu0 %v1890
      %v1932 = vpop.f32.mrf.mxu0
      %v1933 = vadd.f32 %v1883, %v1932
      %v1934 = vpop.f32.mrf.mxu0
      %v1935 = vadd.f32 %v1885, %v1934
      %v1936 = vpop.f32.mrf.mxu0
      %v1937 = vpop.f32.mrf.mxu0
      %1938 = vdwg.mxu0
      %1939 = vrot.lane.b32.xlu0 %v1813, 15
      %v1940 = vpop.permute.xlu0 %1939
      %1941 = vrot.lane.b32.xlu0 %v1814, 15
      %v1942 = vpop.permute.xlu0 %1941
      %v1943 = vsel %vm561, %v1940, %v1942
      %v1944 = vsel %vm561, %v1942, %v1940
      %v1945 = vsel %vm566, %v1944, 0.0
      %v1946 = vsel %vm567, %v1943, 0.0
      %s1947 = scalar_lea.vmem %s6, 40
      %v1948 = vld [vmem:[%s1947] sm:$0x3]
      %v1949 = vpack.c.bf16 %v1945, %v1945
      %v1950 = vpack.c.bf16 %v1946, %v1946
      %v1952 = vsel %vm455, %v1948, 0
      %v1955 = vsel %vm459, %v1949, 0
      %v1958 = vsel %vm459, %v1950, 0
      %1960 = vmatprep.subr.bf16.mxu0 0
      %1961 = vmatpush1.bf16.msra.mxu0 0
      %1962 = vmatprep.subr.bf16.mxu0 0
      %1963 = vmatpush1.bf16.msra.mxu0 0
      %1964 = vmatprep.subr.bf16.mxu0 0
      %1965 = vmatpush1.bf16.msra.mxu0 0
      %1966 = vmatprep.subr.bf16.mxu0 0
      %1967 = vmatpush1.bf16.msra.mxu0 0
      %1968 = vmatprep.subr.bf16.mxu0 0
      %1969 = vmatpush1.bf16.msra.mxu0 0
      %1970 = vmatprep.subr.bf16.mxu0 0
      %1971 = vmatpush1.bf16.msra.mxu0 0
      %1972 = vmatprep.subr.bf16.mxu0 0
      %1973 = vmatpush1.bf16.msra.mxu0 0
      %1974 = vmatprep.subr.bf16.mxu0 %v1958
      %1975 = vmatpush1.bf16.msra.mxu0 %v1955
      %1976 = vmatprep.subr.bf16.mxu0 0
      %1977 = vmatpush2.bf16.msra.mxu0 0
      %1978 = vmatprep.subr.bf16.mxu0 0
      %1979 = vmatpush2.bf16.msra.mxu0 0
      %1980 = vmatprep.subr.bf16.mxu0 0
      %1981 = vmatpush2.bf16.msra.mxu0 0
      %1982 = vmatprep.subr.bf16.mxu0 0
      %1983 = vmatpush2.bf16.msra.mxu0 0
      %1984 = vmatprep.subr.bf16.mxu0 0
      %1985 = vmatpush2.bf16.msra.mxu0 0
      %1986 = vmatprep.subr.bf16.mxu0 0
      %1987 = vmatpush2.bf16.msra.mxu0 0
      %1988 = vmatprep.subr.bf16.mxu0 0
      %1989 = vmatpush2.bf16.msra.mxu0 0
      %1990 = vmatprep.subr.bf16.mxu0 0
      %1991 = vmatpush2.bf16.msra.mxu0 0
      %1992 = vmatprep.mubr.bf16.mxu0 0
      %1993 = vmatmul.mubr.bf16.gmra.mxu0 %v1952
      %v1994 = vpop.f32.mrf.mxu0
      %v1995 = vadd.f32 0.0, %v1994
      %v1996 = vpop.f32.mrf.mxu0
      %v1997 = vadd.f32 0.0, %v1996
      %v1998 = vpop.f32.mrf.mxu0
      %v1999 = vpop.f32.mrf.mxu0
      %2000 = vdwg.mxu0
      %v2001 = vadd.f32 %v1933, %v1995
      %v2002 = vadd.f32 %v1935, %v1997
      %2003 = vrot.lane.b32.xlu0 %v1813, 1
      %v2004 = vpop.permute.xlu0 %2003
      %2005 = vrot.lane.b32.xlu0 %v1814, 1
      %v2006 = vpop.permute.xlu0 %2005
      %v2007 = vsel %vm630, %v2004, %v2006
      %v2008 = vsel %vm630, %v2006, %v2004
      %v2009 = vsel %vm635, %v2008, 0.0
      %v2010 = vsel %vm636, %v2007, 0.0
      %s2011 = scalar_lea.vmem %s6, 42
      %v2012 = vld [vmem:[%s2011] sm:$0x3]
      %v2013 = vpack.c.bf16 %v2009, %v2009
      %v2014 = vpack.c.bf16 %v2010, %v2010
      %v2016 = vsel %vm455, %v2012, 0
      %v2019 = vsel %vm459, %v2013, 0
      %v2022 = vsel %vm459, %v2014, 0
      %2024 = vmatprep.subr.bf16.mxu0 0
      %2025 = vmatpush1.bf16.msra.mxu0 0
      %2026 = vmatprep.subr.bf16.mxu0 0
      %2027 = vmatpush1.bf16.msra.mxu0 0
      %2028 = vmatprep.subr.bf16.mxu0 0
      %2029 = vmatpush1.bf16.msra.mxu0 0
      %2030 = vmatprep.subr.bf16.mxu0 0
      %2031 = vmatpush1.bf16.msra.mxu0 0
      %2032 = vmatprep.subr.bf16.mxu0 0
      %2033 = vmatpush1.bf16.msra.mxu0 0
      %2034 = vmatprep.subr.bf16.mxu0 0
      %2035 = vmatpush1.bf16.msra.mxu0 0
      %2036 = vmatprep.subr.bf16.mxu0 0
      %2037 = vmatpush1.bf16.msra.mxu0 0
      %2038 = vmatprep.subr.bf16.mxu0 %v2022
      %2039 = vmatpush1.bf16.msra.mxu0 %v2019
      %2040 = vmatprep.subr.bf16.mxu0 0
      %2041 = vmatpush2.bf16.msra.mxu0 0
      %2042 = vmatprep.subr.bf16.mxu0 0
      %2043 = vmatpush2.bf16.msra.mxu0 0
      %2044 = vmatprep.subr.bf16.mxu0 0
      %2045 = vmatpush2.bf16.msra.mxu0 0
      %2046 = vmatprep.subr.bf16.mxu0 0
      %2047 = vmatpush2.bf16.msra.mxu0 0
      %2048 = vmatprep.subr.bf16.mxu0 0
      %2049 = vmatpush2.bf16.msra.mxu0 0
      %2050 = vmatprep.subr.bf16.mxu0 0
      %2051 = vmatpush2.bf16.msra.mxu0 0
      %2052 = vmatprep.subr.bf16.mxu0 0
      %2053 = vmatpush2.bf16.msra.mxu0 0
      %2054 = vmatprep.subr.bf16.mxu0 0
      %2055 = vmatpush2.bf16.msra.mxu0 0
      %2056 = vmatprep.mubr.bf16.mxu0 0
      %2057 = vmatmul.mubr.bf16.gmra.mxu0 %v2016
      %v2058 = vpop.f32.mrf.mxu0
      %v2059 = vadd.f32 0.0, %v2058
      %v2060 = vpop.f32.mrf.mxu0
      %v2061 = vadd.f32 0.0, %v2060
      %v2062 = vpop.f32.mrf.mxu0
      %v2063 = vpop.f32.mrf.mxu0
      %2064 = vdwg.mxu0
      %v2065 = vadd.f32 %v2001, %v2059
      %v2066 = vadd.f32 %v2002, %v2061
      %s2067 = scalar_lea.vmem %s6, 44
      %v2068 = vld [vmem:[%s2067] sm:$0x3]
      %v2069 = vpack.c.bf16 %v1813, %v1813
      %v2070 = vpack.c.bf16 %v1814, %v1814
      %v2072 = vsel %vm455, %v2068, 0
      %v2075 = vsel %vm459, %v2069, 0
      %v2078 = vsel %vm459, %v2070, 0
      %2080 = vmatprep.subr.bf16.mxu0 0
      %2081 = vmatpush1.bf16.msra.mxu0 0
      %2082 = vmatprep.subr.bf16.mxu0 0
      %2083 = vmatpush1.bf16.msra.mxu0 0
      %2084 = vmatprep.subr.bf16.mxu0 0
      %2085 = vmatpush1.bf16.msra.mxu0 0
      %2086 = vmatprep.subr.bf16.mxu0 0
      %2087 = vmatpush1.bf16.msra.mxu0 0
      %2088 = vmatprep.subr.bf16.mxu0 0
      %2089 = vmatpush1.bf16.msra.mxu0 0
      %2090 = vmatprep.subr.bf16.mxu0 0
      %2091 = vmatpush1.bf16.msra.mxu0 0
      %2092 = vmatprep.subr.bf16.mxu0 0
      %2093 = vmatpush1.bf16.msra.mxu0 0
      %2094 = vmatprep.subr.bf16.mxu0 %v2078
      %2095 = vmatpush1.bf16.msra.mxu0 %v2075
      %2096 = vmatprep.subr.bf16.mxu0 0
      %2097 = vmatpush2.bf16.msra.mxu0 0
      %2098 = vmatprep.subr.bf16.mxu0 0
      %2099 = vmatpush2.bf16.msra.mxu0 0
      %2100 = vmatprep.subr.bf16.mxu0 0
      %2101 = vmatpush2.bf16.msra.mxu0 0
      %2102 = vmatprep.subr.bf16.mxu0 0
      %2103 = vmatpush2.bf16.msra.mxu0 0
      %2104 = vmatprep.subr.bf16.mxu0 0
      %2105 = vmatpush2.bf16.msra.mxu0 0
      %2106 = vmatprep.subr.bf16.mxu0 0
      %2107 = vmatpush2.bf16.msra.mxu0 0
      %2108 = vmatprep.subr.bf16.mxu0 0
      %2109 = vmatpush2.bf16.msra.mxu0 0
      %2110 = vmatprep.subr.bf16.mxu0 0
      %2111 = vmatpush2.bf16.msra.mxu0 0
      %2112 = vmatprep.mubr.bf16.mxu0 0
      %2113 = vmatmul.mubr.bf16.gmra.mxu0 %v2072
      %v2114 = vpop.f32.mrf.mxu0
      %v2115 = vadd.f32 0.0, %v2114
      %v2116 = vpop.f32.mrf.mxu0
      %v2117 = vadd.f32 0.0, %v2116
      %v2118 = vpop.f32.mrf.mxu0
      %v2119 = vpop.f32.mrf.mxu0
      %2120 = vdwg.mxu0
      %v2121 = vadd.f32 %v2065, %v2115
      %v2122 = vadd.f32 %v2066, %v2117
      %2123 = vrot.lane.b32.xlu0 %v1813, 127
      %v2124 = vpop.permute.xlu0 %2123
      %2125 = vrot.lane.b32.xlu0 %v1814, 127
      %v2126 = vpop.permute.xlu0 %2125
      %v2127 = vsel %vm755, %v2124, %v2126
      %v2128 = vsel %vm755, %v2126, %v2124
      %v2129 = vsel %vm760, %v2127, 0.0
      %v2130 = vsel %vm761, %v2128, 0.0
      %s2131 = scalar_lea.vmem %s6, 46
      %v2132 = vld [vmem:[%s2131] sm:$0x3]
      %v2133 = vpack.c.bf16 %v2129, %v2129
      %v2134 = vpack.c.bf16 %v2130, %v2130
      %v2136 = vsel %vm455, %v2132, 0
      %v2139 = vsel %vm459, %v2133, 0
      %v2142 = vsel %vm459, %v2134, 0
      %2144 = vmatprep.subr.bf16.mxu0 0
      %2145 = vmatpush1.bf16.msra.mxu0 0
      %2146 = vmatprep.subr.bf16.mxu0 0
      %2147 = vmatpush1.bf16.msra.mxu0 0
      %2148 = vmatprep.subr.bf16.mxu0 0
      %2149 = vmatpush1.bf16.msra.mxu0 0
      %2150 = vmatprep.subr.bf16.mxu0 0
      %2151 = vmatpush1.bf16.msra.mxu0 0
      %2152 = vmatprep.subr.bf16.mxu0 0
      %2153 = vmatpush1.bf16.msra.mxu0 0
      %2154 = vmatprep.subr.bf16.mxu0 0
      %2155 = vmatpush1.bf16.msra.mxu0 0
      %2156 = vmatprep.subr.bf16.mxu0 0
      %2157 = vmatpush1.bf16.msra.mxu0 0
      %2158 = vmatprep.subr.bf16.mxu0 %v2142
      %2159 = vmatpush1.bf16.msra.mxu0 %v2139
      %2160 = vmatprep.subr.bf16.mxu0 0
      %2161 = vmatpush2.bf16.msra.mxu0 0
      %2162 = vmatprep.subr.bf16.mxu0 0
      %2163 = vmatpush2.bf16.msra.mxu0 0
      %2164 = vmatprep.subr.bf16.mxu0 0
      %2165 = vmatpush2.bf16.msra.mxu0 0
      %2166 = vmatprep.subr.bf16.mxu0 0
      %2167 = vmatpush2.bf16.msra.mxu0 0
      %2168 = vmatprep.subr.bf16.mxu0 0
      %2169 = vmatpush2.bf16.msra.mxu0 0
      %2170 = vmatprep.subr.bf16.mxu0 0
      %2171 = vmatpush2.bf16.msra.mxu0 0
      %2172 = vmatprep.subr.bf16.mxu0 0
      %2173 = vmatpush2.bf16.msra.mxu0 0
      %2174 = vmatprep.subr.bf16.mxu0 0
      %2175 = vmatpush2.bf16.msra.mxu0 0
      %2176 = vmatprep.mubr.bf16.mxu0 0
      %2177 = vmatmul.mubr.bf16.gmra.mxu0 %v2136
      %v2178 = vpop.f32.mrf.mxu0
      %v2179 = vadd.f32 0.0, %v2178
      %v2180 = vpop.f32.mrf.mxu0
      %v2181 = vadd.f32 0.0, %v2180
      %v2182 = vpop.f32.mrf.mxu0
      %v2183 = vpop.f32.mrf.mxu0
      %2184 = vdwg.mxu0
      %v2185 = vadd.f32 %v2121, %v2179
      %v2186 = vadd.f32 %v2122, %v2181
      %2187 = vrot.lane.b32.xlu0 %v1813, 113
      %v2188 = vpop.permute.xlu0 %2187
      %2189 = vrot.lane.b32.xlu0 %v1814, 113
      %v2190 = vpop.permute.xlu0 %2189
      %v2191 = vsel %vm824, %v2188, %v2190
      %v2192 = vsel %vm824, %v2190, %v2188
      %v2193 = vsel %vm829, %v2191, 0.0
      %v2194 = vsel %vm830, %v2192, 0.0
      %s2195 = scalar_lea.vmem %s6, 48
      %v2196 = vld [vmem:[%s2195] sm:$0x3]
      %v2197 = vpack.c.bf16 %v2193, %v2193
      %v2198 = vpack.c.bf16 %v2194, %v2194
      %v2200 = vsel %vm455, %v2196, 0
      %v2203 = vsel %vm459, %v2197, 0
      %v2206 = vsel %vm459, %v2198, 0
      %2208 = vmatprep.subr.bf16.mxu0 0
      %2209 = vmatpush1.bf16.msra.mxu0 0
      %2210 = vmatprep.subr.bf16.mxu0 0
      %2211 = vmatpush1.bf16.msra.mxu0 0
      %2212 = vmatprep.subr.bf16.mxu0 0
      %2213 = vmatpush1.bf16.msra.mxu0 0
      %2214 = vmatprep.subr.bf16.mxu0 0
      %2215 = vmatpush1.bf16.msra.mxu0 0
      %2216 = vmatprep.subr.bf16.mxu0 0
      %2217 = vmatpush1.bf16.msra.mxu0 0
      %2218 = vmatprep.subr.bf16.mxu0 0
      %2219 = vmatpush1.bf16.msra.mxu0 0
      %2220 = vmatprep.subr.bf16.mxu0 0
      %2221 = vmatpush1.bf16.msra.mxu0 0
      %2222 = vmatprep.subr.bf16.mxu0 %v2206
      %2223 = vmatpush1.bf16.msra.mxu0 %v2203
      %2224 = vmatprep.subr.bf16.mxu0 0
      %2225 = vmatpush2.bf16.msra.mxu0 0
      %2226 = vmatprep.subr.bf16.mxu0 0
      %2227 = vmatpush2.bf16.msra.mxu0 0
      %2228 = vmatprep.subr.bf16.mxu0 0
      %2229 = vmatpush2.bf16.msra.mxu0 0
      %2230 = vmatprep.subr.bf16.mxu0 0
      %2231 = vmatpush2.bf16.msra.mxu0 0
      %2232 = vmatprep.subr.bf16.mxu0 0
      %2233 = vmatpush2.bf16.msra.mxu0 0
      %2234 = vmatprep.subr.bf16.mxu0 0
      %2235 = vmatpush2.bf16.msra.mxu0 0
      %2236 = vmatprep.subr.bf16.mxu0 0
      %2237 = vmatpush2.bf16.msra.mxu0 0
      %2238 = vmatprep.subr.bf16.mxu0 0
      %2239 = vmatpush2.bf16.msra.mxu0 0
      %2240 = vmatprep.mubr.bf16.mxu0 0
      %2241 = vmatmul.mubr.bf16.gmra.mxu0 %v2200
      %v2242 = vpop.f32.mrf.mxu0
      %v2243 = vadd.f32 0.0, %v2242
      %v2244 = vpop.f32.mrf.mxu0
      %v2245 = vadd.f32 0.0, %v2244
      %v2246 = vpop.f32.mrf.mxu0
      %v2247 = vpop.f32.mrf.mxu0
      %2248 = vdwg.mxu0
      %v2249 = vadd.f32 %v2185, %v2243
      %v2250 = vadd.f32 %v2186, %v2245
      %2251 = vrot.lane.b32.xlu0 %v1813, 112
      %v2252 = vpop.permute.xlu0 %2251
      %2253 = vrot.lane.b32.xlu0 %v1814, 112
      %v2254 = vpop.permute.xlu0 %2253
      %v2255 = vsel %vm893, %v2252, %v2254
      %v2256 = vsel %vm893, %v2254, %v2252
      %v2257 = vsel %vm898, %v2255, 0.0
      %v2258 = vsel %vm899, %v2256, 0.0
      %s2259 = scalar_lea.vmem %s6, 50
      %v2260 = vld [vmem:[%s2259] sm:$0x3]
      %v2261 = vpack.c.bf16 %v2257, %v2257
      %v2262 = vpack.c.bf16 %v2258, %v2258
      %v2264 = vsel %vm455, %v2260, 0
      %v2267 = vsel %vm459, %v2261, 0
      %v2270 = vsel %vm459, %v2262, 0
      %2272 = vmatprep.subr.bf16.mxu0 0
      %2273 = vmatpush1.bf16.msra.mxu0 0
      %2274 = vmatprep.subr.bf16.mxu0 0
      %2275 = vmatpush1.bf16.msra.mxu0 0
      %2276 = vmatprep.subr.bf16.mxu0 0
      %2277 = vmatpush1.bf16.msra.mxu0 0
      %2278 = vmatprep.subr.bf16.mxu0 0
      %2279 = vmatpush1.bf16.msra.mxu0 0
      %2280 = vmatprep.subr.bf16.mxu0 0
      %2281 = vmatpush1.bf16.msra.mxu0 0
      %2282 = vmatprep.subr.bf16.mxu0 0
      %2283 = vmatpush1.bf16.msra.mxu0 0
      %2284 = vmatprep.subr.bf16.mxu0 0
      %2285 = vmatpush1.bf16.msra.mxu0 0
      %2286 = vmatprep.subr.bf16.mxu0 %v2270
      %2287 = vmatpush1.bf16.msra.mxu0 %v2267
      %2288 = vmatprep.subr.bf16.mxu0 0
      %2289 = vmatpush2.bf16.msra.mxu0 0
      %2290 = vmatprep.subr.bf16.mxu0 0
      %2291 = vmatpush2.bf16.msra.mxu0 0
      %2292 = vmatprep.subr.bf16.mxu0 0
      %2293 = vmatpush2.bf16.msra.mxu0 0
      %2294 = vmatprep.subr.bf16.mxu0 0
      %2295 = vmatpush2.bf16.msra.mxu0 0
      %2296 = vmatprep.subr.bf16.mxu0 0
      %2297 = vmatpush2.bf16.msra.mxu0 0
      %2298 = vmatprep.subr.bf16.mxu0 0
      %2299 = vmatpush2.bf16.msra.mxu0 0
      %2300 = vmatprep.subr.bf16.mxu0 0
      %2301 = vmatpush2.bf16.msra.mxu0 0
      %2302 = vmatprep.subr.bf16.mxu0 0
      %2303 = vmatpush2.bf16.msra.mxu0 0
      %2304 = vmatprep.mubr.bf16.mxu0 0
      %2305 = vmatmul.mubr.bf16.gmra.mxu0 %v2264
      %v2306 = vpop.f32.mrf.mxu0
      %v2307 = vadd.f32 0.0, %v2306
      %v2308 = vpop.f32.mrf.mxu0
      %v2309 = vadd.f32 0.0, %v2308
      %v2310 = vpop.f32.mrf.mxu0
      %v2311 = vpop.f32.mrf.mxu0
      %2312 = vdwg.mxu0
      %v2313 = vadd.f32 %v2249, %v2307
      %v2314 = vadd.f32 %v2250, %v2309
      %2315 = vrot.lane.b32.xlu0 %v1813, 111
      %v2316 = vpop.permute.xlu0 %2315
      %2317 = vrot.lane.b32.xlu0 %v1814, 111
      %v2318 = vpop.permute.xlu0 %2317
      %v2319 = vsel %vm962, %v2316, %v2318
      %v2320 = vsel %vm962, %v2318, %v2316
      %v2321 = vsel %vm967, %v2319, 0.0
      %v2322 = vsel %vm968, %v2320, 0.0
      %s2323 = scalar_lea.vmem %s6, 52
      %v2324 = vld [vmem:[%s2323] sm:$0x3]
      %v2325 = vpack.c.bf16 %v2321, %v2321
      %v2326 = vpack.c.bf16 %v2322, %v2322
      %v2328 = vsel %vm455, %v2324, 0
      %v2331 = vsel %vm459, %v2325, 0
      %v2334 = vsel %vm459, %v2326, 0
      %2336 = vmatprep.subr.bf16.mxu0 0
      %2337 = vmatpush1.bf16.msra.mxu0 0
      %2338 = vmatprep.subr.bf16.mxu0 0
      %2339 = vmatpush1.bf16.msra.mxu0 0
      %2340 = vmatprep.subr.bf16.mxu0 0
      %2341 = vmatpush1.bf16.msra.mxu0 0
      %2342 = vmatprep.subr.bf16.mxu0 0
      %2343 = vmatpush1.bf16.msra.mxu0 0
      %2344 = vmatprep.subr.bf16.mxu0 0
      %2345 = vmatpush1.bf16.msra.mxu0 0
      %2346 = vmatprep.subr.bf16.mxu0 0
      %2347 = vmatpush1.bf16.msra.mxu0 0
      %2348 = vmatprep.subr.bf16.mxu0 0
      %2349 = vmatpush1.bf16.msra.mxu0 0
      %2350 = vmatprep.subr.bf16.mxu0 %v2334
      %2351 = vmatpush1.bf16.msra.mxu0 %v2331
      %2352 = vmatprep.subr.bf16.mxu0 0
      %2353 = vmatpush2.bf16.msra.mxu0 0
      %2354 = vmatprep.subr.bf16.mxu0 0
      %2355 = vmatpush2.bf16.msra.mxu0 0
      %2356 = vmatprep.subr.bf16.mxu0 0
      %2357 = vmatpush2.bf16.msra.mxu0 0
      %2358 = vmatprep.subr.bf16.mxu0 0
      %2359 = vmatpush2.bf16.msra.mxu0 0
      %2360 = vmatprep.subr.bf16.mxu0 0
      %2361 = vmatpush2.bf16.msra.mxu0 0
      %2362 = vmatprep.subr.bf16.mxu0 0
      %2363 = vmatpush2.bf16.msra.mxu0 0
      %2364 = vmatprep.subr.bf16.mxu0 0
      %2365 = vmatpush2.bf16.msra.mxu0 0
      %2366 = vmatprep.subr.bf16.mxu0 0
      %2367 = vmatpush2.bf16.msra.mxu0 0
      %2368 = vmatprep.mubr.bf16.mxu0 0
      %2369 = vmatmul.mubr.bf16.gmra.mxu0 %v2328
      %v2370 = vpop.f32.mrf.mxu0
      %v2371 = vadd.f32 0.0, %v2370
      %v2372 = vpop.f32.mrf.mxu0
      %v2373 = vadd.f32 0.0, %v2372
      %v2374 = vpop.f32.mrf.mxu0
      %v2375 = vpop.f32.mrf.mxu0
      %2376 = vdwg.mxu0
      %v2377 = vadd.f32 %v2313, %v2371
      %v2378 = vadd.f32 %v2314, %v2373
      %v2381 = vrot.slane %v2377, 4
      %v2382 = vrot.slane %v2378, 4
      %2385 = vst [vmem:[%s278 + $0x10] sm:$0xf0] %v2381
      %2386 = vst [vmem:[%s278 + $0x18] sm:$0xf0] %v2382
      %p2387 = scmp.lt.s32.totalorder %s18, 1
      %s2388 = scalar_select %p2387, %s18, 1
      %s2389 = smul.addr %s2388, 4
      %s2390 = smul.addr %s2389, 8
      %s2391 = scalar_lea.vmem %s7, %s2390
      // Predicated region
      $region49: #{dense_block_forward.1} parent=47 // pred_check
        %p2392 = pneg %p188
      $region50: #{dense_block_forward.1} parent=47 // pred_check_branch
        %2394 = sbr.rel (%p2392) target = $region52
      $region51: #{dense_block_forward.1} parent=47 // pred_region
        _
      $region52: #{dense_block_forward.1} parent=47 // pred_fallthru
        _
    $region48: #{dense_block_forward.1} parent=5 // pred_fallthru
      _
    %p2395 = scmp.le.s32.totalorder 2, %s13
    // Predicated region
    $region53: #{dense_block_forward.1} parent=5 // pred_check
      %p2396 = pneg %p2395
    $region54: #{dense_block_forward.1} parent=5 // pred_check_branch
      %2398 = sbr.rel (%p2396) target = $region56
    $region55: #{dense_block_forward.1} parent=5 // pred_region
      %s2399 = ssub.s32 %s13, 2
      // Predicated region
      $region57: #{dense_block_forward.1} parent=55 // pred_check
        %p2400 = pneg %p194
      $region58: #{dense_block_forward.1} parent=55 // pred_check_branch
        %2402 = sbr.rel (%p2400) target = $region60
      $region59: #{dense_block_forward.1} parent=55 // pred_region
        %p2403 = scmp.lt.s32.totalorder %s19, 1
        %s2404 = scalar_select %p2403, %s19, 1
        %s2405 = smul.addr %s2404, 4
        %s2406 = smul.addr %s2405, 8
        %s2407 = scalar_lea.vmem %s7, %s2406
      $region60: #{dense_block_forward.1} parent=55 // pred_fallthru
        _
    $region56: #{dense_block_forward.1} parent=5 // pred_fallthru
      _
  $region6: #{dense_block_forward.1} parent=0 // loop_footer
    %s17 = sadd.s32 1, %s13
  $region7: #{dense_block_forward.1} parent=0 // loop_footer_branch
    %12 = sbr.rel target = $region3
  $region8: #{dense_block_forward.1} parent=0 // loop_exit
    _

</llo_original>
